<compile_context>
chip_gen: v5e
topology: v5e:2x2
jax: 0.10.0
libtpu: 0.0.40
codegen_flags: <defaults>
</compile_context>

<pallas_src>
import functools

import jax
import jax.numpy as jnp
from jax.experimental import pallas as pl
from jax.experimental.pallas import tpu as pltpu


def _rel_attn_kernel(xs_ref, eh_ref, o_ref, p_ref, *, TH, W, C, NB, KPAD):
    """One grid step = one (batch element, row strip).

    xs_ref : (TH + NB - 1, W + NB - 1, C)  bf16 zero-padded strip (halo included)
    eh_ref : (C, KPAD * C)                 bf16 channel-expanded block-diag embedding * scale
    o_ref  : (TH, W, C)                    output strip
    p_ref  : (TH * W, KPAD * C) f32        VMEM scratch for the masked exp(logits)
    """
    n2 = NB * NB
    pad = NB // 2
    THW = TH * W

    # ---- logits: one bf16 MXU matmul, already expanded to channel width --------
    # query = centre pixels of the strip (the only (rows, cols) -> rows*cols flatten)
    xq = xs_ref[pad:pad + TH, pad:pad + W, :].reshape(THW, C)                # bf16
    #   logits[p, k*C + c] = scale * <x[p, head(c) chans], E[k, head(c) chans]>
    # pad offsets (k >= 25) are all-zero columns of eh.
    logits = jnp.dot(xq, eh_ref[...], preferred_element_type=jnp.float32)   # (THW, KPAD*C)

    # ---- softmax over 25 offsets (padded to KPAD=32, full-width vector ops) ----
    # A row-global max is a valid shift (it cancels inside each head's softmax)
    # and avoids re-tiling a per-head max back to full width.
    m = jnp.max(logits, axis=-1, keepdims=True)                             # (THW, 1)
    p = jnp.exp(logits - m)                                                 # full-width EUP
    col = jax.lax.broadcasted_iota(jnp.int32, p.shape, 1)
    p = jnp.where(col < n2 * C, p, 0.0)                                     # zero the 7 pad offsets
    p_ref[...] = p                                                          # park in VMEM scratch

    # per-channel denominator: log2 tree over the 32 padded offsets
    width = KPAD * C // 2
    s = p_ref[:, :width] + p_ref[:, width:2 * width]
    while width > C:
        width //= 2
        s = s[:, :width] + s[:, width:2 * width]
    inv_s = pl.reciprocal(s, approx=True)                                   # (THW, C), EUP vrcp

    # ---- weighted sum over 25 shifted windows (unfold never materialised) ------
    # value windows stay 3-D views of the padded strip: no re-tiling copies.
    acc = jnp.zeros((TH, W, C), jnp.float32)
    for k in range(n2):
        di, dj = k // NB, k % NB
        wk = p_ref[:, k * C:(k + 1) * C].reshape(TH, W, C)                  # un-normalised weights
        vk = xs_ref[di:di + TH, dj:dj + W, :]                               # bf16 window view
        # TODO(synk): on v6e/v7x this MAC could stay bf16 (2x VALU); kept f32 for v5e portability.
        acc = acc + wk * vk.astype(jnp.float32)

    out = acc * inv_s.reshape(TH, W, C)                                     # normalise once at the end
    o_ref[...] = out.astype(o_ref.dtype)


def relative_attention_forward(x, relative_embedding, *, num_heads=8,
                               qk_scale=None, neighbour=5, row_block=None):
    """x: (B, C, H, W). relative_embedding: (1, neighbour**2, C). Returns (B, C, H, W)."""
    B, C, H, W = x.shape
    nb = neighbour
    n2 = nb * nb
    pad = nb // 2
    assert C % num_heads == 0
    hd = C // num_heads
    scale = qk_scale if qk_scale is not None else hd ** (-0.5)
    KPAD = 1 << (n2 - 1).bit_length()             # 25 -> 32 (power of two for tree reductions)

    if row_block is None:
        row_block = 8 if (H % 8 == 0 and H > 8) else H
    assert H % row_block == 0
    TH, NS = row_block, H // row_block
    Wp = W + 2 * pad

    # ---- layout & staging (done once, outside the kernel) ----------------------
    # channel-last + bf16 (halves DMA / VMEM), zero-padded, cut into row strips
    # with their 2*pad halo rows duplicated so BlockSpecs stay purely Blocked.
    # TODO(synk): zero-copy halo via pl.Element row offsets or manual DMA would
    # avoid the small halo duplication in HBM.
    xcl = jnp.transpose(x, (0, 2, 3, 1)).astype(jnp.bfloat16)               # (B, H, W, C)
    xp = jnp.pad(xcl, ((0, 0), (pad, pad), (pad, pad), (0, 0)))             # (B, Hp, Wp, C)
    strips = jnp.stack([xp[:, t * TH: t * TH + TH + 2 * pad] for t in range(NS)],
                       axis=1)                                              # (B, NS, TH+2p, Wp, C)

    # channel-expanded, offset-major block-diagonal embedding (scale folded in):
    #   eh[ci, k*C + co] = scale * E[k, ci]  if head(ci) == head(co) and k < 25, else 0
    e = relative_embedding.reshape(n2, C).astype(jnp.float32) * scale       # (n2, C)
    head = jnp.arange(C) // hd
    same = (head[:, None] == head[None, :]).astype(jnp.float32)             # (C, C)
    eh = jnp.zeros((C, KPAD, C), jnp.float32)
    eh = eh.at[:, :n2, :].set(e.T[:, :, None] * same[:, None, :])
    eh = eh.reshape(C, KPAD * C).astype(jnp.bfloat16)

    kernel = functools.partial(_rel_attn_kernel, TH=TH, W=W, C=C, NB=nb, KPAD=KPAD)

    out = pl.pallas_call(
        kernel,
        out_shape=jax.ShapeDtypeStruct((B, NS, TH, W, C), x.dtype),
        grid_spec=pltpu.PrefetchScalarGridSpec(
            num_scalar_prefetch=0,
            grid=(B, NS),                        # keep B*NS even so both v7x TCs stay busy
            in_specs=[
                pl.BlockSpec((None, None, TH + 2 * pad, Wp, C),
                             lambda b, t: (b, t, 0, 0, 0)),
                pl.BlockSpec((C, KPAD * C), lambda b, t: (0, 0)),
            ],
            out_specs=pl.BlockSpec((None, None, TH, W, C),
                                   lambda b, t: (b, t, 0, 0, 0)),
            scratch_shapes=[pltpu.VMEM((TH * W, KPAD * C), jnp.float32)],
        ),
        compiler_params=pltpu.CompilerParams(
            dimension_semantics=("parallel", "parallel"),
            vmem_limit_bytes=48 * 1024 * 1024),
    )(strips, eh)

    # TODO(synk): for production C < 128 a lane-dense (W*C) output packing would
    # avoid masked partial stores; with channel-last blocks the last dim is C.
    return jnp.transpose(out.reshape(B, H, W, C), (0, 3, 1, 2))             # (B, C, H, W)


def relative_attention_reference(x, relative_embedding, *, num_heads=8,
                                 qk_scale=None, neighbour=5):
    """Pure-JAX transcription of the PyTorch forward (for verification)."""
    B, C, H, W = x.shape
    nb = neighbour
    n2 = nb * nb
    pad = nb // 2
    hd = C // num_heads
    scale = qk_scale if qk_scale is not None else hd ** (-0.5)

    xp = jnp.pad(x, ((0, 0), (0, 0), (pad, pad), (pad, pad)))
    patches = [xp[:, :, ki:ki + H, kj:kj + W] for ki in range(nb) for kj in range(nb)]
    value = jnp.stack(patches, axis=2)                                   # (B, C, n2, H, W)
    value = value.reshape(B, C, n2, H * W).transpose(0, 3, 2, 1).reshape(-1, n2, C)
    query = x.reshape(B, C, H * W).transpose(0, 2, 1).reshape(-1, C)

    q = query.reshape(-1, num_heads, hd)[:, :, None, :]                  # (P, nh, 1, hd)
    k = relative_embedding.reshape(n2, num_heads, hd).transpose(1, 0, 2)
    k = jnp.broadcast_to(k[None], (query.shape[0], num_heads, n2, hd))   # (P, nh, n2, hd)
    v = value.reshape(-1, n2, num_heads, hd).transpose(0, 2, 1, 3)       # (P, nh, n2, hd)

    attn = jnp.einsum('phqd,phkd->phqk', q, k) * scale
    attn = jax.nn.softmax(attn, axis=-1)
    upd = jnp.einsum('phqk,phkd->phqd', attn, v)                         # (P, nh, 1, hd)
    upd = upd.transpose(0, 2, 1, 3).reshape(B, H * W, C)
    return upd.transpose(0, 2, 1).reshape(B, C, H, W)


if __name__ == "__main__":
    B, C, H, W = 2, 32, 16, 16
    num_heads = 8
    key = jax.random.PRNGKey(0)
    kx, ke = jax.random.split(key)

    x = jax.random.normal(kx, (B, C, H, W), jnp.float32)
    # TODO(synk): trunc_normal_(std=0.02) approximated with a plain normal (init-only).
    rel_emb = 0.02 * jax.random.normal(ke, (1, 25, C), jnp.float32)

    out = relative_attention_forward(x, rel_emb, num_heads=num_heads, row_block=8)
    out = jax.block_until_ready(out)

    # Compare against a pure-JAX transcription of the PyTorch forward, fed the same
    # bf16-rounded activations the kernel stages (logits matmul is bf16 -> f32 acc).
    x_q = x.astype(jnp.bfloat16).astype(jnp.float32)
    ref = relative_attention_reference(x_q, rel_emb, num_heads=num_heads)

    assert out.shape == (B, C, H, W)
    assert jnp.allclose(out, ref, atol=2e-2, rtol=2e-2), "mismatch vs reference"

    print("KERNEL_OK")
</pallas_src>

<mosaic_0001>
module attributes {stable_mosaic.version = 11 : i64} {
  func.func @_rel_attn_kernel(%arg0: i32, %arg1: i32, %arg2: memref<1x1x12x20x32xbf16, #tpu.memory_space<vmem>>, %arg3: memref<32x1024xbf16, #tpu.memory_space<vmem>>, %arg4: memref<1x1x8x16x32xf32, #tpu.memory_space<vmem>>, %arg5: memref<128x1024xf32, #tpu.memory_space<vmem>>) attributes {dimension_semantics = [#tpu.dimension_semantics<parallel>, #tpu.dimension_semantics<parallel>], iteration_bounds = array<i64: 2, 2>, scalar_prefetch = 0 : i64, scratch_operands = 1 : i64, tpu.core_type = #tpu.core_type<tc>, window_params = [{transform_indices = @transform_0, window_bounds = array<i64: 1, 1, 12, 20, 32>}, {pipeline_mode = #tpu.pipeline_mode<synchronous>, transform_indices = @transform_1, window_bounds = array<i64: 32, 1024>}, {transform_indices = @transform_2, window_bounds = array<i64: 1, 1, 8, 16, 32>}]} {
    %c0 = arith.constant 0 : index
    %c0_0 = arith.constant 0 : index
    %c2 = arith.constant 2 : index
    %c2_1 = arith.constant 2 : index
    %c0_2 = arith.constant 0 : index
    %0 = vector.load %arg2[%c0, %c0_0, %c2, %c2_1, %c0_2] : memref<1x1x12x20x32xbf16, #tpu.memory_space<vmem>>, vector<1x1x8x16x32xbf16>
    %1 = vector.shape_cast %0 : vector<1x1x8x16x32xbf16> to vector<8x16x32xbf16>
    %2 = vector.shape_cast %1 : vector<8x16x32xbf16> to vector<128x32xbf16>
    %c0_3 = arith.constant 0 : index
    %c0_4 = arith.constant 0 : index
    %3 = vector.load %arg3[%c0_3, %c0_4] : memref<32x1024xbf16, #tpu.memory_space<vmem>>, vector<32x1024xbf16>
    %cst = arith.constant dense<0.000000e+00> : vector<128x1024xf32>
    %4 = tpu.matmul %2, %3, %cst {dimension_numbers = #tpu.dot_dimension_numbers<[1], [0], [0], [1], [0, 0, 1, 1], [], []>} : vector<128x32xbf16>, vector<32x1024xbf16>, vector<128x1024xf32> -> vector<128x1024xf32>
    %cst_5 = arith.constant dense<0xFF800000> : vector<128xf32>
    %5 = vector.multi_reduction <maximumf>, %4, %cst_5 [1] : vector<128x1024xf32> to vector<128xf32>
    %6 = vector.shape_cast %5 : vector<128xf32> to vector<128x1xf32>
    %7 = vector.broadcast %6 : vector<128x1xf32> to vector<128x1024xf32>
    %8 = arith.subf %4, %7 : vector<128x1024xf32>
    %9 = math.exp %8 : vector<128x1024xf32>
    %10 = tpu.iota {dimensions = array<i32: 1>} : vector<128x1024xi32>
    %c800_i32 = arith.constant 800 : i32
    %11 = vector.broadcast %c800_i32 : i32 to vector<128x1024xi32>
    %12 = arith.cmpi slt, %10, %11 : vector<128x1024xi32>
    %cst_6 = arith.constant 0.000000e+00 : f32
    %13 = vector.broadcast %cst_6 : f32 to vector<128x1024xf32>
    %14 = arith.select %12, %9, %13 : vector<128x1024xi1>, vector<128x1024xf32>
    %c0_7 = arith.constant 0 : index
    %c0_8 = arith.constant 0 : index
    %15 = vector.load %arg5[%c0_7, %c0_8] : memref<128x1024xf32, #tpu.memory_space<vmem>>, vector<128x1024xf32>
    tpu.vector_store %arg5[%c0_7, %c0_8], %14 {strides = array<i32>} : memref<128x1024xf32, #tpu.memory_space<vmem>>, vector<128x1024xf32>,
    %c0_9 = arith.constant 0 : index
    %c0_10 = arith.constant 0 : index
    %16 = vector.load %arg5[%c0_9, %c0_10] : memref<128x1024xf32, #tpu.memory_space<vmem>>, vector<128x512xf32>
    %c0_11 = arith.constant 0 : index
    %c512 = arith.constant 512 : index
    %17 = vector.load %arg5[%c0_11, %c512] : memref<128x1024xf32, #tpu.memory_space<vmem>>, vector<128x512xf32>
    %18 = arith.addf %16, %17 : vector<128x512xf32>
    %19 = vector.extract_strided_slice %18 {offsets = [0, 0], sizes = [128, 256], strides = [1, 1]} : vector<128x512xf32> to vector<128x256xf32>
    %20 = vector.extract_strided_slice %18 {offsets = [0, 256], sizes = [128, 256], strides = [1, 1]} : vector<128x512xf32> to vector<128x256xf32>
    %21 = arith.addf %19, %20 : vector<128x256xf32>
    %22 = vector.extract_strided_slice %21 {offsets = [0, 0], sizes = [128, 128], strides = [1, 1]} : vector<128x256xf32> to vector<128x128xf32>
    %23 = vector.extract_strided_slice %21 {offsets = [0, 128], sizes = [128, 128], strides = [1, 1]} : vector<128x256xf32> to vector<128x128xf32>
    %24 = arith.addf %22, %23 : vector<128x128xf32>
    %25 = vector.extract_strided_slice %24 {offsets = [0, 0], sizes = [128, 64], strides = [1, 1]} : vector<128x128xf32> to vector<128x64xf32>
    %26 = vector.extract_strided_slice %24 {offsets = [0, 64], sizes = [128, 64], strides = [1, 1]} : vector<128x128xf32> to vector<128x64xf32>
    %27 = arith.addf %25, %26 : vector<128x64xf32>
    %28 = vector.extract_strided_slice %27 {offsets = [0, 0], sizes = [128, 32], strides = [1, 1]} : vector<128x64xf32> to vector<128x32xf32>
    %29 = vector.extract_strided_slice %27 {offsets = [0, 32], sizes = [128, 32], strides = [1, 1]} : vector<128x64xf32> to vector<128x32xf32>
    %30 = arith.addf %28, %29 : vector<128x32xf32>
    %31 = tpu.reciprocal %30 {approx = true} : vector<128x32xf32> -> vector<128x32xf32>
    %cst_12 = arith.constant 0.000000e+00 : f32
    %32 = vector.broadcast %cst_12 : f32 to vector<8x16x32xf32>
    %c0_13 = arith.constant 0 : index
    %c0_14 = arith.constant 0 : index
    %33 = vector.load %arg5[%c0_13, %c0_14] : memref<128x1024xf32, #tpu.memory_space<vmem>>, vector<128x32xf32>
    %34 = vector.shape_cast %33 : vector<128x32xf32> to vector<8x16x32xf32>
    %c0_15 = arith.constant 0 : index
    %c0_16 = arith.constant 0 : index
    %c0_17 = arith.constant 0 : index
    %c0_18 = arith.constant 0 : index
    %c0_19 = arith.constant 0 : index
    %35 = vector.load %arg2[%c0_15, %c0_16, %c0_17, %c0_18, %c0_19] : memref<1x1x12x20x32xbf16, #tpu.memory_space<vmem>>, vector<1x1x8x16x32xbf16>
    %36 = vector.shape_cast %35 : vector<1x1x8x16x32xbf16> to vector<8x16x32xbf16>
    %37 = arith.extf %36 : vector<8x16x32xbf16> to vector<8x16x32xf32>
    %38 = arith.mulf %34, %37 : vector<8x16x32xf32>
    %39 = arith.addf %32, %38 : vector<8x16x32xf32>
    %c0_20 = arith.constant 0 : index
    %c32 = arith.constant 32 : index
    %40 = vector.load %arg5[%c0_20, %c32] : memref<128x1024xf32, #tpu.memory_space<vmem>>, vector<128x32xf32>
    %41 = vector.shape_cast %40 : vector<128x32xf32> to vector<8x16x32xf32>
    %c0_21 = arith.constant 0 : index
    %c0_22 = arith.constant 0 : index
    %c0_23 = arith.constant 0 : index
    %c1 = arith.constant 1 : index
    %c0_24 = arith.constant 0 : index
    %42 = vector.load %arg2[%c0_21, %c0_22, %c0_23, %c1, %c0_24] : memref<1x1x12x20x32xbf16, #tpu.memory_space<vmem>>, vector<1x1x8x16x32xbf16>
    %43 = vector.shape_cast %42 : vector<1x1x8x16x32xbf16> to vector<8x16x32xbf16>
    %44 = arith.extf %43 : vector<8x16x32xbf16> to vector<8x16x32xf32>
    %45 = arith.mulf %41, %44 : vector<8x16x32xf32>
    %46 = arith.addf %39, %45 : vector<8x16x32xf32>
    %c0_25 = arith.constant 0 : index
    %c64 = arith.constant 64 : index
    %47 = vector.load %arg5[%c0_25, %c64] : memref<128x1024xf32, #tpu.memory_space<vmem>>, vector<128x32xf32>
    %48 = vector.shape_cast %47 : vector<128x32xf32> to vector<8x16x32xf32>
    %c0_26 = arith.constant 0 : index
    %c0_27 = arith.constant 0 : index
    %c0_28 = arith.constant 0 : index
    %c2_29 = arith.constant 2 : index
    %c0_30 = arith.constant 0 : index
    %49 = vector.load %arg2[%c0_26, %c0_27, %c0_28, %c2_29, %c0_30] : memref<1x1x12x20x32xbf16, #tpu.memory_space<vmem>>, vector<1x1x8x16x32xbf16>
    %50 = vector.shape_cast %49 : vector<1x1x8x16x32xbf16> to vector<8x16x32xbf16>
    %51 = arith.extf %50 : vector<8x16x32xbf16> to vector<8x16x32xf32>
    %52 = arith.mulf %48, %51 : vector<8x16x32xf32>
    %53 = arith.addf %46, %52 : vector<8x16x32xf32>
    %c0_31 = arith.constant 0 : index
    %c96 = arith.constant 96 : index
    %54 = vector.load %arg5[%c0_31, %c96] : memref<128x1024xf32, #tpu.memory_space<vmem>>, vector<128x32xf32>
    %55 = vector.shape_cast %54 : vector<128x32xf32> to vector<8x16x32xf32>
    %c0_32 = arith.constant 0 : index
    %c0_33 = arith.constant 0 : index
    %c0_34 = arith.constant 0 : index
    %c3 = arith.constant 3 : index
    %c0_35 = arith.constant 0 : index
    %56 = vector.load %arg2[%c0_32, %c0_33, %c0_34, %c3, %c0_35] : memref<1x1x12x20x32xbf16, #tpu.memory_space<vmem>>, vector<1x1x8x16x32xbf16>
    %57 = vector.shape_cast %56 : vector<1x1x8x16x32xbf16> to vector<8x16x32xbf16>
    %58 = arith.extf %57 : vector<8x16x32xbf16> to vector<8x16x32xf32>
    %59 = arith.mulf %55, %58 : vector<8x16x32xf32>
    %60 = arith.addf %53, %59 : vector<8x16x32xf32>
    %c0_36 = arith.constant 0 : index
    %c128 = arith.constant 128 : index
    %61 = vector.load %arg5[%c0_36, %c128] : memref<128x1024xf32, #tpu.memory_space<vmem>>, vector<128x32xf32>
    %62 = vector.shape_cast %61 : vector<128x32xf32> to vector<8x16x32xf32>
    %c0_37 = arith.constant 0 : index
    %c0_38 = arith.constant 0 : index
    %c0_39 = arith.constant 0 : index
    %c4 = arith.constant 4 : index
    %c0_40 = arith.constant 0 : index
    %63 = vector.load %arg2[%c0_37, %c0_38, %c0_39, %c4, %c0_40] : memref<1x1x12x20x32xbf16, #tpu.memory_space<vmem>>, vector<1x1x8x16x32xbf16>
    %64 = vector.shape_cast %63 : vector<1x1x8x16x32xbf16> to vector<8x16x32xbf16>
    %65 = arith.extf %64 : vector<8x16x32xbf16> to vector<8x16x32xf32>
    %66 = arith.mulf %62, %65 : vector<8x16x32xf32>
    %67 = arith.addf %60, %66 : vector<8x16x32xf32>
    %c0_41 = arith.constant 0 : index
    %c160 = arith.constant 160 : index
    %68 = vector.load %arg5[%c0_41, %c160] : memref<128x1024xf32, #tpu.memory_space<vmem>>, vector<128x32xf32>
    %69 = vector.shape_cast %68 : vector<128x32xf32> to vector<8x16x32xf32>
    %c0_42 = arith.constant 0 : index
    %c0_43 = arith.constant 0 : index
    %c1_44 = arith.constant 1 : index
    %c0_45 = arith.constant 0 : index
    %c0_46 = arith.constant 0 : index
    %70 = vector.load %arg2[%c0_42, %c0_43, %c1_44, %c0_45, %c0_46] : memref<1x1x12x20x32xbf16, #tpu.memory_space<vmem>>, vector<1x1x8x16x32xbf16>
    %71 = vector.shape_cast %70 : vector<1x1x8x16x32xbf16> to vector<8x16x32xbf16>
    %72 = arith.extf %71 : vector<8x16x32xbf16> to vector<8x16x32xf32>
    %73 = arith.mulf %69, %72 : vector<8x16x32xf32>
    %74 = arith.addf %67, %73 : vector<8x16x32xf32>
    %c0_47 = arith.constant 0 : index
    %c192 = arith.constant 192 : index
    %75 = vector.load %arg5[%c0_47, %c192] : memref<128x1024xf32, #tpu.memory_space<vmem>>, vector<128x32xf32>
    %76 = vector.shape_cast %75 : vector<128x32xf32> to vector<8x16x32xf32>
    %c0_48 = arith.constant 0 : index
    %c0_49 = arith.constant 0 : index
    %c1_50 = arith.constant 1 : index
    %c1_51 = arith.constant 1 : index
    %c0_52 = arith.constant 0 : index
    %77 = vector.load %arg2[%c0_48, %c0_49, %c1_50, %c1_51, %c0_52] : memref<1x1x12x20x32xbf16, #tpu.memory_space<vmem>>, vector<1x1x8x16x32xbf16>
    %78 = vector.shape_cast %77 : vector<1x1x8x16x32xbf16> to vector<8x16x32xbf16>
    %79 = arith.extf %78 : vector<8x16x32xbf16> to vector<8x16x32xf32>
    %80 = arith.mulf %76, %79 : vector<8x16x32xf32>
    %81 = arith.addf %74, %80 : vector<8x16x32xf32>
    %c0_53 = arith.constant 0 : index
    %c224 = arith.constant 224 : index
    %82 = vector.load %arg5[%c0_53, %c224] : memref<128x1024xf32, #tpu.memory_space<vmem>>, vector<128x32xf32>
    %83 = vector.shape_cast %82 : vector<128x32xf32> to vector<8x16x32xf32>
    %c0_54 = arith.constant 0 : index
    %c0_55 = arith.constant 0 : index
    %c1_56 = arith.constant 1 : index
    %c2_57 = arith.constant 2 : index
    %c0_58 = arith.constant 0 : index
    %84 = vector.load %arg2[%c0_54, %c0_55, %c1_56, %c2_57, %c0_58] : memref<1x1x12x20x32xbf16, #tpu.memory_space<vmem>>, vector<1x1x8x16x32xbf16>
    %85 = vector.shape_cast %84 : vector<1x1x8x16x32xbf16> to vector<8x16x32xbf16>
    %86 = arith.extf %85 : vector<8x16x32xbf16> to vector<8x16x32xf32>
    %87 = arith.mulf %83, %86 : vector<8x16x32xf32>
    %88 = arith.addf %81, %87 : vector<8x16x32xf32>
    %c0_59 = arith.constant 0 : index
    %c256 = arith.constant 256 : index
    %89 = vector.load %arg5[%c0_59, %c256] : memref<128x1024xf32, #tpu.memory_space<vmem>>, vector<128x32xf32>
    %90 = vector.shape_cast %89 : vector<128x32xf32> to vector<8x16x32xf32>
    %c0_60 = arith.constant 0 : index
    %c0_61 = arith.constant 0 : index
    %c1_62 = arith.constant 1 : index
    %c3_63 = arith.constant 3 : index
    %c0_64 = arith.constant 0 : index
    %91 = vector.load %arg2[%c0_60, %c0_61, %c1_62, %c3_63, %c0_64] : memref<1x1x12x20x32xbf16, #tpu.memory_space<vmem>>, vector<1x1x8x16x32xbf16>
    %92 = vector.shape_cast %91 : vector<1x1x8x16x32xbf16> to vector<8x16x32xbf16>
    %93 = arith.extf %92 : vector<8x16x32xbf16> to vector<8x16x32xf32>
    %94 = arith.mulf %90, %93 : vector<8x16x32xf32>
    %95 = arith.addf %88, %94 : vector<8x16x32xf32>
    %c0_65 = arith.constant 0 : index
    %c288 = arith.constant 288 : index
    %96 = vector.load %arg5[%c0_65, %c288] : memref<128x1024xf32, #tpu.memory_space<vmem>>, vector<128x32xf32>
    %97 = vector.shape_cast %96 : vector<128x32xf32> to vector<8x16x32xf32>
    %c0_66 = arith.constant 0 : index
    %c0_67 = arith.constant 0 : index
    %c1_68 = arith.constant 1 : index
    %c4_69 = arith.constant 4 : index
    %c0_70 = arith.constant 0 : index
    %98 = vector.load %arg2[%c0_66, %c0_67, %c1_68, %c4_69, %c0_70] : memref<1x1x12x20x32xbf16, #tpu.memory_space<vmem>>, vector<1x1x8x16x32xbf16>
    %99 = vector.shape_cast %98 : vector<1x1x8x16x32xbf16> to vector<8x16x32xbf16>
    %100 = arith.extf %99 : vector<8x16x32xbf16> to vector<8x16x32xf32>
    %101 = arith.mulf %97, %100 : vector<8x16x32xf32>
    %102 = arith.addf %95, %101 : vector<8x16x32xf32>
    %c0_71 = arith.constant 0 : index
    %c320 = arith.constant 320 : index
    %103 = vector.load %arg5[%c0_71, %c320] : memref<128x1024xf32, #tpu.memory_space<vmem>>, vector<128x32xf32>
    %104 = vector.shape_cast %103 : vector<128x32xf32> to vector<8x16x32xf32>
    %c0_72 = arith.constant 0 : index
    %c0_73 = arith.constant 0 : index
    %c2_74 = arith.constant 2 : index
    %c0_75 = arith.constant 0 : index
    %c0_76 = arith.constant 0 : index
    %105 = vector.load %arg2[%c0_72, %c0_73, %c2_74, %c0_75, %c0_76] : memref<1x1x12x20x32xbf16, #tpu.memory_space<vmem>>, vector<1x1x8x16x32xbf16>
    %106 = vector.shape_cast %105 : vector<1x1x8x16x32xbf16> to vector<8x16x32xbf16>
    %107 = arith.extf %106 : vector<8x16x32xbf16> to vector<8x16x32xf32>
    %108 = arith.mulf %104, %107 : vector<8x16x32xf32>
    %109 = arith.addf %102, %108 : vector<8x16x32xf32>
    %c0_77 = arith.constant 0 : index
    %c352 = arith.constant 352 : index
    %110 = vector.load %arg5[%c0_77, %c352] : memref<128x1024xf32, #tpu.memory_space<vmem>>, vector<128x32xf32>
    %111 = vector.shape_cast %110 : vector<128x32xf32> to vector<8x16x32xf32>
    %c0_78 = arith.constant 0 : index
    %c0_79 = arith.constant 0 : index
    %c2_80 = arith.constant 2 : index
    %c1_81 = arith.constant 1 : index
    %c0_82 = arith.constant 0 : index
    %112 = vector.load %arg2[%c0_78, %c0_79, %c2_80, %c1_81, %c0_82] : memref<1x1x12x20x32xbf16, #tpu.memory_space<vmem>>, vector<1x1x8x16x32xbf16>
    %113 = vector.shape_cast %112 : vector<1x1x8x16x32xbf16> to vector<8x16x32xbf16>
    %114 = arith.extf %113 : vector<8x16x32xbf16> to vector<8x16x32xf32>
    %115 = arith.mulf %111, %114 : vector<8x16x32xf32>
    %116 = arith.addf %109, %115 : vector<8x16x32xf32>
    %c0_83 = arith.constant 0 : index
    %c384 = arith.constant 384 : index
    %117 = vector.load %arg5[%c0_83, %c384] : memref<128x1024xf32, #tpu.memory_space<vmem>>, vector<128x32xf32>
    %118 = vector.shape_cast %117 : vector<128x32xf32> to vector<8x16x32xf32>
    %c0_84 = arith.constant 0 : index
    %c0_85 = arith.constant 0 : index
    %c2_86 = arith.constant 2 : index
    %c2_87 = arith.constant 2 : index
    %c0_88 = arith.constant 0 : index
    %119 = vector.load %arg2[%c0_84, %c0_85, %c2_86, %c2_87, %c0_88] : memref<1x1x12x20x32xbf16, #tpu.memory_space<vmem>>, vector<1x1x8x16x32xbf16>
    %120 = vector.shape_cast %119 : vector<1x1x8x16x32xbf16> to vector<8x16x32xbf16>
    %121 = arith.extf %120 : vector<8x16x32xbf16> to vector<8x16x32xf32>
    %122 = arith.mulf %118, %121 : vector<8x16x32xf32>
    %123 = arith.addf %116, %122 : vector<8x16x32xf32>
    %c0_89 = arith.constant 0 : index
    %c416 = arith.constant 416 : index
    %124 = vector.load %arg5[%c0_89, %c416] : memref<128x1024xf32, #tpu.memory_space<vmem>>, vector<128x32xf32>
    %125 = vector.shape_cast %124 : vector<128x32xf32> to vector<8x16x32xf32>
    %c0_90 = arith.constant 0 : index
    %c0_91 = arith.constant 0 : index
    %c2_92 = arith.constant 2 : index
    %c3_93 = arith.constant 3 : index
    %c0_94 = arith.constant 0 : index
    %126 = vector.load %arg2[%c0_90, %c0_91, %c2_92, %c3_93, %c0_94] : memref<1x1x12x20x32xbf16, #tpu.memory_space<vmem>>, vector<1x1x8x16x32xbf16>
    %127 = vector.shape_cast %126 : vector<1x1x8x16x32xbf16> to vector<8x16x32xbf16>
    %128 = arith.extf %127 : vector<8x16x32xbf16> to vector<8x16x32xf32>
    %129 = arith.mulf %125, %128 : vector<8x16x32xf32>
    %130 = arith.addf %123, %129 : vector<8x16x32xf32>
    %c0_95 = arith.constant 0 : index
    %c448 = arith.constant 448 : index
    %131 = vector.load %arg5[%c0_95, %c448] : memref<128x1024xf32, #tpu.memory_space<vmem>>, vector<128x32xf32>
    %132 = vector.shape_cast %131 : vector<128x32xf32> to vector<8x16x32xf32>
    %c0_96 = arith.constant 0 : index
    %c0_97 = arith.constant 0 : index
    %c2_98 = arith.constant 2 : index
    %c4_99 = arith.constant 4 : index
    %c0_100 = arith.constant 0 : index
    %133 = vector.load %arg2[%c0_96, %c0_97, %c2_98, %c4_99, %c0_100] : memref<1x1x12x20x32xbf16, #tpu.memory_space<vmem>>, vector<1x1x8x16x32xbf16>
    %134 = vector.shape_cast %133 : vector<1x1x8x16x32xbf16> to vector<8x16x32xbf16>
    %135 = arith.extf %134 : vector<8x16x32xbf16> to vector<8x16x32xf32>
    %136 = arith.mulf %132, %135 : vector<8x16x32xf32>
    %137 = arith.addf %130, %136 : vector<8x16x32xf32>
    %c0_101 = arith.constant 0 : index
    %c480 = arith.constant 480 : index
    %138 = vector.load %arg5[%c0_101, %c480] : memref<128x1024xf32, #tpu.memory_space<vmem>>, vector<128x32xf32>
    %139 = vector.shape_cast %138 : vector<128x32xf32> to vector<8x16x32xf32>
    %c0_102 = arith.constant 0 : index
    %c0_103 = arith.constant 0 : index
    %c3_104 = arith.constant 3 : index
    %c0_105 = arith.constant 0 : index
    %c0_106 = arith.constant 0 : index
    %140 = vector.load %arg2[%c0_102, %c0_103, %c3_104, %c0_105, %c0_106] : memref<1x1x12x20x32xbf16, #tpu.memory_space<vmem>>, vector<1x1x8x16x32xbf16>
    %141 = vector.shape_cast %140 : vector<1x1x8x16x32xbf16> to vector<8x16x32xbf16>
    %142 = arith.extf %141 : vector<8x16x32xbf16> to vector<8x16x32xf32>
    %143 = arith.mulf %139, %142 : vector<8x16x32xf32>
    %144 = arith.addf %137, %143 : vector<8x16x32xf32>
    %c0_107 = arith.constant 0 : index
    %c512_108 = arith.constant 512 : index
    %145 = vector.load %arg5[%c0_107, %c512_108] : memref<128x1024xf32, #tpu.memory_space<vmem>>, vector<128x32xf32>
    %146 = vector.shape_cast %145 : vector<128x32xf32> to vector<8x16x32xf32>
    %c0_109 = arith.constant 0 : index
    %c0_110 = arith.constant 0 : index
    %c3_111 = arith.constant 3 : index
    %c1_112 = arith.constant 1 : index
    %c0_113 = arith.constant 0 : index
    %147 = vector.load %arg2[%c0_109, %c0_110, %c3_111, %c1_112, %c0_113] : memref<1x1x12x20x32xbf16, #tpu.memory_space<vmem>>, vector<1x1x8x16x32xbf16>
    %148 = vector.shape_cast %147 : vector<1x1x8x16x32xbf16> to vector<8x16x32xbf16>
    %149 = arith.extf %148 : vector<8x16x32xbf16> to vector<8x16x32xf32>
    %150 = arith.mulf %146, %149 : vector<8x16x32xf32>
    %151 = arith.addf %144, %150 : vector<8x16x32xf32>
    %c0_114 = arith.constant 0 : index
    %c544 = arith.constant 544 : index
    %152 = vector.load %arg5[%c0_114, %c544] : memref<128x1024xf32, #tpu.memory_space<vmem>>, vector<128x32xf32>
    %153 = vector.shape_cast %152 : vector<128x32xf32> to vector<8x16x32xf32>
    %c0_115 = arith.constant 0 : index
    %c0_116 = arith.constant 0 : index
    %c3_117 = arith.constant 3 : index
    %c2_118 = arith.constant 2 : index
    %c0_119 = arith.constant 0 : index
    %154 = vector.load %arg2[%c0_115, %c0_116, %c3_117, %c2_118, %c0_119] : memref<1x1x12x20x32xbf16, #tpu.memory_space<vmem>>, vector<1x1x8x16x32xbf16>
    %155 = vector.shape_cast %154 : vector<1x1x8x16x32xbf16> to vector<8x16x32xbf16>
    %156 = arith.extf %155 : vector<8x16x32xbf16> to vector<8x16x32xf32>
    %157 = arith.mulf %153, %156 : vector<8x16x32xf32>
    %158 = arith.addf %151, %157 : vector<8x16x32xf32>
    %c0_120 = arith.constant 0 : index
    %c576 = arith.constant 576 : index
    %159 = vector.load %arg5[%c0_120, %c576] : memref<128x1024xf32, #tpu.memory_space<vmem>>, vector<128x32xf32>
    %160 = vector.shape_cast %159 : vector<128x32xf32> to vector<8x16x32xf32>
    %c0_121 = arith.constant 0 : index
    %c0_122 = arith.constant 0 : index
    %c3_123 = arith.constant 3 : index
    %c3_124 = arith.constant 3 : index
    %c0_125 = arith.constant 0 : index
    %161 = vector.load %arg2[%c0_121, %c0_122, %c3_123, %c3_124, %c0_125] : memref<1x1x12x20x32xbf16, #tpu.memory_space<vmem>>, vector<1x1x8x16x32xbf16>
    %162 = vector.shape_cast %161 : vector<1x1x8x16x32xbf16> to vector<8x16x32xbf16>
    %163 = arith.extf %162 : vector<8x16x32xbf16> to vector<8x16x32xf32>
    %164 = arith.mulf %160, %163 : vector<8x16x32xf32>
    %165 = arith.addf %158, %164 : vector<8x16x32xf32>
    %c0_126 = arith.constant 0 : index
    %c608 = arith.constant 608 : index
    %166 = vector.load %arg5[%c0_126, %c608] : memref<128x1024xf32, #tpu.memory_space<vmem>>, vector<128x32xf32>
    %167 = vector.shape_cast %166 : vector<128x32xf32> to vector<8x16x32xf32>
    %c0_127 = arith.constant 0 : index
    %c0_128 = arith.constant 0 : index
    %c3_129 = arith.constant 3 : index
    %c4_130 = arith.constant 4 : index
    %c0_131 = arith.constant 0 : index
    %168 = vector.load %arg2[%c0_127, %c0_128, %c3_129, %c4_130, %c0_131] : memref<1x1x12x20x32xbf16, #tpu.memory_space<vmem>>, vector<1x1x8x16x32xbf16>
    %169 = vector.shape_cast %168 : vector<1x1x8x16x32xbf16> to vector<8x16x32xbf16>
    %170 = arith.extf %169 : vector<8x16x32xbf16> to vector<8x16x32xf32>
    %171 = arith.mulf %167, %170 : vector<8x16x32xf32>
    %172 = arith.addf %165, %171 : vector<8x16x32xf32>
    %c0_132 = arith.constant 0 : index
    %c640 = arith.constant 640 : index
    %173 = vector.load %arg5[%c0_132, %c640] : memref<128x1024xf32, #tpu.memory_space<vmem>>, vector<128x32xf32>
    %174 = vector.shape_cast %173 : vector<128x32xf32> to vector<8x16x32xf32>
    %c0_133 = arith.constant 0 : index
    %c0_134 = arith.constant 0 : index
    %c4_135 = arith.constant 4 : index
    %c0_136 = arith.constant 0 : index
    %c0_137 = arith.constant 0 : index
    %175 = vector.load %arg2[%c0_133, %c0_134, %c4_135, %c0_136, %c0_137] : memref<1x1x12x20x32xbf16, #tpu.memory_space<vmem>>, vector<1x1x8x16x32xbf16>
    %176 = vector.shape_cast %175 : vector<1x1x8x16x32xbf16> to vector<8x16x32xbf16>
    %177 = arith.extf %176 : vector<8x16x32xbf16> to vector<8x16x32xf32>
    %178 = arith.mulf %174, %177 : vector<8x16x32xf32>
    %179 = arith.addf %172, %178 : vector<8x16x32xf32>
    %c0_138 = arith.constant 0 : index
    %c672 = arith.constant 672 : index
    %180 = vector.load %arg5[%c0_138, %c672] : memref<128x1024xf32, #tpu.memory_space<vmem>>, vector<128x32xf32>
    %181 = vector.shape_cast %180 : vector<128x32xf32> to vector<8x16x32xf32>
    %c0_139 = arith.constant 0 : index
    %c0_140 = arith.constant 0 : index
    %c4_141 = arith.constant 4 : index
    %c1_142 = arith.constant 1 : index
    %c0_143 = arith.constant 0 : index
    %182 = vector.load %arg2[%c0_139, %c0_140, %c4_141, %c1_142, %c0_143] : memref<1x1x12x20x32xbf16, #tpu.memory_space<vmem>>, vector<1x1x8x16x32xbf16>
    %183 = vector.shape_cast %182 : vector<1x1x8x16x32xbf16> to vector<8x16x32xbf16>
    %184 = arith.extf %183 : vector<8x16x32xbf16> to vector<8x16x32xf32>
    %185 = arith.mulf %181, %184 : vector<8x16x32xf32>
    %186 = arith.addf %179, %185 : vector<8x16x32xf32>
    %c0_144 = arith.constant 0 : index
    %c704 = arith.constant 704 : index
    %187 = vector.load %arg5[%c0_144, %c704] : memref<128x1024xf32, #tpu.memory_space<vmem>>, vector<128x32xf32>
    %188 = vector.shape_cast %187 : vector<128x32xf32> to vector<8x16x32xf32>
    %c0_145 = arith.constant 0 : index
    %c0_146 = arith.constant 0 : index
    %c4_147 = arith.constant 4 : index
    %c2_148 = arith.constant 2 : index
    %c0_149 = arith.constant 0 : index
    %189 = vector.load %arg2[%c0_145, %c0_146, %c4_147, %c2_148, %c0_149] : memref<1x1x12x20x32xbf16, #tpu.memory_space<vmem>>, vector<1x1x8x16x32xbf16>
    %190 = vector.shape_cast %189 : vector<1x1x8x16x32xbf16> to vector<8x16x32xbf16>
    %191 = arith.extf %190 : vector<8x16x32xbf16> to vector<8x16x32xf32>
    %192 = arith.mulf %188, %191 : vector<8x16x32xf32>
    %193 = arith.addf %186, %192 : vector<8x16x32xf32>
    %c0_150 = arith.constant 0 : index
    %c736 = arith.constant 736 : index
    %194 = vector.load %arg5[%c0_150, %c736] : memref<128x1024xf32, #tpu.memory_space<vmem>>, vector<128x32xf32>
    %195 = vector.shape_cast %194 : vector<128x32xf32> to vector<8x16x32xf32>
    %c0_151 = arith.constant 0 : index
    %c0_152 = arith.constant 0 : index
    %c4_153 = arith.constant 4 : index
    %c3_154 = arith.constant 3 : index
    %c0_155 = arith.constant 0 : index
    %196 = vector.load %arg2[%c0_151, %c0_152, %c4_153, %c3_154, %c0_155] : memref<1x1x12x20x32xbf16, #tpu.memory_space<vmem>>, vector<1x1x8x16x32xbf16>
    %197 = vector.shape_cast %196 : vector<1x1x8x16x32xbf16> to vector<8x16x32xbf16>
    %198 = arith.extf %197 : vector<8x16x32xbf16> to vector<8x16x32xf32>
    %199 = arith.mulf %195, %198 : vector<8x16x32xf32>
    %200 = arith.addf %193, %199 : vector<8x16x32xf32>
    %c0_156 = arith.constant 0 : index
    %c768 = arith.constant 768 : index
    %201 = vector.load %arg5[%c0_156, %c768] : memref<128x1024xf32, #tpu.memory_space<vmem>>, vector<128x32xf32>
    %202 = vector.shape_cast %201 : vector<128x32xf32> to vector<8x16x32xf32>
    %c0_157 = arith.constant 0 : index
    %c0_158 = arith.constant 0 : index
    %c4_159 = arith.constant 4 : index
    %c4_160 = arith.constant 4 : index
    %c0_161 = arith.constant 0 : index
    %203 = vector.load %arg2[%c0_157, %c0_158, %c4_159, %c4_160, %c0_161] : memref<1x1x12x20x32xbf16, #tpu.memory_space<vmem>>, vector<1x1x8x16x32xbf16>
    %204 = vector.shape_cast %203 : vector<1x1x8x16x32xbf16> to vector<8x16x32xbf16>
    %205 = arith.extf %204 : vector<8x16x32xbf16> to vector<8x16x32xf32>
    %206 = arith.mulf %202, %205 : vector<8x16x32xf32>
    %207 = arith.addf %200, %206 : vector<8x16x32xf32>
    %208 = vector.shape_cast %31 : vector<128x32xf32> to vector<8x16x32xf32>
    %209 = arith.mulf %207, %208 : vector<8x16x32xf32>
    %c0_162 = arith.constant 0 : index
    %c0_163 = arith.constant 0 : index
    %c0_164 = arith.constant 0 : index
    %c0_165 = arith.constant 0 : index
    %c0_166 = arith.constant 0 : index
    %210 = vector.load %arg4[%c0_162, %c0_163, %c0_164, %c0_165, %c0_166] : memref<1x1x8x16x32xf32, #tpu.memory_space<vmem>>, vector<1x1x8x16x32xf32>
    %211 = vector.shape_cast %210 : vector<1x1x8x16x32xf32> to vector<8x16x32xf32>
    %212 = vector.shape_cast %209 : vector<8x16x32xf32> to vector<1x1x8x16x32xf32>
    tpu.vector_store %arg4[%c0_162, %c0_163, %c0_164, %c0_165, %c0_166], %212 {strides = array<i32>} : memref<1x1x8x16x32xf32, #tpu.memory_space<vmem>>, vector<1x1x8x16x32xf32>,
    return
  }
  func.func @transform_0(%arg0: i32, %arg1: i32) -> (i32, i32, i32, i32, i32) {
    %c0_i32 = arith.constant 0 : i32
    %c0_i32_0 = arith.constant 0 : i32
    %c0_i32_1 = arith.constant 0 : i32
    %c0_i32_2 = arith.constant 0 : i32
    return %arg0, %arg1, %c0_i32, %c0_i32_0, %c0_i32_1 : i32, i32, i32, i32, i32
  }
  func.func @transform_1(%arg0: i32, %arg1: i32) -> (i32, i32) {
    %c0_i32 = arith.constant 0 : i32
    %c0_i32_0 = arith.constant 0 : i32
    %c0_i32_1 = arith.constant 0 : i32
    return %c0_i32, %c0_i32_0 : i32, i32
  }
  func.func @transform_2(%arg0: i32, %arg1: i32) -> (i32, i32, i32, i32, i32) {
    %c0_i32 = arith.constant 0 : i32
    %c0_i32_0 = arith.constant 0 : i32
    %c0_i32_1 = arith.constant 0 : i32
    %c0_i32_2 = arith.constant 0 : i32
    return %arg0, %arg1, %c0_i32, %c0_i32_0, %c0_i32_1 : i32, i32, i32, i32, i32
  }
}

</mosaic_0001>

<llo_original>
// kernel: tpu_custom_call.1
$region0: #{tpu_custom_call.1}
  #allocation0 [shape = 'u32[]', space=smem, size = 0x4, offset = 0x4, fixed_abs, tag = 'smem constant byte address 0x4 - core index']
  #allocation1 [shape = 'u32[72,128]{1,0:T(1,128)}', space=vmem, size = 0x9000, scoped, tag = 'internal scratch']
  #allocation2 [shape = 'f32[128,1024]{1,0:T(8,128)}', space=vmem, size = 0x80000, scoped, tag = 'scratch operand']
  %s0 = inlined_call_operand.vmem [shape: bf16[2,2,12,20,32], index: 0, kind: input, shape index: {}]
  %s1 = inlined_call_operand.vmem [shape: bf16[32,1024], index: 1, kind: input, shape index: {}]
  %s2 = inlined_call_operand.hbm [shape: f32[2,2,8,16,32], index: 2, kind: output, shape index: {}]
  %s3 = sld [smem:[#allocation0]]
  $region41: #{tpu_custom_call.1} parent=0
    _
  %s5 = ssub.s32 1, %s3
  %s6 = scalar_select 0, %s5, %s3
  $region1: #{tpu_custom_call.1} parent=0
    #allocation3 [shape = 'u8[131072]{0}', space=vmem, size = 0x20000, scoped, tag = 'output window, operand 0']
    #allocation4 [shape = 's32[2]{0}', space=sflag, size = 0x8, scoped, tag = 'scoped memory for tpu_custom_call.1']
    %7 = vsyncpa [#allocation4], 0
    %s8 = scalar_lea.sflag [#allocation4], 1
    %9 = vsyncpa %s8, 0
    loop: start=0, step=1, limit=6
    $region2: #{tpu_custom_call.1} parent=1 // loop_pre_header
      _
    $region3: #{tpu_custom_call.1} parent=1 // loop_header
      %s11 = sphi 0, %s15
      %p12 = scmp.ge.s32.totalorder %s11, 6
      %s18 = sphi 0, %s30
      %s19 = sphi 0, %s26
      %s20 = sphi 0, %s18
      %s21 = sphi 0, %s19
      %s22 = sphi 0, %s20
      %s23 = sphi 0, %s21
      %s35 = sphi 0, %s37
      %s38 = sphi 0, %s35
      %s39 = sphi 0, %s38
      %s55 = sphi 0, %s39
      %s59 = sphi 0, %s59
      %s61 = sphi 0, %s59
      %s62 = sphi 0, %s61
      %s76 = sphi 0, %s62
      %s84 = sphi 0, %s86
      %s87 = sphi 0, %s84
      %s88 = sphi 0, %s87
      %s104 = sphi 0, %s88
    $region4: #{tpu_custom_call.1} parent=1 // loop_header_branch
      %14 = sbr.rel (%p12) target = $region8
    $region5: #{tpu_custom_call.1} parent=1 // loop_body
      %s16 = ssub.s32 %s11, 1
      %s17 = ssub.s32 %s11, 2
      %s24 = sadd.s32 1, %s19
      %p25 = scmp.ge.s32.totalorder %s24, 2
      %s26 = scalar_select %p25, 0, %s24
      %s27 = sadd.s32 1, %s18
      %s28 = scalar_select %p25, %s27, %s18
      %p29 = scmp.ge.s32.totalorder %s28, 2
      %s30 = scalar_select %p29, 0, %s28
      %s31 = ssub.s32 %s18, %s30
      %s32 = ssub.s32 %s19, %s26
      %s33 = sor.u32 %s31, %s32
      %p34 = scmp.eq.s32.totalorder %s33, 0
      %s36 = sadd.s32 %s35, 1
      %s37 = scalar_select %p34, %s35, %s36
      %p40 = pneg %p34
      %p41 = scmp.eq.s32.totalorder %s11, 3
      %p42 = por %p40, %p41
      %p43 = scmp.ne.s32.totalorder %s35, %s38
      %p44 = scmp.eq.s32.totalorder %s11, 0
      %p45 = por %p43, %p44
      %p46 = scmp.ne.s32.totalorder %s35, %s38
      %p47 = scmp.eq.s32.totalorder %s16, 3
      %p48 = por %p46, %p47
      %p49 = scmp.ne.s32.totalorder %s38, %s39
      %p50 = scmp.eq.s32.totalorder %s16, 0
      %p51 = por %p49, %p50
      %p52 = scmp.ne.s32.totalorder %s38, %s39
      %p53 = scmp.eq.s32.totalorder %s17, 3
      %p54 = por %p52, %p53
      %p56 = scmp.ne.s32.totalorder %s39, %s55
      %p57 = scmp.eq.s32.totalorder %s17, 0
      %p58 = por %p56, %p57
      %s60 = sadd.s32 %s59, 1
      %p63 = scmp.eq.s32.totalorder %s11, 3
      %p64 = scmp.ne.s32.totalorder %s59, %s61
      %p65 = scmp.eq.s32.totalorder %s11, 0
      %p66 = por %p64, %p65
      %p67 = scmp.ne.s32.totalorder %s59, %s61
      %p68 = scmp.eq.s32.totalorder %s16, 3
      %p69 = por %p67, %p68
      %p70 = scmp.ne.s32.totalorder %s61, %s62
      %p71 = scmp.eq.s32.totalorder %s16, 0
      %p72 = por %p70, %p71
      %p73 = scmp.ne.s32.totalorder %s61, %s62
      %p74 = scmp.eq.s32.totalorder %s17, 3
      %p75 = por %p73, %p74
      %p77 = scmp.ne.s32.totalorder %s62, %s76
      %p78 = scmp.eq.s32.totalorder %s17, 0
      %p79 = por %p77, %p78
      %s80 = ssub.s32 %s18, %s30
      %s81 = ssub.s32 %s19, %s26
      %s82 = sor.u32 %s80, %s81
      %p83 = scmp.eq.s32.totalorder %s82, 0
      %s85 = sadd.s32 %s84, 1
      %s86 = scalar_select %p83, %s84, %s85
      %p89 = pneg %p83
      %p90 = scmp.eq.s32.totalorder %s11, 3
      %p91 = por %p89, %p90
      %p92 = scmp.ne.s32.totalorder %s84, %s87
      %p93 = scmp.eq.s32.totalorder %s11, 0
      %p94 = por %p92, %p93
      %p95 = scmp.ne.s32.totalorder %s84, %s87
      %p96 = scmp.eq.s32.totalorder %s16, 3
      %p97 = por %p95, %p96
      %p98 = scmp.ne.s32.totalorder %s87, %s88
      %p99 = scmp.eq.s32.totalorder %s16, 0
      %p100 = por %p98, %p99
      %p101 = scmp.ne.s32.totalorder %s87, %s88
      %p102 = scmp.eq.s32.totalorder %s17, 3
      %p103 = por %p101, %p102
      %p105 = scmp.ne.s32.totalorder %s88, %s104
      %p106 = scmp.eq.s32.totalorder %s17, 0
      %p107 = por %p105, %p106
      %p108 = scmp.le.s32.totalorder 1, %s11
      %p109 = scmp.lt.s32.totalorder %s11, 5
      %p110 = pnand %p108, %p109
      %p111 = pneg %p110
      // Predicated region
      $region9: #{tpu_custom_call.1} parent=5 // pred_check
        _
      $region10: #{tpu_custom_call.1} parent=5 // pred_check_branch
        %113 = sbr.rel (%p110) target = $region12
      $region11: #{tpu_custom_call.1} parent=5 // pred_region
        %s114 = ssub.s32 %s11, 1
        // Predicated region
        $region13: #{tpu_custom_call.1} parent=11 // pred_check
          %p115 = pneg %p72
        $region14: #{tpu_custom_call.1} parent=11 // pred_check_branch
          %117 = sbr.rel (%p115) target = $region16
        $region15: #{tpu_custom_call.1} parent=11 // pred_region
          _
        $region16: #{tpu_custom_call.1} parent=11 // pred_fallthru
          _
      $region12: #{tpu_custom_call.1} parent=5 // pred_fallthru
        _
      %p118 = scmp.lt.s32.totalorder %s11, 4
      // Predicated region
      $region17: #{tpu_custom_call.1} parent=5 // pred_check
        %p119 = pneg %p118
      $region18: #{tpu_custom_call.1} parent=5 // pred_check_branch
        %121 = sbr.rel (%p119) target = $region20
      $region19: #{tpu_custom_call.1} parent=5 // pred_region
        // Predicated region
        $region21: #{tpu_custom_call.1} parent=19 // pred_check
          %p122 = pneg %p45
        $region22: #{tpu_custom_call.1} parent=19 // pred_check_branch
          %124 = sbr.rel (%p122) target = $region24
        $region23: #{tpu_custom_call.1} parent=19 // pred_region
          %p125 = scmp.lt.s32.totalorder %s18, 1
          %s126 = scalar_select %p125, %s18, 1
          %p127 = scmp.lt.s32.totalorder %s19, 1
          %s128 = scalar_select %p127, %s19, 1
          %s129 = smul.addr %s128, 36
          %s130 = smul.addr %s126, 72
          %s131 = sadd.s32 %s129, %s130
          %s132 = smul.addr %s131, 4
          %s133 = scalar_lea.vmem %s0, %s132
        $region24: #{tpu_custom_call.1} parent=19 // pred_fallthru
          _
      $region20: #{tpu_custom_call.1} parent=5 // pred_fallthru
        _
      %p134 = scmp.le.s32.totalorder 1, %s11
      %p135 = scmp.lt.s32.totalorder %s11, 5
      %p136 = pnand %p134, %p135
      %p137 = pneg %p136
      // Predicated region
      $region25: #{tpu_custom_call.1} parent=5 // pred_check
        _
      $region26: #{tpu_custom_call.1} parent=5 // pred_check_branch
        %139 = sbr.rel (%p136) target = $region28
      $region27: #{tpu_custom_call.1} parent=5 // pred_region
        %s140 = ssub.s32 %s11, 1
        %p141 = scmp.lt.s32.totalorder %s20, 1
        %s142 = scalar_select %p141, %s20, 1
        %p143 = scmp.lt.s32.totalorder %s21, 1
        %s144 = scalar_select %p143, %s21, 1
        %s145 = smul.addr %s144, 36
        %s146 = smul.addr %s142, 72
        %s147 = sadd.s32 %s145, %s146
        %s148 = smul.addr %s147, 4
        %s149 = scalar_lea.vmem %s0, %s148
        %p150 = pneg %p51
        %p151 = pneg %p48
        %p152 = pneg %p72
        %p153 = pneg %p69
        %p154 = pneg %p100
        %p155 = pneg %p97
        %s156 = sand.u32 %s87, 1
        %s157 = scalar_lea.sflag [#allocation4], %s156
        %s158 = sand.u32 %s87, 1
        %s159 = smul.addr %s158, 128
        %s160 = scalar_lea.vmem [#allocation3], %s159
        %p161 = scmp.lt.s32.totalorder %s20, 1
        %s162 = scalar_select %p161, %s20, 1
        %p163 = scmp.lt.s32.totalorder %s21, 1
        %s164 = scalar_select %p163, %s21, 1
        %s165 = smul.addr %s164, 36
        %s166 = smul.addr %s162, 72
        %s167 = sadd.s32 %s165, %s166
        %s168 = smul.addr %s167, 4
        %s169 = scalar_lea.vmem %s0, %s168
        %s171 = scalar_lea.vmem %s169, 24
        %v172 = vld [vmem:[%s171] sm:$0xe]
        %v173 = vld [vmem:[%s171 + $0x4] sm:$0xf]
        %v174 = vld [vmem:[%s171 + $0x8] sm:$0x1]
        %v175 = vld [vmem:[%s171 + $0xc] sm:$0xe]
        %v176 = vld [vmem:[%s171 + $0x10] sm:$0xf]
        %v177 = vld [vmem:[%s171 + $0x14] sm:$0x1]
        %v178 = vld [vmem:[%s171 + $0x18] sm:$0xe]
        %v179 = vld [vmem:[%s171 + $0x1c] sm:$0xf]
        %v180 = vld [vmem:[%s171 + $0x20] sm:$0x1]
        %v181 = vld [vmem:[%s171 + $0x24] sm:$0xe]
        %v182 = vld [vmem:[%s171 + $0x28] sm:$0xf]
        %v183 = vld [vmem:[%s171 + $0x2c] sm:$0x1]
        %v184 = vld [vmem:[%s171 + $0x30] sm:$0xe]
        %v185 = vld [vmem:[%s171 + $0x34] sm:$0xf]
        %v186 = vld [vmem:[%s171 + $0x38] sm:$0x1]
        %v187 = vld [vmem:[%s171 + $0x3c] sm:$0xe]
        %v188 = vld [vmem:[%s171 + $0x40] sm:$0xf]
        %v189 = vld [vmem:[%s171 + $0x44] sm:$0x1]
        %v190 = vld [vmem:[%s171 + $0x48] sm:$0xe]
        %v191 = vld [vmem:[%s171 + $0x4c] sm:$0xf]
        %v192 = vld [vmem:[%s171 + $0x50] sm:$0x1]
        %v193 = vld [vmem:[%s171 + $0x54] sm:$0xe]
        %v194 = vld [vmem:[%s171 + $0x58] sm:$0xf]
        %v195 = vld [vmem:[%s171 + $0x5c] sm:$0x1]
        %vm220 = vcmask 1042432
        %vm221 = vcmask 1046532
        %vm222 = vmor %vm220, %vm221
        %v223 = vrot.slane %v172, 5
        %v224 = vrot.slane %v223, 4
        %v225 = vrot.slane %v173, 5
        %v226 = vsel %vm222, %v224, %v225
        %v227 = vrot.slane %v225, 4
        %v228 = vrot.slane %v174, 5
        %v229 = vsel %vm222, %v227, %v228
        %v230 = vrot.slane %v175, 5
        %v231 = vrot.slane %v230, 4
        %v232 = vrot.slane %v176, 5
        %v233 = vsel %vm222, %v231, %v232
        %v234 = vrot.slane %v232, 4
        %v235 = vrot.slane %v177, 5
        %v236 = vsel %vm222, %v234, %v235
        %v237 = vrot.slane %v178, 5
        %v238 = vrot.slane %v237, 4
        %v239 = vrot.slane %v179, 5
        %v240 = vsel %vm222, %v238, %v239
        %v241 = vrot.slane %v239, 4
        %v242 = vrot.slane %v180, 5
        %v243 = vsel %vm222, %v241, %v242
        %v244 = vrot.slane %v181, 5
        %v245 = vrot.slane %v244, 4
        %v246 = vrot.slane %v182, 5
        %v247 = vsel %vm222, %v245, %v246
        %v248 = vrot.slane %v246, 4
        %v249 = vrot.slane %v183, 5
        %v250 = vsel %vm222, %v248, %v249
        %v251 = vrot.slane %v184, 5
        %v252 = vrot.slane %v251, 4
        %v253 = vrot.slane %v185, 5
        %v254 = vsel %vm222, %v252, %v253
        %v255 = vrot.slane %v253, 4
        %v256 = vrot.slane %v186, 5
        %v257 = vsel %vm222, %v255, %v256
        %v258 = vrot.slane %v187, 5
        %v259 = vrot.slane %v258, 4
        %v260 = vrot.slane %v188, 5
        %v261 = vsel %vm222, %v259, %v260
        %v262 = vrot.slane %v260, 4
        %v263 = vrot.slane %v189, 5
        %v264 = vsel %vm222, %v262, %v263
        %v265 = vrot.slane %v190, 5
        %v266 = vrot.slane %v265, 4
        %v267 = vrot.slane %v191, 5
        %v268 = vsel %vm222, %v266, %v267
        %v269 = vrot.slane %v267, 4
        %v270 = vrot.slane %v192, 5
        %v271 = vsel %vm222, %v269, %v270
        %v272 = vrot.slane %v193, 5
        %v273 = vrot.slane %v272, 4
        %v274 = vrot.slane %v194, 5
        %v275 = vsel %vm222, %v273, %v274
        %v276 = vrot.slane %v274, 4
        %v277 = vrot.slane %v195, 5
        %v278 = vsel %vm222, %v276, %v277
        %v279 = vld [vmem:[%s1] sm:$0xff]
        %v280 = vld [vmem:[%s1 + $0x8] sm:$0xff]
        %v281 = vld [vmem:[%s1 + $0x10] sm:$0xff]
        %v282 = vld [vmem:[%s1 + $0x18] sm:$0xff]
        %v283 = vld [vmem:[%s1 + $0x20] sm:$0xff]
        %v284 = vld [vmem:[%s1 + $0x28] sm:$0xff]
        %v285 = vld [vmem:[%s1 + $0x30] sm:$0xff]
        %v286 = vld [vmem:[%s1 + $0x38] sm:$0xff]
        %v287 = vld [vmem:[%s1 + $0x40] sm:$0xff]
        %v288 = vld [vmem:[%s1 + $0x48] sm:$0xff]
        %v289 = vld [vmem:[%s1 + $0x50] sm:$0xff]
        %v290 = vld [vmem:[%s1 + $0x58] sm:$0xff]
        %v291 = vld [vmem:[%s1 + $0x60] sm:$0xff]
        %v292 = vld [vmem:[%s1 + $0x68] sm:$0xff]
        %v293 = vld [vmem:[%s1 + $0x70] sm:$0xff]
        %v294 = vld [vmem:[%s1 + $0x78] sm:$0xff]
        %v295 = vunpack.c.l.b16 %v226
        %v296 = vunpack.c.l.b16 %v229
        %v297 = vunpack.c.l.b16 %v233
        %v298 = vunpack.c.l.b16 %v236
        %v299 = vunpack.c.l.b16 %v240
        %v300 = vunpack.c.l.b16 %v243
        %v301 = vunpack.c.l.b16 %v247
        %v302 = vunpack.c.l.b16 %v250
        %v303 = vunpack.c.l.b16 %v254
        %v304 = vunpack.c.l.b16 %v257
        %v305 = vunpack.c.l.b16 %v261
        %v306 = vunpack.c.l.b16 %v264
        %v307 = vunpack.c.l.b16 %v268
        %v308 = vunpack.c.l.b16 %v271
        %v309 = vunpack.c.l.b16 %v275
        %v310 = vunpack.c.l.b16 %v278
        %v311 = vpack.c.b16 %v296, %v295
        %v312 = vpack.c.b16 %v298, %v297
        %v313 = vpack.c.b16 %v300, %v299
        %v314 = vpack.c.b16 %v302, %v301
        %v315 = vpack.c.b16 %v304, %v303
        %v316 = vpack.c.b16 %v306, %v305
        %v317 = vpack.c.b16 %v308, %v307
        %v318 = vpack.c.b16 %v310, %v309
        %v335 = vunpack.c.l.b16 %v279
        %v336 = vunpack.c.h.b16 %v279
        %v337 = vunpack.c.l.b16 %v280
        %v338 = vunpack.c.h.b16 %v280
        %v339 = vunpack.c.l.b16 %v281
        %v340 = vunpack.c.h.b16 %v281
        %v341 = vunpack.c.l.b16 %v282
        %v342 = vunpack.c.h.b16 %v282
        %v343 = vunpack.c.l.b16 %v283
        %v344 = vunpack.c.h.b16 %v283
        %v345 = vunpack.c.l.b16 %v284
        %v346 = vunpack.c.h.b16 %v284
        %v347 = vunpack.c.l.b16 %v285
        %v348 = vunpack.c.h.b16 %v285
        %v349 = vunpack.c.l.b16 %v286
        %v350 = vunpack.c.h.b16 %v286
        %v351 = vunpack.c.l.b16 %v287
        %v352 = vunpack.c.h.b16 %v287
        %v353 = vunpack.c.l.b16 %v288
        %v354 = vunpack.c.h.b16 %v288
        %v355 = vunpack.c.l.b16 %v289
        %v356 = vunpack.c.h.b16 %v289
        %v357 = vunpack.c.l.b16 %v290
        %v358 = vunpack.c.h.b16 %v290
        %v359 = vunpack.c.l.b16 %v291
        %v360 = vunpack.c.h.b16 %v291
        %v361 = vunpack.c.l.b16 %v292
        %v362 = vunpack.c.h.b16 %v292
        %v363 = vunpack.c.l.b16 %v293
        %v364 = vunpack.c.h.b16 %v293
        %v365 = vunpack.c.l.b16 %v294
        %v366 = vunpack.c.h.b16 %v294
        %v367 = vpack.c.b16 %v343, %v335
        %v368 = vpack.c.b16 %v344, %v336
        %v369 = vpack.c.b16 %v345, %v337
        %v370 = vpack.c.b16 %v346, %v338
        %v371 = vpack.c.b16 %v347, %v339
        %v372 = vpack.c.b16 %v348, %v340
        %v373 = vpack.c.b16 %v349, %v341
        %v374 = vpack.c.b16 %v350, %v342
        %v375 = vpack.c.b16 %v359, %v351
        %v376 = vpack.c.b16 %v360, %v352
        %v377 = vpack.c.b16 %v361, %v353
        %v378 = vpack.c.b16 %v362, %v354
        %v379 = vpack.c.b16 %v363, %v355
        %v380 = vpack.c.b16 %v364, %v356
        %v381 = vpack.c.b16 %v365, %v357
        %v382 = vpack.c.b16 %v366, %v358
        %vm399 = vcmask 261120
        %v401 = vsel %vm399, %v311, 0
        %v404 = vsel %vm399, %v312, 0
        %v407 = vsel %vm399, %v313, 0
        %v410 = vsel %vm399, %v314, 0
        %v413 = vsel %vm399, %v315, 0
        %v416 = vsel %vm399, %v316, 0
        %v419 = vsel %vm399, %v317, 0
        %v422 = vsel %vm399, %v318, 0
        %424 = vmatpush.bf16.msra.mxu0 0
        %425 = vmatpush.bf16.msra.mxu0 0
        %426 = vmatpush.bf16.msra.mxu0 0
        %427 = vmatpush.bf16.msra.mxu0 0
        %428 = vmatpush.bf16.msra.mxu0 0
        %429 = vmatpush.bf16.msra.mxu0 0
        %430 = vmatpush.bf16.msra.mxu0 %v375
        %431 = vmatpush.bf16.msra.mxu0 %v367
        %432 = vmatmul.bf16.gmra.mxu0 %v401
        %v433 = vpop.f32.mrf.mxu0
        %v434 = vadd.f32 0.0, %v433
        %v435 = vpop.f32.mrf.mxu0
        %v436 = vadd.f32 0.0, %v435
        %437 = vmatmul.bf16.gmra.mxu0 %v404
        %v438 = vpop.f32.mrf.mxu0
        %v439 = vadd.f32 0.0, %v438
        %v440 = vpop.f32.mrf.mxu0
        %v441 = vadd.f32 0.0, %v440
        %442 = vmatmul.bf16.gmra.mxu0 %v407
        %v443 = vpop.f32.mrf.mxu0
        %v444 = vadd.f32 0.0, %v443
        %v445 = vpop.f32.mrf.mxu0
        %v446 = vadd.f32 0.0, %v445
        %447 = vmatmul.bf16.gmra.mxu0 %v410
        %v448 = vpop.f32.mrf.mxu0
        %v449 = vadd.f32 0.0, %v448
        %v450 = vpop.f32.mrf.mxu0
        %v451 = vadd.f32 0.0, %v450
        %452 = vmatmul.bf16.gmra.mxu0 %v413
        %v453 = vpop.f32.mrf.mxu0
        %v454 = vadd.f32 0.0, %v453
        %v455 = vpop.f32.mrf.mxu0
        %v456 = vadd.f32 0.0, %v455
        %457 = vmatmul.bf16.gmra.mxu0 %v416
        %v458 = vpop.f32.mrf.mxu0
        %v459 = vadd.f32 0.0, %v458
        %v460 = vpop.f32.mrf.mxu0
        %v461 = vadd.f32 0.0, %v460
        %462 = vmatmul.bf16.gmra.mxu0 %v419
        %v463 = vpop.f32.mrf.mxu0
        %v464 = vadd.f32 0.0, %v463
        %v465 = vpop.f32.mrf.mxu0
        %v466 = vadd.f32 0.0, %v465
        %467 = vmatmul.bf16.gmra.mxu0 %v422
        %v468 = vpop.f32.mrf.mxu0
        %v469 = vadd.f32 0.0, %v468
        %v470 = vpop.f32.mrf.mxu0
        %v471 = vadd.f32 0.0, %v470
        %472 = vdwg.mxu0
        %473 = vmatpush.bf16.msra.mxu0 0
        %474 = vmatpush.bf16.msra.mxu0 0
        %475 = vmatpush.bf16.msra.mxu0 0
        %476 = vmatpush.bf16.msra.mxu0 0
        %477 = vmatpush.bf16.msra.mxu0 0
        %478 = vmatpush.bf16.msra.mxu0 0
        %479 = vmatpush.bf16.msra.mxu0 %v376
        %480 = vmatpush.bf16.msra.mxu0 %v368
        %481 = vmatmul.bf16.gmra.mxu0 %v401
        %v482 = vpop.f32.mrf.mxu0
        %v483 = vadd.f32 0.0, %v482
        %v484 = vpop.f32.mrf.mxu0
        %v485 = vadd.f32 0.0, %v484
        %486 = vmatmul.bf16.gmra.mxu0 %v404
        %v487 = vpop.f32.mrf.mxu0
        %v488 = vadd.f32 0.0, %v487
        %v489 = vpop.f32.mrf.mxu0
        %v490 = vadd.f32 0.0, %v489
        %491 = vmatmul.bf16.gmra.mxu0 %v407
        %v492 = vpop.f32.mrf.mxu0
        %v493 = vadd.f32 0.0, %v492
        %v494 = vpop.f32.mrf.mxu0
        %v495 = vadd.f32 0.0, %v494
        %496 = vmatmul.bf16.gmra.mxu0 %v410
        %v497 = vpop.f32.mrf.mxu0
        %v498 = vadd.f32 0.0, %v497
        %v499 = vpop.f32.mrf.mxu0
        %v500 = vadd.f32 0.0, %v499
        %501 = vmatmul.bf16.gmra.mxu0 %v413
        %v502 = vpop.f32.mrf.mxu0
        %v503 = vadd.f32 0.0, %v502
        %v504 = vpop.f32.mrf.mxu0
        %v505 = vadd.f32 0.0, %v504
        %506 = vmatmul.bf16.gmra.mxu0 %v416
        %v507 = vpop.f32.mrf.mxu0
        %v508 = vadd.f32 0.0, %v507
        %v509 = vpop.f32.mrf.mxu0
        %v510 = vadd.f32 0.0, %v509
        %511 = vmatmul.bf16.gmra.mxu0 %v419
        %v512 = vpop.f32.mrf.mxu0
        %v513 = vadd.f32 0.0, %v512
        %v514 = vpop.f32.mrf.mxu0
        %v515 = vadd.f32 0.0, %v514
        %516 = vmatmul.bf16.gmra.mxu0 %v422
        %v517 = vpop.f32.mrf.mxu0
        %v518 = vadd.f32 0.0, %v517
        %v519 = vpop.f32.mrf.mxu0
        %v520 = vadd.f32 0.0, %v519
        %521 = vdwg.mxu0
        %522 = vmatpush.bf16.msra.mxu0 0
        %523 = vmatpush.bf16.msra.mxu0 0
        %524 = vmatpush.bf16.msra.mxu0 0
        %525 = vmatpush.bf16.msra.mxu0 0
        %526 = vmatpush.bf16.msra.mxu0 0
        %527 = vmatpush.bf16.msra.mxu0 0
        %528 = vmatpush.bf16.msra.mxu0 %v377
        %529 = vmatpush.bf16.msra.mxu0 %v369
        %530 = vmatmul.bf16.gmra.mxu0 %v401
        %v531 = vpop.f32.mrf.mxu0
        %v532 = vadd.f32 0.0, %v531
        %v533 = vpop.f32.mrf.mxu0
        %v534 = vadd.f32 0.0, %v533
        %535 = vmatmul.bf16.gmra.mxu0 %v404
        %v536 = vpop.f32.mrf.mxu0
        %v537 = vadd.f32 0.0, %v536
        %v538 = vpop.f32.mrf.mxu0
        %v539 = vadd.f32 0.0, %v538
        %540 = vmatmul.bf16.gmra.mxu0 %v407
        %v541 = vpop.f32.mrf.mxu0
        %v542 = vadd.f32 0.0, %v541
        %v543 = vpop.f32.mrf.mxu0
        %v544 = vadd.f32 0.0, %v543
        %545 = vmatmul.bf16.gmra.mxu0 %v410
        %v546 = vpop.f32.mrf.mxu0
        %v547 = vadd.f32 0.0, %v546
        %v548 = vpop.f32.mrf.mxu0
        %v549 = vadd.f32 0.0, %v548
        %550 = vmatmul.bf16.gmra.mxu0 %v413
        %v551 = vpop.f32.mrf.mxu0
        %v552 = vadd.f32 0.0, %v551
        %v553 = vpop.f32.mrf.mxu0
        %v554 = vadd.f32 0.0, %v553
        %555 = vmatmul.bf16.gmra.mxu0 %v416
        %v556 = vpop.f32.mrf.mxu0
        %v557 = vadd.f32 0.0, %v556
        %v558 = vpop.f32.mrf.mxu0
        %v559 = vadd.f32 0.0, %v558
        %560 = vmatmul.bf16.gmra.mxu0 %v419
        %v561 = vpop.f32.mrf.mxu0
        %v562 = vadd.f32 0.0, %v561
        %v563 = vpop.f32.mrf.mxu0
        %v564 = vadd.f32 0.0, %v563
        %565 = vmatmul.bf16.gmra.mxu0 %v422
        %v566 = vpop.f32.mrf.mxu0
        %v567 = vadd.f32 0.0, %v566
        %v568 = vpop.f32.mrf.mxu0
        %v569 = vadd.f32 0.0, %v568
        %570 = vdwg.mxu0
        %571 = vmatpush.bf16.msra.mxu0 0
        %572 = vmatpush.bf16.msra.mxu0 0
        %573 = vmatpush.bf16.msra.mxu0 0
        %574 = vmatpush.bf16.msra.mxu0 0
        %575 = vmatpush.bf16.msra.mxu0 0
        %576 = vmatpush.bf16.msra.mxu0 0
        %577 = vmatpush.bf16.msra.mxu0 %v378
        %578 = vmatpush.bf16.msra.mxu0 %v370
        %579 = vmatmul.bf16.gmra.mxu0 %v401
        %v580 = vpop.f32.mrf.mxu0
        %v581 = vadd.f32 0.0, %v580
        %v582 = vpop.f32.mrf.mxu0
        %v583 = vadd.f32 0.0, %v582
        %584 = vmatmul.bf16.gmra.mxu0 %v404
        %v585 = vpop.f32.mrf.mxu0
        %v586 = vadd.f32 0.0, %v585
        %v587 = vpop.f32.mrf.mxu0
        %v588 = vadd.f32 0.0, %v587
        %589 = vmatmul.bf16.gmra.mxu0 %v407
        %v590 = vpop.f32.mrf.mxu0
        %v591 = vadd.f32 0.0, %v590
        %v592 = vpop.f32.mrf.mxu0
        %v593 = vadd.f32 0.0, %v592
        %594 = vmatmul.bf16.gmra.mxu0 %v410
        %v595 = vpop.f32.mrf.mxu0
        %v596 = vadd.f32 0.0, %v595
        %v597 = vpop.f32.mrf.mxu0
        %v598 = vadd.f32 0.0, %v597
        %599 = vmatmul.bf16.gmra.mxu0 %v413
        %v600 = vpop.f32.mrf.mxu0
        %v601 = vadd.f32 0.0, %v600
        %v602 = vpop.f32.mrf.mxu0
        %v603 = vadd.f32 0.0, %v602
        %604 = vmatmul.bf16.gmra.mxu0 %v416
        %v605 = vpop.f32.mrf.mxu0
        %v606 = vadd.f32 0.0, %v605
        %v607 = vpop.f32.mrf.mxu0
        %v608 = vadd.f32 0.0, %v607
        %609 = vmatmul.bf16.gmra.mxu0 %v419
        %v610 = vpop.f32.mrf.mxu0
        %v611 = vadd.f32 0.0, %v610
        %v612 = vpop.f32.mrf.mxu0
        %v613 = vadd.f32 0.0, %v612
        %614 = vmatmul.bf16.gmra.mxu0 %v422
        %v615 = vpop.f32.mrf.mxu0
        %v616 = vadd.f32 0.0, %v615
        %v617 = vpop.f32.mrf.mxu0
        %v618 = vadd.f32 0.0, %v617
        %619 = vdwg.mxu0
        %620 = vmatpush.bf16.msra.mxu0 0
        %621 = vmatpush.bf16.msra.mxu0 0
        %622 = vmatpush.bf16.msra.mxu0 0
        %623 = vmatpush.bf16.msra.mxu0 0
        %624 = vmatpush.bf16.msra.mxu0 0
        %625 = vmatpush.bf16.msra.mxu0 0
        %626 = vmatpush.bf16.msra.mxu0 %v379
        %627 = vmatpush.bf16.msra.mxu0 %v371
        %628 = vmatmul.bf16.gmra.mxu0 %v401
        %v629 = vpop.f32.mrf.mxu0
        %v630 = vadd.f32 0.0, %v629
        %v631 = vpop.f32.mrf.mxu0
        %v632 = vadd.f32 0.0, %v631
        %633 = vmatmul.bf16.gmra.mxu0 %v404
        %v634 = vpop.f32.mrf.mxu0
        %v635 = vadd.f32 0.0, %v634
        %v636 = vpop.f32.mrf.mxu0
        %v637 = vadd.f32 0.0, %v636
        %638 = vmatmul.bf16.gmra.mxu0 %v407
        %v639 = vpop.f32.mrf.mxu0
        %v640 = vadd.f32 0.0, %v639
        %v641 = vpop.f32.mrf.mxu0
        %v642 = vadd.f32 0.0, %v641
        %643 = vmatmul.bf16.gmra.mxu0 %v410
        %v644 = vpop.f32.mrf.mxu0
        %v645 = vadd.f32 0.0, %v644
        %v646 = vpop.f32.mrf.mxu0
        %v647 = vadd.f32 0.0, %v646
        %648 = vmatmul.bf16.gmra.mxu0 %v413
        %v649 = vpop.f32.mrf.mxu0
        %v650 = vadd.f32 0.0, %v649
        %v651 = vpop.f32.mrf.mxu0
        %v652 = vadd.f32 0.0, %v651
        %653 = vmatmul.bf16.gmra.mxu0 %v416
        %v654 = vpop.f32.mrf.mxu0
        %v655 = vadd.f32 0.0, %v654
        %v656 = vpop.f32.mrf.mxu0
        %v657 = vadd.f32 0.0, %v656
        %658 = vmatmul.bf16.gmra.mxu0 %v419
        %v659 = vpop.f32.mrf.mxu0
        %v660 = vadd.f32 0.0, %v659
        %v661 = vpop.f32.mrf.mxu0
        %v662 = vadd.f32 0.0, %v661
        %663 = vmatmul.bf16.gmra.mxu0 %v422
        %v664 = vpop.f32.mrf.mxu0
        %v665 = vadd.f32 0.0, %v664
        %v666 = vpop.f32.mrf.mxu0
        %v667 = vadd.f32 0.0, %v666
        %668 = vdwg.mxu0
        %669 = vmatpush.bf16.msra.mxu0 0
        %670 = vmatpush.bf16.msra.mxu0 0
        %671 = vmatpush.bf16.msra.mxu0 0
        %672 = vmatpush.bf16.msra.mxu0 0
        %673 = vmatpush.bf16.msra.mxu0 0
        %674 = vmatpush.bf16.msra.mxu0 0
        %675 = vmatpush.bf16.msra.mxu0 %v380
        %676 = vmatpush.bf16.msra.mxu0 %v372
        %677 = vmatmul.bf16.gmra.mxu0 %v401
        %v678 = vpop.f32.mrf.mxu0
        %v679 = vadd.f32 0.0, %v678
        %v680 = vpop.f32.mrf.mxu0
        %v681 = vadd.f32 0.0, %v680
        %682 = vmatmul.bf16.gmra.mxu0 %v404
        %v683 = vpop.f32.mrf.mxu0
        %v684 = vadd.f32 0.0, %v683
        %v685 = vpop.f32.mrf.mxu0
        %v686 = vadd.f32 0.0, %v685
        %687 = vmatmul.bf16.gmra.mxu0 %v407
        %v688 = vpop.f32.mrf.mxu0
        %v689 = vadd.f32 0.0, %v688
        %v690 = vpop.f32.mrf.mxu0
        %v691 = vadd.f32 0.0, %v690
        %692 = vmatmul.bf16.gmra.mxu0 %v410
        %v693 = vpop.f32.mrf.mxu0
        %v694 = vadd.f32 0.0, %v693
        %v695 = vpop.f32.mrf.mxu0
        %v696 = vadd.f32 0.0, %v695
        %697 = vmatmul.bf16.gmra.mxu0 %v413
        %v698 = vpop.f32.mrf.mxu0
        %v699 = vadd.f32 0.0, %v698
        %v700 = vpop.f32.mrf.mxu0
        %v701 = vadd.f32 0.0, %v700
        %702 = vmatmul.bf16.gmra.mxu0 %v416
        %v703 = vpop.f32.mrf.mxu0
        %v704 = vadd.f32 0.0, %v703
        %v705 = vpop.f32.mrf.mxu0
        %v706 = vadd.f32 0.0, %v705
        %707 = vmatmul.bf16.gmra.mxu0 %v419
        %v708 = vpop.f32.mrf.mxu0
        %v709 = vadd.f32 0.0, %v708
        %v710 = vpop.f32.mrf.mxu0
        %v711 = vadd.f32 0.0, %v710
        %712 = vmatmul.bf16.gmra.mxu0 %v422
        %v713 = vpop.f32.mrf.mxu0
        %v714 = vadd.f32 0.0, %v713
        %v715 = vpop.f32.mrf.mxu0
        %v716 = vadd.f32 0.0, %v715
        %717 = vdwg.mxu0
        %718 = vmatpush.bf16.msra.mxu0 0
        %719 = vmatpush.bf16.msra.mxu0 0
        %720 = vmatpush.bf16.msra.mxu0 0
        %721 = vmatpush.bf16.msra.mxu0 0
        %722 = vmatpush.bf16.msra.mxu0 0
        %723 = vmatpush.bf16.msra.mxu0 0
        %724 = vmatpush.bf16.msra.mxu0 %v381
        %725 = vmatpush.bf16.msra.mxu0 %v373
        %726 = vmatmul.bf16.gmra.mxu0 %v401
        %v727 = vpop.f32.mrf.mxu0
        %v728 = vadd.f32 0.0, %v727
        %v729 = vpop.f32.mrf.mxu0
        %v730 = vadd.f32 0.0, %v729
        %731 = vmatmul.bf16.gmra.mxu0 %v404
        %v732 = vpop.f32.mrf.mxu0
        %v733 = vadd.f32 0.0, %v732
        %v734 = vpop.f32.mrf.mxu0
        %v735 = vadd.f32 0.0, %v734
        %736 = vmatmul.bf16.gmra.mxu0 %v407
        %v737 = vpop.f32.mrf.mxu0
        %v738 = vadd.f32 0.0, %v737
        %v739 = vpop.f32.mrf.mxu0
        %v740 = vadd.f32 0.0, %v739
        %741 = vmatmul.bf16.gmra.mxu0 %v410
        %v742 = vpop.f32.mrf.mxu0
        %v743 = vadd.f32 0.0, %v742
        %v744 = vpop.f32.mrf.mxu0
        %v745 = vadd.f32 0.0, %v744
        %746 = vmatmul.bf16.gmra.mxu0 %v413
        %v747 = vpop.f32.mrf.mxu0
        %v748 = vadd.f32 0.0, %v747
        %v749 = vpop.f32.mrf.mxu0
        %v750 = vadd.f32 0.0, %v749
        %751 = vmatmul.bf16.gmra.mxu0 %v416
        %v752 = vpop.f32.mrf.mxu0
        %v753 = vadd.f32 0.0, %v752
        %v754 = vpop.f32.mrf.mxu0
        %v755 = vadd.f32 0.0, %v754
        %756 = vmatmul.bf16.gmra.mxu0 %v419
        %v757 = vpop.f32.mrf.mxu0
        %v758 = vadd.f32 0.0, %v757
        %v759 = vpop.f32.mrf.mxu0
        %v760 = vadd.f32 0.0, %v759
        %761 = vmatmul.bf16.gmra.mxu0 %v422
        %v762 = vpop.f32.mrf.mxu0
        %v763 = vadd.f32 0.0, %v762
        %v764 = vpop.f32.mrf.mxu0
        %v765 = vadd.f32 0.0, %v764
        %766 = vdwg.mxu0
        %767 = vmatpush.bf16.msra.mxu0 0
        %768 = vmatpush.bf16.msra.mxu0 0
        %769 = vmatpush.bf16.msra.mxu0 0
        %770 = vmatpush.bf16.msra.mxu0 0
        %771 = vmatpush.bf16.msra.mxu0 0
        %772 = vmatpush.bf16.msra.mxu0 0
        %773 = vmatpush.bf16.msra.mxu0 %v382
        %774 = vmatpush.bf16.msra.mxu0 %v374
        %775 = vmatmul.bf16.gmra.mxu0 %v401
        %v776 = vpop.f32.mrf.mxu0
        %v777 = vadd.f32 0.0, %v776
        %v778 = vpop.f32.mrf.mxu0
        %v779 = vadd.f32 0.0, %v778
        %780 = vmatmul.bf16.gmra.mxu0 %v404
        %v781 = vpop.f32.mrf.mxu0
        %v782 = vadd.f32 0.0, %v781
        %v783 = vpop.f32.mrf.mxu0
        %v784 = vadd.f32 0.0, %v783
        %785 = vmatmul.bf16.gmra.mxu0 %v407
        %v786 = vpop.f32.mrf.mxu0
        %v787 = vadd.f32 0.0, %v786
        %v788 = vpop.f32.mrf.mxu0
        %v789 = vadd.f32 0.0, %v788
        %790 = vmatmul.bf16.gmra.mxu0 %v410
        %v791 = vpop.f32.mrf.mxu0
        %v792 = vadd.f32 0.0, %v791
        %v793 = vpop.f32.mrf.mxu0
        %v794 = vadd.f32 0.0, %v793
        %795 = vmatmul.bf16.gmra.mxu0 %v413
        %v796 = vpop.f32.mrf.mxu0
        %v797 = vadd.f32 0.0, %v796
        %v798 = vpop.f32.mrf.mxu0
        %v799 = vadd.f32 0.0, %v798
        %800 = vmatmul.bf16.gmra.mxu0 %v416
        %v801 = vpop.f32.mrf.mxu0
        %v802 = vadd.f32 0.0, %v801
        %v803 = vpop.f32.mrf.mxu0
        %v804 = vadd.f32 0.0, %v803
        %805 = vmatmul.bf16.gmra.mxu0 %v419
        %v806 = vpop.f32.mrf.mxu0
        %v807 = vadd.f32 0.0, %v806
        %v808 = vpop.f32.mrf.mxu0
        %v809 = vadd.f32 0.0, %v808
        %810 = vmatmul.bf16.gmra.mxu0 %v422
        %v811 = vpop.f32.mrf.mxu0
        %v812 = vadd.f32 0.0, %v811
        %v813 = vpop.f32.mrf.mxu0
        %v814 = vadd.f32 0.0, %v813
        %815 = vdwg.mxu0
        %v816 = vmax.f32 %v434, %v483
        %v817 = vmax.f32 %v816, %v532
        %v818 = vmax.f32 %v817, %v581
        %v819 = vmax.f32 %v818, %v630
        %v820 = vmax.f32 %v819, %v679
        %v821 = vmax.f32 %v820, %v728
        %v822 = vmax.f32 %v821, %v777
        %823 = vmax.xlane.f32.xlu0 %v822
        %v824 = vpop.xlane.xlu0 %823
        %v825 = vmax.f32 %v436, %v485
        %v826 = vmax.f32 %v825, %v534
        %v827 = vmax.f32 %v826, %v583
        %v828 = vmax.f32 %v827, %v632
        %v829 = vmax.f32 %v828, %v681
        %v830 = vmax.f32 %v829, %v730
        %v831 = vmax.f32 %v830, %v779
        %832 = vmax.xlane.f32.xlu0 %v831
        %v833 = vpop.xlane.xlu0 %832
        %v834 = vmax.f32 %v439, %v488
        %v835 = vmax.f32 %v834, %v537
        %v836 = vmax.f32 %v835, %v586
        %v837 = vmax.f32 %v836, %v635
        %v838 = vmax.f32 %v837, %v684
        %v839 = vmax.f32 %v838, %v733
        %v840 = vmax.f32 %v839, %v782
        %841 = vmax.xlane.f32.xlu0 %v840
        %v842 = vpop.xlane.xlu0 %841
        %v843 = vmax.f32 %v441, %v490
        %v844 = vmax.f32 %v843, %v539
        %v845 = vmax.f32 %v844, %v588
        %v846 = vmax.f32 %v845, %v637
        %v847 = vmax.f32 %v846, %v686
        %v848 = vmax.f32 %v847, %v735
        %v849 = vmax.f32 %v848, %v784
        %850 = vmax.xlane.f32.xlu0 %v849
        %v851 = vpop.xlane.xlu0 %850
        %v852 = vmax.f32 %v444, %v493
        %v853 = vmax.f32 %v852, %v542
        %v854 = vmax.f32 %v853, %v591
        %v855 = vmax.f32 %v854, %v640
        %v856 = vmax.f32 %v855, %v689
        %v857 = vmax.f32 %v856, %v738
        %v858 = vmax.f32 %v857, %v787
        %859 = vmax.xlane.f32.xlu0 %v858
        %v860 = vpop.xlane.xlu0 %859
        %v861 = vmax.f32 %v446, %v495
        %v862 = vmax.f32 %v861, %v544
        %v863 = vmax.f32 %v862, %v593
        %v864 = vmax.f32 %v863, %v642
        %v865 = vmax.f32 %v864, %v691
        %v866 = vmax.f32 %v865, %v740
        %v867 = vmax.f32 %v866, %v789
        %868 = vmax.xlane.f32.xlu0 %v867
        %v869 = vpop.xlane.xlu0 %868
        %v870 = vmax.f32 %v449, %v498
        %v871 = vmax.f32 %v870, %v547
        %v872 = vmax.f32 %v871, %v596
        %v873 = vmax.f32 %v872, %v645
        %v874 = vmax.f32 %v873, %v694
        %v875 = vmax.f32 %v874, %v743
        %v876 = vmax.f32 %v875, %v792
        %877 = vmax.xlane.f32.xlu0 %v876
        %v878 = vpop.xlane.xlu0 %877
        %v879 = vmax.f32 %v451, %v500
        %v880 = vmax.f32 %v879, %v549
        %v881 = vmax.f32 %v880, %v598
        %v882 = vmax.f32 %v881, %v647
        %v883 = vmax.f32 %v882, %v696
        %v884 = vmax.f32 %v883, %v745
        %v885 = vmax.f32 %v884, %v794
        %886 = vmax.xlane.f32.xlu0 %v885
        %v887 = vpop.xlane.xlu0 %886
        %v888 = vmax.f32 %v454, %v503
        %v889 = vmax.f32 %v888, %v552
        %v890 = vmax.f32 %v889, %v601
        %v891 = vmax.f32 %v890, %v650
        %v892 = vmax.f32 %v891, %v699
        %v893 = vmax.f32 %v892, %v748
        %v894 = vmax.f32 %v893, %v797
        %895 = vmax.xlane.f32.xlu0 %v894
        %v896 = vpop.xlane.xlu0 %895
        %v897 = vmax.f32 %v456, %v505
        %v898 = vmax.f32 %v897, %v554
        %v899 = vmax.f32 %v898, %v603
        %v900 = vmax.f32 %v899, %v652
        %v901 = vmax.f32 %v900, %v701
        %v902 = vmax.f32 %v901, %v750
        %v903 = vmax.f32 %v902, %v799
        %904 = vmax.xlane.f32.xlu0 %v903
        %v905 = vpop.xlane.xlu0 %904
        %v906 = vmax.f32 %v459, %v508
        %v907 = vmax.f32 %v906, %v557
        %v908 = vmax.f32 %v907, %v606
        %v909 = vmax.f32 %v908, %v655
        %v910 = vmax.f32 %v909, %v704
        %v911 = vmax.f32 %v910, %v753
        %v912 = vmax.f32 %v911, %v802
        %913 = vmax.xlane.f32.xlu0 %v912
        %v914 = vpop.xlane.xlu0 %913
        %v915 = vmax.f32 %v461, %v510
        %v916 = vmax.f32 %v915, %v559
        %v917 = vmax.f32 %v916, %v608
        %v918 = vmax.f32 %v917, %v657
        %v919 = vmax.f32 %v918, %v706
        %v920 = vmax.f32 %v919, %v755
        %v921 = vmax.f32 %v920, %v804
        %922 = vmax.xlane.f32.xlu0 %v921
        %v923 = vpop.xlane.xlu0 %922
        %v924 = vmax.f32 %v464, %v513
        %v925 = vmax.f32 %v924, %v562
        %v926 = vmax.f32 %v925, %v611
        %v927 = vmax.f32 %v926, %v660
        %v928 = vmax.f32 %v927, %v709
        %v929 = vmax.f32 %v928, %v758
        %v930 = vmax.f32 %v929, %v807
        %931 = vmax.xlane.f32.xlu0 %v930
        %v932 = vpop.xlane.xlu0 %931
        %v933 = vmax.f32 %v466, %v515
        %v934 = vmax.f32 %v933, %v564
        %v935 = vmax.f32 %v934, %v613
        %v936 = vmax.f32 %v935, %v662
        %v937 = vmax.f32 %v936, %v711
        %v938 = vmax.f32 %v937, %v760
        %v939 = vmax.f32 %v938, %v809
        %940 = vmax.xlane.f32.xlu0 %v939
        %v941 = vpop.xlane.xlu0 %940
        %v942 = vmax.f32 %v469, %v518
        %v943 = vmax.f32 %v942, %v567
        %v944 = vmax.f32 %v943, %v616
        %v945 = vmax.f32 %v944, %v665
        %v946 = vmax.f32 %v945, %v714
        %v947 = vmax.f32 %v946, %v763
        %v948 = vmax.f32 %v947, %v812
        %949 = vmax.xlane.f32.xlu0 %v948
        %v950 = vpop.xlane.xlu0 %949
        %v951 = vmax.f32 %v471, %v520
        %v952 = vmax.f32 %v951, %v569
        %v953 = vmax.f32 %v952, %v618
        %v954 = vmax.f32 %v953, %v667
        %v955 = vmax.f32 %v954, %v716
        %v956 = vmax.f32 %v955, %v765
        %v957 = vmax.f32 %v956, %v814
        %958 = vmax.xlane.f32.xlu0 %v957
        %v959 = vpop.xlane.xlu0 %958
        %v960 = vsub.f32 %v434, %v824
        %v961 = vsub.f32 %v483, %v824
        %v962 = vsub.f32 %v532, %v824
        %v963 = vsub.f32 %v581, %v824
        %v964 = vsub.f32 %v630, %v824
        %v965 = vsub.f32 %v679, %v824
        %v966 = vsub.f32 %v728, %v824
        %v967 = vsub.f32 %v777, %v824
        %v968 = vsub.f32 %v436, %v833
        %v969 = vsub.f32 %v485, %v833
        %v970 = vsub.f32 %v534, %v833
        %v971 = vsub.f32 %v583, %v833
        %v972 = vsub.f32 %v632, %v833
        %v973 = vsub.f32 %v681, %v833
        %v974 = vsub.f32 %v730, %v833
        %v975 = vsub.f32 %v779, %v833
        %v976 = vsub.f32 %v439, %v842
        %v977 = vsub.f32 %v488, %v842
        %v978 = vsub.f32 %v537, %v842
        %v979 = vsub.f32 %v586, %v842
        %v980 = vsub.f32 %v635, %v842
        %v981 = vsub.f32 %v684, %v842
        %v982 = vsub.f32 %v733, %v842
        %v983 = vsub.f32 %v782, %v842
        %v984 = vsub.f32 %v441, %v851
        %v985 = vsub.f32 %v490, %v851
        %v986 = vsub.f32 %v539, %v851
        %v987 = vsub.f32 %v588, %v851
        %v988 = vsub.f32 %v637, %v851
        %v989 = vsub.f32 %v686, %v851
        %v990 = vsub.f32 %v735, %v851
        %v991 = vsub.f32 %v784, %v851
        %v992 = vsub.f32 %v444, %v860
        %v993 = vsub.f32 %v493, %v860
        %v994 = vsub.f32 %v542, %v860
        %v995 = vsub.f32 %v591, %v860
        %v996 = vsub.f32 %v640, %v860
        %v997 = vsub.f32 %v689, %v860
        %v998 = vsub.f32 %v738, %v860
        %v999 = vsub.f32 %v787, %v860
        %v1000 = vsub.f32 %v446, %v869
        %v1001 = vsub.f32 %v495, %v869
        %v1002 = vsub.f32 %v544, %v869
        %v1003 = vsub.f32 %v593, %v869
        %v1004 = vsub.f32 %v642, %v869
        %v1005 = vsub.f32 %v691, %v869
        %v1006 = vsub.f32 %v740, %v869
        %v1007 = vsub.f32 %v789, %v869
        %v1008 = vsub.f32 %v449, %v878
        %v1009 = vsub.f32 %v498, %v878
        %v1010 = vsub.f32 %v547, %v878
        %v1011 = vsub.f32 %v596, %v878
        %v1012 = vsub.f32 %v645, %v878
        %v1013 = vsub.f32 %v694, %v878
        %v1014 = vsub.f32 %v743, %v878
        %v1015 = vsub.f32 %v792, %v878
        %v1016 = vsub.f32 %v451, %v887
        %v1017 = vsub.f32 %v500, %v887
        %v1018 = vsub.f32 %v549, %v887
        %v1019 = vsub.f32 %v598, %v887
        %v1020 = vsub.f32 %v647, %v887
        %v1021 = vsub.f32 %v696, %v887
        %v1022 = vsub.f32 %v745, %v887
        %v1023 = vsub.f32 %v794, %v887
        %v1024 = vsub.f32 %v454, %v896
        %v1025 = vsub.f32 %v503, %v896
        %v1026 = vsub.f32 %v552, %v896
        %v1027 = vsub.f32 %v601, %v896
        %v1028 = vsub.f32 %v650, %v896
        %v1029 = vsub.f32 %v699, %v896
        %v1030 = vsub.f32 %v748, %v896
        %v1031 = vsub.f32 %v797, %v896
        %v1032 = vsub.f32 %v456, %v905
        %v1033 = vsub.f32 %v505, %v905
        %v1034 = vsub.f32 %v554, %v905
        %v1035 = vsub.f32 %v603, %v905
        %v1036 = vsub.f32 %v652, %v905
        %v1037 = vsub.f32 %v701, %v905
        %v1038 = vsub.f32 %v750, %v905
        %v1039 = vsub.f32 %v799, %v905
        %v1040 = vsub.f32 %v459, %v914
        %v1041 = vsub.f32 %v508, %v914
        %v1042 = vsub.f32 %v557, %v914
        %v1043 = vsub.f32 %v606, %v914
        %v1044 = vsub.f32 %v655, %v914
        %v1045 = vsub.f32 %v704, %v914
        %v1046 = vsub.f32 %v753, %v914
        %v1047 = vsub.f32 %v802, %v914
        %v1048 = vsub.f32 %v461, %v923
        %v1049 = vsub.f32 %v510, %v923
        %v1050 = vsub.f32 %v559, %v923
        %v1051 = vsub.f32 %v608, %v923
        %v1052 = vsub.f32 %v657, %v923
        %v1053 = vsub.f32 %v706, %v923
        %v1054 = vsub.f32 %v755, %v923
        %v1055 = vsub.f32 %v804, %v923
        %v1056 = vsub.f32 %v464, %v932
        %v1057 = vsub.f32 %v513, %v932
        %v1058 = vsub.f32 %v562, %v932
        %v1059 = vsub.f32 %v611, %v932
        %v1060 = vsub.f32 %v660, %v932
        %v1061 = vsub.f32 %v709, %v932
        %v1062 = vsub.f32 %v758, %v932
        %v1063 = vsub.f32 %v807, %v932
        %v1064 = vsub.f32 %v466, %v941
        %v1065 = vsub.f32 %v515, %v941
        %v1066 = vsub.f32 %v564, %v941
        %v1067 = vsub.f32 %v613, %v941
        %v1068 = vsub.f32 %v662, %v941
        %v1069 = vsub.f32 %v711, %v941
        %v1070 = vsub.f32 %v760, %v941
        %v1071 = vsub.f32 %v809, %v941
        %v1072 = vsub.f32 %v469, %v950
        %v1073 = vsub.f32 %v518, %v950
        %v1074 = vsub.f32 %v567, %v950
        %v1075 = vsub.f32 %v616, %v950
        %v1076 = vsub.f32 %v665, %v950
        %v1077 = vsub.f32 %v714, %v950
        %v1078 = vsub.f32 %v763, %v950
        %v1079 = vsub.f32 %v812, %v950
        %v1080 = vsub.f32 %v471, %v959
        %v1081 = vsub.f32 %v520, %v959
        %v1082 = vsub.f32 %v569, %v959
        %v1083 = vsub.f32 %v618, %v959
        %v1084 = vsub.f32 %v667, %v959
        %v1085 = vsub.f32 %v716, %v959
        %v1086 = vsub.f32 %v765, %v959
        %v1087 = vsub.f32 %v814, %v959
        %v1088 = vmul.f32 %v960, 1.442695
        %v1089 = vpow.pop %v1088
        %v1090 = vmul.f32 %v961, 1.442695
        %v1091 = vpow.pop %v1090
        %v1092 = vmul.f32 %v962, 1.442695
        %v1093 = vpow.pop %v1092
        %v1094 = vmul.f32 %v963, 1.442695
        %v1095 = vpow.pop %v1094
        %v1096 = vmul.f32 %v964, 1.442695
        %v1097 = vpow.pop %v1096
        %v1098 = vmul.f32 %v965, 1.442695
        %v1099 = vpow.pop %v1098
        %v1100 = vmul.f32 %v966, 1.442695
        %v1101 = vpow.pop %v1100
        %v1102 = vmul.f32 %v967, 1.442695
        %v1103 = vpow.pop %v1102
        %v1104 = vmul.f32 %v968, 1.442695
        %v1105 = vpow.pop %v1104
        %v1106 = vmul.f32 %v969, 1.442695
        %v1107 = vpow.pop %v1106
        %v1108 = vmul.f32 %v970, 1.442695
        %v1109 = vpow.pop %v1108
        %v1110 = vmul.f32 %v971, 1.442695
        %v1111 = vpow.pop %v1110
        %v1112 = vmul.f32 %v972, 1.442695
        %v1113 = vpow.pop %v1112
        %v1114 = vmul.f32 %v973, 1.442695
        %v1115 = vpow.pop %v1114
        %v1116 = vmul.f32 %v974, 1.442695
        %v1117 = vpow.pop %v1116
        %v1118 = vmul.f32 %v975, 1.442695
        %v1119 = vpow.pop %v1118
        %v1120 = vmul.f32 %v976, 1.442695
        %v1121 = vpow.pop %v1120
        %v1122 = vmul.f32 %v977, 1.442695
        %v1123 = vpow.pop %v1122
        %v1124 = vmul.f32 %v978, 1.442695
        %v1125 = vpow.pop %v1124
        %v1126 = vmul.f32 %v979, 1.442695
        %v1127 = vpow.pop %v1126
        %v1128 = vmul.f32 %v980, 1.442695
        %v1129 = vpow.pop %v1128
        %v1130 = vmul.f32 %v981, 1.442695
        %v1131 = vpow.pop %v1130
        %v1132 = vmul.f32 %v982, 1.442695
        %v1133 = vpow.pop %v1132
        %v1134 = vmul.f32 %v983, 1.442695
        %v1135 = vpow.pop %v1134
        %v1136 = vmul.f32 %v984, 1.442695
        %v1137 = vpow.pop %v1136
        %v1138 = vmul.f32 %v985, 1.442695
        %v1139 = vpow.pop %v1138
        %v1140 = vmul.f32 %v986, 1.442695
        %v1141 = vpow.pop %v1140
        %v1142 = vmul.f32 %v987, 1.442695
        %v1143 = vpow.pop %v1142
        %v1144 = vmul.f32 %v988, 1.442695
        %v1145 = vpow.pop %v1144
        %v1146 = vmul.f32 %v989, 1.442695
        %v1147 = vpow.pop %v1146
        %v1148 = vmul.f32 %v990, 1.442695
        %v1149 = vpow.pop %v1148
        %v1150 = vmul.f32 %v991, 1.442695
        %v1151 = vpow.pop %v1150
        %v1152 = vmul.f32 %v992, 1.442695
        %v1153 = vpow.pop %v1152
        %v1154 = vmul.f32 %v993, 1.442695
        %v1155 = vpow.pop %v1154
        %v1156 = vmul.f32 %v994, 1.442695
        %v1157 = vpow.pop %v1156
        %v1158 = vmul.f32 %v995, 1.442695
        %v1159 = vpow.pop %v1158
        %v1160 = vmul.f32 %v996, 1.442695
        %v1161 = vpow.pop %v1160
        %v1162 = vmul.f32 %v997, 1.442695
        %v1163 = vpow.pop %v1162
        %v1164 = vmul.f32 %v998, 1.442695
        %v1165 = vpow.pop %v1164
        %v1166 = vmul.f32 %v999, 1.442695
        %v1167 = vpow.pop %v1166
        %v1168 = vmul.f32 %v1000, 1.442695
        %v1169 = vpow.pop %v1168
        %v1170 = vmul.f32 %v1001, 1.442695
        %v1171 = vpow.pop %v1170
        %v1172 = vmul.f32 %v1002, 1.442695
        %v1173 = vpow.pop %v1172
        %v1174 = vmul.f32 %v1003, 1.442695
        %v1175 = vpow.pop %v1174
        %v1176 = vmul.f32 %v1004, 1.442695
        %v1177 = vpow.pop %v1176
        %v1178 = vmul.f32 %v1005, 1.442695
        %v1179 = vpow.pop %v1178
        %v1180 = vmul.f32 %v1006, 1.442695
        %v1181 = vpow.pop %v1180
        %v1182 = vmul.f32 %v1007, 1.442695
        %v1183 = vpow.pop %v1182
        %v1184 = vmul.f32 %v1008, 1.442695
        %v1185 = vpow.pop %v1184
        %v1186 = vmul.f32 %v1009, 1.442695
        %v1187 = vpow.pop %v1186
        %v1188 = vmul.f32 %v1010, 1.442695
        %v1189 = vpow.pop %v1188
        %v1190 = vmul.f32 %v1011, 1.442695
        %v1191 = vpow.pop %v1190
        %v1192 = vmul.f32 %v1012, 1.442695
        %v1193 = vpow.pop %v1192
        %v1194 = vmul.f32 %v1013, 1.442695
        %v1195 = vpow.pop %v1194
        %v1196 = vmul.f32 %v1014, 1.442695
        %v1197 = vpow.pop %v1196
        %v1198 = vmul.f32 %v1015, 1.442695
        %v1199 = vpow.pop %v1198
        %v1200 = vmul.f32 %v1016, 1.442695
        %v1201 = vpow.pop %v1200
        %v1202 = vmul.f32 %v1017, 1.442695
        %v1203 = vpow.pop %v1202
        %v1204 = vmul.f32 %v1018, 1.442695
        %v1205 = vpow.pop %v1204
        %v1206 = vmul.f32 %v1019, 1.442695
        %v1207 = vpow.pop %v1206
        %v1208 = vmul.f32 %v1020, 1.442695
        %v1209 = vpow.pop %v1208
        %v1210 = vmul.f32 %v1021, 1.442695
        %v1211 = vpow.pop %v1210
        %v1212 = vmul.f32 %v1022, 1.442695
        %v1213 = vpow.pop %v1212
        %v1214 = vmul.f32 %v1023, 1.442695
        %v1215 = vpow.pop %v1214
        %v1216 = vmul.f32 %v1024, 1.442695
        %v1217 = vpow.pop %v1216
        %v1218 = vmul.f32 %v1025, 1.442695
        %v1219 = vpow.pop %v1218
        %v1220 = vmul.f32 %v1026, 1.442695
        %v1221 = vpow.pop %v1220
        %v1222 = vmul.f32 %v1027, 1.442695
        %v1223 = vpow.pop %v1222
        %v1224 = vmul.f32 %v1028, 1.442695
        %v1225 = vpow.pop %v1224
        %v1226 = vmul.f32 %v1029, 1.442695
        %v1227 = vpow.pop %v1226
        %v1228 = vmul.f32 %v1030, 1.442695
        %v1229 = vpow.pop %v1228
        %v1230 = vmul.f32 %v1031, 1.442695
        %v1231 = vpow.pop %v1230
        %v1232 = vmul.f32 %v1032, 1.442695
        %v1233 = vpow.pop %v1232
        %v1234 = vmul.f32 %v1033, 1.442695
        %v1235 = vpow.pop %v1234
        %v1236 = vmul.f32 %v1034, 1.442695
        %v1237 = vpow.pop %v1236
        %v1238 = vmul.f32 %v1035, 1.442695
        %v1239 = vpow.pop %v1238
        %v1240 = vmul.f32 %v1036, 1.442695
        %v1241 = vpow.pop %v1240
        %v1242 = vmul.f32 %v1037, 1.442695
        %v1243 = vpow.pop %v1242
        %v1244 = vmul.f32 %v1038, 1.442695
        %v1245 = vpow.pop %v1244
        %v1246 = vmul.f32 %v1039, 1.442695
        %v1247 = vpow.pop %v1246
        %v1248 = vmul.f32 %v1040, 1.442695
        %v1249 = vpow.pop %v1248
        %v1250 = vmul.f32 %v1041, 1.442695
        %v1251 = vpow.pop %v1250
        %v1252 = vmul.f32 %v1042, 1.442695
        %v1253 = vpow.pop %v1252
        %v1254 = vmul.f32 %v1043, 1.442695
        %v1255 = vpow.pop %v1254
        %v1256 = vmul.f32 %v1044, 1.442695
        %v1257 = vpow.pop %v1256
        %v1258 = vmul.f32 %v1045, 1.442695
        %v1259 = vpow.pop %v1258
        %v1260 = vmul.f32 %v1046, 1.442695
        %v1261 = vpow.pop %v1260
        %v1262 = vmul.f32 %v1047, 1.442695
        %v1263 = vpow.pop %v1262
        %v1264 = vmul.f32 %v1048, 1.442695
        %v1265 = vpow.pop %v1264
        %v1266 = vmul.f32 %v1049, 1.442695
        %v1267 = vpow.pop %v1266
        %v1268 = vmul.f32 %v1050, 1.442695
        %v1269 = vpow.pop %v1268
        %v1270 = vmul.f32 %v1051, 1.442695
        %v1271 = vpow.pop %v1270
        %v1272 = vmul.f32 %v1052, 1.442695
        %v1273 = vpow.pop %v1272
        %v1274 = vmul.f32 %v1053, 1.442695
        %v1275 = vpow.pop %v1274
        %v1276 = vmul.f32 %v1054, 1.442695
        %v1277 = vpow.pop %v1276
        %v1278 = vmul.f32 %v1055, 1.442695
        %v1279 = vpow.pop %v1278
        %v1280 = vmul.f32 %v1056, 1.442695
        %v1281 = vpow.pop %v1280
        %v1282 = vmul.f32 %v1057, 1.442695
        %v1283 = vpow.pop %v1282
        %v1284 = vmul.f32 %v1058, 1.442695
        %v1285 = vpow.pop %v1284
        %v1286 = vmul.f32 %v1059, 1.442695
        %v1287 = vpow.pop %v1286
        %v1288 = vmul.f32 %v1060, 1.442695
        %v1289 = vpow.pop %v1288
        %v1290 = vmul.f32 %v1061, 1.442695
        %v1291 = vpow.pop %v1290
        %v1292 = vmul.f32 %v1062, 1.442695
        %v1293 = vpow.pop %v1292
        %v1294 = vmul.f32 %v1063, 1.442695
        %v1295 = vpow.pop %v1294
        %v1296 = vmul.f32 %v1064, 1.442695
        %v1297 = vpow.pop %v1296
        %v1298 = vmul.f32 %v1065, 1.442695
        %v1299 = vpow.pop %v1298
        %v1300 = vmul.f32 %v1066, 1.442695
        %v1301 = vpow.pop %v1300
        %v1302 = vmul.f32 %v1067, 1.442695
        %v1303 = vpow.pop %v1302
        %v1304 = vmul.f32 %v1068, 1.442695
        %v1305 = vpow.pop %v1304
        %v1306 = vmul.f32 %v1069, 1.442695
        %v1307 = vpow.pop %v1306
        %v1308 = vmul.f32 %v1070, 1.442695
        %v1309 = vpow.pop %v1308
        %v1310 = vmul.f32 %v1071, 1.442695
        %v1311 = vpow.pop %v1310
        %v1312 = vmul.f32 %v1072, 1.442695
        %v1313 = vpow.pop %v1312
        %v1314 = vmul.f32 %v1073, 1.442695
        %v1315 = vpow.pop %v1314
        %v1316 = vmul.f32 %v1074, 1.442695
        %v1317 = vpow.pop %v1316
        %v1318 = vmul.f32 %v1075, 1.442695
        %v1319 = vpow.pop %v1318
        %v1320 = vmul.f32 %v1076, 1.442695
        %v1321 = vpow.pop %v1320
        %v1322 = vmul.f32 %v1077, 1.442695
        %v1323 = vpow.pop %v1322
        %v1324 = vmul.f32 %v1078, 1.442695
        %v1325 = vpow.pop %v1324
        %v1326 = vmul.f32 %v1079, 1.442695
        %v1327 = vpow.pop %v1326
        %v1328 = vmul.f32 %v1080, 1.442695
        %v1329 = vpow.pop %v1328
        %v1330 = vmul.f32 %v1081, 1.442695
        %v1331 = vpow.pop %v1330
        %v1332 = vmul.f32 %v1082, 1.442695
        %v1333 = vpow.pop %v1332
        %v1334 = vmul.f32 %v1083, 1.442695
        %v1335 = vpow.pop %v1334
        %v1336 = vmul.f32 %v1084, 1.442695
        %v1337 = vpow.pop %v1336
        %v1338 = vmul.f32 %v1085, 1.442695
        %v1339 = vpow.pop %v1338
        %v1340 = vmul.f32 %v1086, 1.442695
        %v1341 = vpow.pop %v1340
        %v1342 = vmul.f32 %v1087, 1.442695
        %v1343 = vpow.pop %v1342
        %v1344 = vlaneseq
        %v1345 = vand.u32 %v1344, 127
        %v1346 = vadd.s32 %v1345, 128
        %v1347 = vadd.s32 %v1345, 256
        %v1348 = vadd.s32 %v1345, 384
        %v1349 = vadd.s32 %v1345, 512
        %v1350 = vadd.s32 %v1345, 640
        %v1351 = vadd.s32 %v1345, 768
        %v1352 = vadd.s32 %v1345, 896
        %vm1353 = vcmp.lt.s32.totalorder %v1345, 800
        %vm1354 = vcmp.lt.s32.totalorder %v1346, 800
        %vm1355 = vcmp.lt.s32.totalorder %v1347, 800
        %vm1356 = vcmp.lt.s32.totalorder %v1348, 800
        %vm1357 = vcmp.lt.s32.totalorder %v1349, 800
        %vm1358 = vcmp.lt.s32.totalorder %v1350, 800
        %vm1359 = vcmp.lt.s32.totalorder %v1351, 800
        %vm1360 = vcmp.lt.s32.totalorder %v1352, 800
        %v1361 = vsel %vm1353, %v1089, 0.0
        %v1362 = vsel %vm1354, %v1091, 0.0
        %v1363 = vsel %vm1355, %v1093, 0.0
        %v1364 = vsel %vm1356, %v1095, 0.0
        %v1365 = vsel %vm1357, %v1097, 0.0
        %v1366 = vsel %vm1358, %v1099, 0.0
        %v1367 = vsel %vm1359, %v1101, 0.0
        %v1368 = vsel %vm1360, %v1103, 0.0
        %v1369 = vsel %vm1353, %v1105, 0.0
        %v1370 = vsel %vm1354, %v1107, 0.0
        %v1371 = vsel %vm1355, %v1109, 0.0
        %v1372 = vsel %vm1356, %v1111, 0.0
        %v1373 = vsel %vm1357, %v1113, 0.0
        %v1374 = vsel %vm1358, %v1115, 0.0
        %v1375 = vsel %vm1359, %v1117, 0.0
        %v1376 = vsel %vm1360, %v1119, 0.0
        %v1377 = vsel %vm1353, %v1121, 0.0
        %v1378 = vsel %vm1354, %v1123, 0.0
        %v1379 = vsel %vm1355, %v1125, 0.0
        %v1380 = vsel %vm1356, %v1127, 0.0
        %v1381 = vsel %vm1357, %v1129, 0.0
        %v1382 = vsel %vm1358, %v1131, 0.0
        %v1383 = vsel %vm1359, %v1133, 0.0
        %v1384 = vsel %vm1360, %v1135, 0.0
        %v1385 = vsel %vm1353, %v1137, 0.0
        %v1386 = vsel %vm1354, %v1139, 0.0
        %v1387 = vsel %vm1355, %v1141, 0.0
        %v1388 = vsel %vm1356, %v1143, 0.0
        %v1389 = vsel %vm1357, %v1145, 0.0
        %v1390 = vsel %vm1358, %v1147, 0.0
        %v1391 = vsel %vm1359, %v1149, 0.0
        %v1392 = vsel %vm1360, %v1151, 0.0
        %v1393 = vsel %vm1353, %v1153, 0.0
        %v1394 = vsel %vm1354, %v1155, 0.0
        %v1395 = vsel %vm1355, %v1157, 0.0
        %v1396 = vsel %vm1356, %v1159, 0.0
        %v1397 = vsel %vm1357, %v1161, 0.0
        %v1398 = vsel %vm1358, %v1163, 0.0
        %v1399 = vsel %vm1359, %v1165, 0.0
        %v1400 = vsel %vm1360, %v1167, 0.0
        %v1401 = vsel %vm1353, %v1169, 0.0
        %v1402 = vsel %vm1354, %v1171, 0.0
        %v1403 = vsel %vm1355, %v1173, 0.0
        %v1404 = vsel %vm1356, %v1175, 0.0
        %v1405 = vsel %vm1357, %v1177, 0.0
        %v1406 = vsel %vm1358, %v1179, 0.0
        %v1407 = vsel %vm1359, %v1181, 0.0
        %v1408 = vsel %vm1360, %v1183, 0.0
        %v1409 = vsel %vm1353, %v1185, 0.0
        %v1410 = vsel %vm1354, %v1187, 0.0
        %v1411 = vsel %vm1355, %v1189, 0.0
        %v1412 = vsel %vm1356, %v1191, 0.0
        %v1413 = vsel %vm1357, %v1193, 0.0
        %v1414 = vsel %vm1358, %v1195, 0.0
        %v1415 = vsel %vm1359, %v1197, 0.0
        %v1416 = vsel %vm1360, %v1199, 0.0
        %v1417 = vsel %vm1353, %v1201, 0.0
        %v1418 = vsel %vm1354, %v1203, 0.0
        %v1419 = vsel %vm1355, %v1205, 0.0
        %v1420 = vsel %vm1356, %v1207, 0.0
        %v1421 = vsel %vm1357, %v1209, 0.0
        %v1422 = vsel %vm1358, %v1211, 0.0
        %v1423 = vsel %vm1359, %v1213, 0.0
        %v1424 = vsel %vm1360, %v1215, 0.0
        %v1425 = vsel %vm1353, %v1217, 0.0
        %v1426 = vsel %vm1354, %v1219, 0.0
        %v1427 = vsel %vm1355, %v1221, 0.0
        %v1428 = vsel %vm1356, %v1223, 0.0
        %v1429 = vsel %vm1357, %v1225, 0.0
        %v1430 = vsel %vm1358, %v1227, 0.0
        %v1431 = vsel %vm1359, %v1229, 0.0
        %v1432 = vsel %vm1360, %v1231, 0.0
        %v1433 = vsel %vm1353, %v1233, 0.0
        %v1434 = vsel %vm1354, %v1235, 0.0
        %v1435 = vsel %vm1355, %v1237, 0.0
        %v1436 = vsel %vm1356, %v1239, 0.0
        %v1437 = vsel %vm1357, %v1241, 0.0
        %v1438 = vsel %vm1358, %v1243, 0.0
        %v1439 = vsel %vm1359, %v1245, 0.0
        %v1440 = vsel %vm1360, %v1247, 0.0
        %v1441 = vsel %vm1353, %v1249, 0.0
        %v1442 = vsel %vm1354, %v1251, 0.0
        %v1443 = vsel %vm1355, %v1253, 0.0
        %v1444 = vsel %vm1356, %v1255, 0.0
        %v1445 = vsel %vm1357, %v1257, 0.0
        %v1446 = vsel %vm1358, %v1259, 0.0
        %v1447 = vsel %vm1359, %v1261, 0.0
        %v1448 = vsel %vm1360, %v1263, 0.0
        %v1449 = vsel %vm1353, %v1265, 0.0
        %v1450 = vsel %vm1354, %v1267, 0.0
        %v1451 = vsel %vm1355, %v1269, 0.0
        %v1452 = vsel %vm1356, %v1271, 0.0
        %v1453 = vsel %vm1357, %v1273, 0.0
        %v1454 = vsel %vm1358, %v1275, 0.0
        %v1455 = vsel %vm1359, %v1277, 0.0
        %v1456 = vsel %vm1360, %v1279, 0.0
        %v1457 = vsel %vm1353, %v1281, 0.0
        %v1458 = vsel %vm1354, %v1283, 0.0
        %v1459 = vsel %vm1355, %v1285, 0.0
        %v1460 = vsel %vm1356, %v1287, 0.0
        %v1461 = vsel %vm1357, %v1289, 0.0
        %v1462 = vsel %vm1358, %v1291, 0.0
        %v1463 = vsel %vm1359, %v1293, 0.0
        %v1464 = vsel %vm1360, %v1295, 0.0
        %v1465 = vsel %vm1353, %v1297, 0.0
        %v1466 = vsel %vm1354, %v1299, 0.0
        %v1467 = vsel %vm1355, %v1301, 0.0
        %v1468 = vsel %vm1356, %v1303, 0.0
        %v1469 = vsel %vm1357, %v1305, 0.0
        %v1470 = vsel %vm1358, %v1307, 0.0
        %v1471 = vsel %vm1359, %v1309, 0.0
        %v1472 = vsel %vm1360, %v1311, 0.0
        %v1473 = vsel %vm1353, %v1313, 0.0
        %v1474 = vsel %vm1354, %v1315, 0.0
        %v1475 = vsel %vm1355, %v1317, 0.0
        %v1476 = vsel %vm1356, %v1319, 0.0
        %v1477 = vsel %vm1357, %v1321, 0.0
        %v1478 = vsel %vm1358, %v1323, 0.0
        %v1479 = vsel %vm1359, %v1325, 0.0
        %v1480 = vsel %vm1360, %v1327, 0.0
        %v1481 = vsel %vm1353, %v1329, 0.0
        %v1482 = vsel %vm1354, %v1331, 0.0
        %v1483 = vsel %vm1355, %v1333, 0.0
        %v1484 = vsel %vm1356, %v1335, 0.0
        %v1485 = vsel %vm1357, %v1337, 0.0
        %v1486 = vsel %vm1358, %v1339, 0.0
        %v1487 = vsel %vm1359, %v1341, 0.0
        %v1488 = vsel %vm1360, %v1343, 0.0
        %1489 = vst [vmem:[#allocation2] sm:$0xff] %v1361
        %1490 = vst [vmem:[#allocation2 + $0x8] sm:$0xff] %v1362
        %1491 = vst [vmem:[#allocation2 + $0x10] sm:$0xff] %v1363
        %1492 = vst [vmem:[#allocation2 + $0x18] sm:$0xff] %v1364
        %1493 = vst [vmem:[#allocation2 + $0x20] sm:$0xff] %v1365
        %1494 = vst [vmem:[#allocation2 + $0x28] sm:$0xff] %v1366
        %1495 = vst [vmem:[#allocation2 + $0x30] sm:$0xff] %v1367
        %1496 = vst [vmem:[#allocation2 + $0x38] sm:$0xff] %v1368
        %1497 = vst [vmem:[#allocation2 + $0x40] sm:$0xff] %v1369
        %1498 = vst [vmem:[#allocation2 + $0x48] sm:$0xff] %v1370
        %1499 = vst [vmem:[#allocation2 + $0x50] sm:$0xff] %v1371
        %1500 = vst [vmem:[#allocation2 + $0x58] sm:$0xff] %v1372
        %1501 = vst [vmem:[#allocation2 + $0x60] sm:$0xff] %v1373
        %1502 = vst [vmem:[#allocation2 + $0x68] sm:$0xff] %v1374
        %1503 = vst [vmem:[#allocation2 + $0x70] sm:$0xff] %v1375
        %1504 = vst [vmem:[#allocation2 + $0x78] sm:$0xff] %v1376
        %1505 = vst [vmem:[#allocation2 + $0x80] sm:$0xff] %v1377
        %1506 = vst [vmem:[#allocation2 + $0x88] sm:$0xff] %v1378
        %1507 = vst [vmem:[#allocation2 + $0x90] sm:$0xff] %v1379
        %1508 = vst [vmem:[#allocation2 + $0x98] sm:$0xff] %v1380
        %1509 = vst [vmem:[#allocation2 + $0xa0] sm:$0xff] %v1381
        %1510 = vst [vmem:[#allocation2 + $0xa8] sm:$0xff] %v1382
        %1511 = vst [vmem:[#allocation2 + $0xb0] sm:$0xff] %v1383
        %1512 = vst [vmem:[#allocation2 + $0xb8] sm:$0xff] %v1384
        %1513 = vst [vmem:[#allocation2 + $0xc0] sm:$0xff] %v1385
        %1514 = vst [vmem:[#allocation2 + $0xc8] sm:$0xff] %v1386
        %1515 = vst [vmem:[#allocation2 + $0xd0] sm:$0xff] %v1387
        %1516 = vst [vmem:[#allocation2 + $0xd8] sm:$0xff] %v1388
        %1517 = vst [vmem:[#allocation2 + $0xe0] sm:$0xff] %v1389
        %1518 = vst [vmem:[#allocation2 + $0xe8] sm:$0xff] %v1390
        %1519 = vst [vmem:[#allocation2 + $0xf0] sm:$0xff] %v1391
        %1520 = vst [vmem:[#allocation2 + $0xf8] sm:$0xff] %v1392
        %1521 = vst [vmem:[#allocation2 + $0x100] sm:$0xff] %v1393
        %1522 = vst [vmem:[#allocation2 + $0x108] sm:$0xff] %v1394
        %1523 = vst [vmem:[#allocation2 + $0x110] sm:$0xff] %v1395
        %1524 = vst [vmem:[#allocation2 + $0x118] sm:$0xff] %v1396
        %1525 = vst [vmem:[#allocation2 + $0x120] sm:$0xff] %v1397
        %1526 = vst [vmem:[#allocation2 + $0x128] sm:$0xff] %v1398
        %1527 = vst [vmem:[#allocation2 + $0x130] sm:$0xff] %v1399
        %1528 = vst [vmem:[#allocation2 + $0x138] sm:$0xff] %v1400
        %1529 = vst [vmem:[#allocation2 + $0x140] sm:$0xff] %v1401
        %1530 = vst [vmem:[#allocation2 + $0x148] sm:$0xff] %v1402
        %1531 = vst [vmem:[#allocation2 + $0x150] sm:$0xff] %v1403
        %1532 = vst [vmem:[#allocation2 + $0x158] sm:$0xff] %v1404
        %1533 = vst [vmem:[#allocation2 + $0x160] sm:$0xff] %v1405
        %1534 = vst [vmem:[#allocation2 + $0x168] sm:$0xff] %v1406
        %1535 = vst [vmem:[#allocation2 + $0x170] sm:$0xff] %v1407
        %1536 = vst [vmem:[#allocation2 + $0x178] sm:$0xff] %v1408
        %1537 = vst [vmem:[#allocation2 + $0x180] sm:$0xff] %v1409
        %1538 = vst [vmem:[#allocation2 + $0x188] sm:$0xff] %v1410
        %1539 = vst [vmem:[#allocation2 + $0x190] sm:$0xff] %v1411
        %1540 = vst [vmem:[#allocation2 + $0x198] sm:$0xff] %v1412
        %1541 = vst [vmem:[#allocation2 + $0x1a0] sm:$0xff] %v1413
        %1542 = vst [vmem:[#allocation2 + $0x1a8] sm:$0xff] %v1414
        %1543 = vst [vmem:[#allocation2 + $0x1b0] sm:$0xff] %v1415
        %1544 = vst [vmem:[#allocation2 + $0x1b8] sm:$0xff] %v1416
        %1545 = vst [vmem:[#allocation2 + $0x1c0] sm:$0xff] %v1417
        %1546 = vst [vmem:[#allocation2 + $0x1c8] sm:$0xff] %v1418
        %1547 = vst [vmem:[#allocation2 + $0x1d0] sm:$0xff] %v1419
        %1548 = vst [vmem:[#allocation2 + $0x1d8] sm:$0xff] %v1420
        %1549 = vst [vmem:[#allocation2 + $0x1e0] sm:$0xff] %v1421
        %1550 = vst [vmem:[#allocation2 + $0x1e8] sm:$0xff] %v1422
        %1551 = vst [vmem:[#allocation2 + $0x1f0] sm:$0xff] %v1423
        %1552 = vst [vmem:[#allocation2 + $0x1f8] sm:$0xff] %v1424
        %1553 = vst [vmem:[#allocation2 + $0x200] sm:$0xff] %v1425
        %1554 = vst [vmem:[#allocation2 + $0x208] sm:$0xff] %v1426
        %1555 = vst [vmem:[#allocation2 + $0x210] sm:$0xff] %v1427
        %1556 = vst [vmem:[#allocation2 + $0x218] sm:$0xff] %v1428
        %1557 = vst [vmem:[#allocation2 + $0x220] sm:$0xff] %v1429
        %1558 = vst [vmem:[#allocation2 + $0x228] sm:$0xff] %v1430
        %1559 = vst [vmem:[#allocation2 + $0x230] sm:$0xff] %v1431
        %1560 = vst [vmem:[#allocation2 + $0x238] sm:$0xff] %v1432
        %1561 = vst [vmem:[#allocation2 + $0x240] sm:$0xff] %v1433
        %1562 = vst [vmem:[#allocation2 + $0x248] sm:$0xff] %v1434
        %1563 = vst [vmem:[#allocation2 + $0x250] sm:$0xff] %v1435
        %1564 = vst [vmem:[#allocation2 + $0x258] sm:$0xff] %v1436
        %1565 = vst [vmem:[#allocation2 + $0x260] sm:$0xff] %v1437
        %1566 = vst [vmem:[#allocation2 + $0x268] sm:$0xff] %v1438
        %1567 = vst [vmem:[#allocation2 + $0x270] sm:$0xff] %v1439
        %1568 = vst [vmem:[#allocation2 + $0x278] sm:$0xff] %v1440
        %1569 = vst [vmem:[#allocation2 + $0x280] sm:$0xff] %v1441
        %1570 = vst [vmem:[#allocation2 + $0x288] sm:$0xff] %v1442
        %1571 = vst [vmem:[#allocation2 + $0x290] sm:$0xff] %v1443
        %1572 = vst [vmem:[#allocation2 + $0x298] sm:$0xff] %v1444
        %1573 = vst [vmem:[#allocation2 + $0x2a0] sm:$0xff] %v1445
        %1574 = vst [vmem:[#allocation2 + $0x2a8] sm:$0xff] %v1446
        %1575 = vst [vmem:[#allocation2 + $0x2b0] sm:$0xff] %v1447
        %1576 = vst [vmem:[#allocation2 + $0x2b8] sm:$0xff] %v1448
        %1577 = vst [vmem:[#allocation2 + $0x2c0] sm:$0xff] %v1449
        %1578 = vst [vmem:[#allocation2 + $0x2c8] sm:$0xff] %v1450
        %1579 = vst [vmem:[#allocation2 + $0x2d0] sm:$0xff] %v1451
        %1580 = vst [vmem:[#allocation2 + $0x2d8] sm:$0xff] %v1452
        %1581 = vst [vmem:[#allocation2 + $0x2e0] sm:$0xff] %v1453
        %1582 = vst [vmem:[#allocation2 + $0x2e8] sm:$0xff] %v1454
        %1583 = vst [vmem:[#allocation2 + $0x2f0] sm:$0xff] %v1455
        %1584 = vst [vmem:[#allocation2 + $0x2f8] sm:$0xff] %v1456
        %1585 = vst [vmem:[#allocation2 + $0x300] sm:$0xff] %v1457
        %1586 = vst [vmem:[#allocation2 + $0x308] sm:$0xff] %v1458
        %1587 = vst [vmem:[#allocation2 + $0x310] sm:$0xff] %v1459
        %1588 = vst [vmem:[#allocation2 + $0x318] sm:$0xff] %v1460
        %1589 = vst [vmem:[#allocation2 + $0x320] sm:$0xff] %v1461
        %1590 = vst [vmem:[#allocation2 + $0x328] sm:$0xff] %v1462
        %1591 = vst [vmem:[#allocation2 + $0x330] sm:$0xff] %v1463
        %1592 = vst [vmem:[#allocation2 + $0x338] sm:$0xff] %v1464
        %1593 = vst [vmem:[#allocation2 + $0x340] sm:$0xff] %v1465
        %1594 = vst [vmem:[#allocation2 + $0x348] sm:$0xff] %v1466
        %1595 = vst [vmem:[#allocation2 + $0x350] sm:$0xff] %v1467
        %1596 = vst [vmem:[#allocation2 + $0x358] sm:$0xff] %v1468
        %1597 = vst [vmem:[#allocation2 + $0x360] sm:$0xff] %v1469
        %1598 = vst [vmem:[#allocation2 + $0x368] sm:$0xff] %v1470
        %1599 = vst [vmem:[#allocation2 + $0x370] sm:$0xff] %v1471
        %1600 = vst [vmem:[#allocation2 + $0x378] sm:$0xff] %v1472
        %1601 = vst [vmem:[#allocation2 + $0x380] sm:$0xff] %v1473
        %1602 = vst [vmem:[#allocation2 + $0x388] sm:$0xff] %v1474
        %1603 = vst [vmem:[#allocation2 + $0x390] sm:$0xff] %v1475
        %1604 = vst [vmem:[#allocation2 + $0x398] sm:$0xff] %v1476
        %1605 = vst [vmem:[#allocation2 + $0x3a0] sm:$0xff] %v1477
        %1606 = vst [vmem:[#allocation2 + $0x3a8] sm:$0xff] %v1478
        %1607 = vst [vmem:[#allocation2 + $0x3b0] sm:$0xff] %v1479
        %1608 = vst [vmem:[#allocation2 + $0x3b8] sm:$0xff] %v1480
        %1609 = vst [vmem:[#allocation2 + $0x3c0] sm:$0xff] %v1481
        %1610 = vst [vmem:[#allocation2 + $0x3c8] sm:$0xff] %v1482
        %1611 = vst [vmem:[#allocation2 + $0x3d0] sm:$0xff] %v1483
        %1612 = vst [vmem:[#allocation2 + $0x3d8] sm:$0xff] %v1484
        %1613 = vst [vmem:[#allocation2 + $0x3e0] sm:$0xff] %v1485
        %1614 = vst [vmem:[#allocation2 + $0x3e8] sm:$0xff] %v1486
        %1615 = vst [vmem:[#allocation2 + $0x3f0] sm:$0xff] %v1487
        %1616 = vst [vmem:[#allocation2 + $0x3f8] sm:$0xff] %v1488
        %v1617 = vld [vmem:[#allocation2] sm:$0xff]
        %v1618 = vld [vmem:[#allocation2 + $0x8] sm:$0xff]
        %v1619 = vld [vmem:[#allocation2 + $0x10] sm:$0xff]
        %v1620 = vld [vmem:[#allocation2 + $0x18] sm:$0xff]
        %v1621 = vld [vmem:[#allocation2 + $0x40] sm:$0xff]
        %v1622 = vld [vmem:[#allocation2 + $0x48] sm:$0xff]
        %v1623 = vld [vmem:[#allocation2 + $0x50] sm:$0xff]
        %v1624 = vld [vmem:[#allocation2 + $0x58] sm:$0xff]
        %v1625 = vld [vmem:[#allocation2 + $0x80] sm:$0xff]
        %v1626 = vld [vmem:[#allocation2 + $0x88] sm:$0xff]
        %v1627 = vld [vmem:[#allocation2 + $0x90] sm:$0xff]
        %v1628 = vld [vmem:[#allocation2 + $0x98] sm:$0xff]
        %v1629 = vld [vmem:[#allocation2 + $0xc0] sm:$0xff]
        %v1630 = vld [vmem:[#allocation2 + $0xc8] sm:$0xff]
        %v1631 = vld [vmem:[#allocation2 + $0xd0] sm:$0xff]
        %v1632 = vld [vmem:[#allocation2 + $0xd8] sm:$0xff]
        %v1633 = vld [vmem:[#allocation2 + $0x100] sm:$0xff]
        %v1634 = vld [vmem:[#allocation2 + $0x108] sm:$0xff]
        %v1635 = vld [vmem:[#allocation2 + $0x110] sm:$0xff]
        %v1636 = vld [vmem:[#allocation2 + $0x118] sm:$0xff]
        %v1637 = vld [vmem:[#allocation2 + $0x140] sm:$0xff]
        %v1638 = vld [vmem:[#allocation2 + $0x148] sm:$0xff]
        %v1639 = vld [vmem:[#allocation2 + $0x150] sm:$0xff]
        %v1640 = vld [vmem:[#allocation2 + $0x158] sm:$0xff]
        %v1641 = vld [vmem:[#allocation2 + $0x180] sm:$0xff]
        %v1642 = vld [vmem:[#allocation2 + $0x188] sm:$0xff]
        %v1643 = vld [vmem:[#allocation2 + $0x190] sm:$0xff]
        %v1644 = vld [vmem:[#allocation2 + $0x198] sm:$0xff]
        %v1645 = vld [vmem:[#allocation2 + $0x1c0] sm:$0xff]
        %v1646 = vld [vmem:[#allocation2 + $0x1c8] sm:$0xff]
        %v1647 = vld [vmem:[#allocation2 + $0x1d0] sm:$0xff]
        %v1648 = vld [vmem:[#allocation2 + $0x1d8] sm:$0xff]
        %v1649 = vld [vmem:[#allocation2 + $0x200] sm:$0xff]
        %v1650 = vld [vmem:[#allocation2 + $0x208] sm:$0xff]
        %v1651 = vld [vmem:[#allocation2 + $0x210] sm:$0xff]
        %v1652 = vld [vmem:[#allocation2 + $0x218] sm:$0xff]
        %v1653 = vld [vmem:[#allocation2 + $0x240] sm:$0xff]
        %v1654 = vld [vmem:[#allocation2 + $0x248] sm:$0xff]
        %v1655 = vld [vmem:[#allocation2 + $0x250] sm:$0xff]
        %v1656 = vld [vmem:[#allocation2 + $0x258] sm:$0xff]
        %v1657 = vld [vmem:[#allocation2 + $0x280] sm:$0xff]
        %v1658 = vld [vmem:[#allocation2 + $0x288] sm:$0xff]
        %v1659 = vld [vmem:[#allocation2 + $0x290] sm:$0xff]
        %v1660 = vld [vmem:[#allocation2 + $0x298] sm:$0xff]
        %v1661 = vld [vmem:[#allocation2 + $0x2c0] sm:$0xff]
        %v1662 = vld [vmem:[#allocation2 + $0x2c8] sm:$0xff]
        %v1663 = vld [vmem:[#allocation2 + $0x2d0] sm:$0xff]
        %v1664 = vld [vmem:[#allocation2 + $0x2d8] sm:$0xff]
        %v1665 = vld [vmem:[#allocation2 + $0x300] sm:$0xff]
        %v1666 = vld [vmem:[#allocation2 + $0x308] sm:$0xff]
        %v1667 = vld [vmem:[#allocation2 + $0x310] sm:$0xff]
        %v1668 = vld [vmem:[#allocation2 + $0x318] sm:$0xff]
        %v1669 = vld [vmem:[#allocation2 + $0x340] sm:$0xff]
        %v1670 = vld [vmem:[#allocation2 + $0x348] sm:$0xff]
        %v1671 = vld [vmem:[#allocation2 + $0x350] sm:$0xff]
        %v1672 = vld [vmem:[#allocation2 + $0x358] sm:$0xff]
        %v1673 = vld [vmem:[#allocation2 + $0x380] sm:$0xff]
        %v1674 = vld [vmem:[#allocation2 + $0x388] sm:$0xff]
        %v1675 = vld [vmem:[#allocation2 + $0x390] sm:$0xff]
        %v1676 = vld [vmem:[#allocation2 + $0x398] sm:$0xff]
        %v1677 = vld [vmem:[#allocation2 + $0x3c0] sm:$0xff]
        %v1678 = vld [vmem:[#allocation2 + $0x3c8] sm:$0xff]
        %v1679 = vld [vmem:[#allocation2 + $0x3d0] sm:$0xff]
        %v1680 = vld [vmem:[#allocation2 + $0x3d8] sm:$0xff]
        %v1681 = vld [vmem:[#allocation2 + $0x20] sm:$0xff]
        %v1682 = vld [vmem:[#allocation2 + $0x28] sm:$0xff]
        %v1683 = vld [vmem:[#allocation2 + $0x30] sm:$0xff]
        %v1684 = vld [vmem:[#allocation2 + $0x38] sm:$0xff]
        %v1685 = vld [vmem:[#allocation2 + $0x60] sm:$0xff]
        %v1686 = vld [vmem:[#allocation2 + $0x68] sm:$0xff]
        %v1687 = vld [vmem:[#allocation2 + $0x70] sm:$0xff]
        %v1688 = vld [vmem:[#allocation2 + $0x78] sm:$0xff]
        %v1689 = vld [vmem:[#allocation2 + $0xa0] sm:$0xff]
        %v1690 = vld [vmem:[#allocation2 + $0xa8] sm:$0xff]
        %v1691 = vld [vmem:[#allocation2 + $0xb0] sm:$0xff]
        %v1692 = vld [vmem:[#allocation2 + $0xb8] sm:$0xff]
        %v1693 = vld [vmem:[#allocation2 + $0xe0] sm:$0xff]
        %v1694 = vld [vmem:[#allocation2 + $0xe8] sm:$0xff]
        %v1695 = vld [vmem:[#allocation2 + $0xf0] sm:$0xff]
        %v1696 = vld [vmem:[#allocation2 + $0xf8] sm:$0xff]
        %v1697 = vld [vmem:[#allocation2 + $0x120] sm:$0xff]
        %v1698 = vld [vmem:[#allocation2 + $0x128] sm:$0xff]
        %v1699 = vld [vmem:[#allocation2 + $0x130] sm:$0xff]
        %v1700 = vld [vmem:[#allocation2 + $0x138] sm:$0xff]
        %v1701 = vld [vmem:[#allocation2 + $0x160] sm:$0xff]
        %v1702 = vld [vmem:[#allocation2 + $0x168] sm:$0xff]
        %v1703 = vld [vmem:[#allocation2 + $0x170] sm:$0xff]
        %v1704 = vld [vmem:[#allocation2 + $0x178] sm:$0xff]
        %v1705 = vld [vmem:[#allocation2 + $0x1a0] sm:$0xff]
        %v1706 = vld [vmem:[#allocation2 + $0x1a8] sm:$0xff]
        %v1707 = vld [vmem:[#allocation2 + $0x1b0] sm:$0xff]
        %v1708 = vld [vmem:[#allocation2 + $0x1b8] sm:$0xff]
        %v1709 = vld [vmem:[#allocation2 + $0x1e0] sm:$0xff]
        %v1710 = vld [vmem:[#allocation2 + $0x1e8] sm:$0xff]
        %v1711 = vld [vmem:[#allocation2 + $0x1f0] sm:$0xff]
        %v1712 = vld [vmem:[#allocation2 + $0x1f8] sm:$0xff]
        %v1713 = vld [vmem:[#allocation2 + $0x220] sm:$0xff]
        %v1714 = vld [vmem:[#allocation2 + $0x228] sm:$0xff]
        %v1715 = vld [vmem:[#allocation2 + $0x230] sm:$0xff]
        %v1716 = vld [vmem:[#allocation2 + $0x238] sm:$0xff]
        %v1717 = vld [vmem:[#allocation2 + $0x260] sm:$0xff]
        %v1718 = vld [vmem:[#allocation2 + $0x268] sm:$0xff]
        %v1719 = vld [vmem:[#allocation2 + $0x270] sm:$0xff]
        %v1720 = vld [vmem:[#allocation2 + $0x278] sm:$0xff]
        %v1721 = vld [vmem:[#allocation2 + $0x2a0] sm:$0xff]
        %v1722 = vld [vmem:[#allocation2 + $0x2a8] sm:$0xff]
        %v1723 = vld [vmem:[#allocation2 + $0x2b0] sm:$0xff]
        %v1724 = vld [vmem:[#allocation2 + $0x2b8] sm:$0xff]
        %v1725 = vld [vmem:[#allocation2 + $0x2e0] sm:$0xff]
        %v1726 = vld [vmem:[#allocation2 + $0x2e8] sm:$0xff]
        %v1727 = vld [vmem:[#allocation2 + $0x2f0] sm:$0xff]
        %v1728 = vld [vmem:[#allocation2 + $0x2f8] sm:$0xff]
        %v1729 = vld [vmem:[#allocation2 + $0x320] sm:$0xff]
        %v1730 = vld [vmem:[#allocation2 + $0x328] sm:$0xff]
        %v1731 = vld [vmem:[#allocation2 + $0x330] sm:$0xff]
        %v1732 = vld [vmem:[#allocation2 + $0x338] sm:$0xff]
        %v1733 = vld [vmem:[#allocation2 + $0x360] sm:$0xff]
        %v1734 = vld [vmem:[#allocation2 + $0x368] sm:$0xff]
        %v1735 = vld [vmem:[#allocation2 + $0x370] sm:$0xff]
        %v1736 = vld [vmem:[#allocation2 + $0x378] sm:$0xff]
        %v1737 = vld [vmem:[#allocation2 + $0x3a0] sm:$0xff]
        %v1738 = vld [vmem:[#allocation2 + $0x3a8] sm:$0xff]
        %v1739 = vld [vmem:[#allocation2 + $0x3b0] sm:$0xff]
        %v1740 = vld [vmem:[#allocation2 + $0x3b8] sm:$0xff]
        %v1741 = vld [vmem:[#allocation2 + $0x3e0] sm:$0xff]
        %v1742 = vld [vmem:[#allocation2 + $0x3e8] sm:$0xff]
        %v1743 = vld [vmem:[#allocation2 + $0x3f0] sm:$0xff]
        %v1744 = vld [vmem:[#allocation2 + $0x3f8] sm:$0xff]
        %v1745 = vadd.f32 %v1617, %v1681
        %v1746 = vadd.f32 %v1618, %v1682
        %v1747 = vadd.f32 %v1619, %v1683
        %v1748 = vadd.f32 %v1620, %v1684
        %v1749 = vadd.f32 %v1621, %v1685
        %v1750 = vadd.f32 %v1622, %v1686
        %v1751 = vadd.f32 %v1623, %v1687
        %v1752 = vadd.f32 %v1624, %v1688
        %v1753 = vadd.f32 %v1625, %v1689
        %v1754 = vadd.f32 %v1626, %v1690
        %v1755 = vadd.f32 %v1627, %v1691
        %v1756 = vadd.f32 %v1628, %v1692
        %v1757 = vadd.f32 %v1629, %v1693
        %v1758 = vadd.f32 %v1630, %v1694
        %v1759 = vadd.f32 %v1631, %v1695
        %v1760 = vadd.f32 %v1632, %v1696
        %v1761 = vadd.f32 %v1633, %v1697
        %v1762 = vadd.f32 %v1634, %v1698
        %v1763 = vadd.f32 %v1635, %v1699
        %v1764 = vadd.f32 %v1636, %v1700
        %v1765 = vadd.f32 %v1637, %v1701
        %v1766 = vadd.f32 %v1638, %v1702
        %v1767 = vadd.f32 %v1639, %v1703
        %v1768 = vadd.f32 %v1640, %v1704
        %v1769 = vadd.f32 %v1641, %v1705
        %v1770 = vadd.f32 %v1642, %v1706
        %v1771 = vadd.f32 %v1643, %v1707
        %v1772 = vadd.f32 %v1644, %v1708
        %v1773 = vadd.f32 %v1645, %v1709
        %v1774 = vadd.f32 %v1646, %v1710
        %v1775 = vadd.f32 %v1647, %v1711
        %v1776 = vadd.f32 %v1648, %v1712
        %v1777 = vadd.f32 %v1649, %v1713
        %v1778 = vadd.f32 %v1650, %v1714
        %v1779 = vadd.f32 %v1651, %v1715
        %v1780 = vadd.f32 %v1652, %v1716
        %v1781 = vadd.f32 %v1653, %v1717
        %v1782 = vadd.f32 %v1654, %v1718
        %v1783 = vadd.f32 %v1655, %v1719
        %v1784 = vadd.f32 %v1656, %v1720
        %v1785 = vadd.f32 %v1657, %v1721
        %v1786 = vadd.f32 %v1658, %v1722
        %v1787 = vadd.f32 %v1659, %v1723
        %v1788 = vadd.f32 %v1660, %v1724
        %v1789 = vadd.f32 %v1661, %v1725
        %v1790 = vadd.f32 %v1662, %v1726
        %v1791 = vadd.f32 %v1663, %v1727
        %v1792 = vadd.f32 %v1664, %v1728
        %v1793 = vadd.f32 %v1665, %v1729
        %v1794 = vadd.f32 %v1666, %v1730
        %v1795 = vadd.f32 %v1667, %v1731
        %v1796 = vadd.f32 %v1668, %v1732
        %v1797 = vadd.f32 %v1669, %v1733
        %v1798 = vadd.f32 %v1670, %v1734
        %v1799 = vadd.f32 %v1671, %v1735
        %v1800 = vadd.f32 %v1672, %v1736
        %v1801 = vadd.f32 %v1673, %v1737
        %v1802 = vadd.f32 %v1674, %v1738
        %v1803 = vadd.f32 %v1675, %v1739
        %v1804 = vadd.f32 %v1676, %v1740
        %v1805 = vadd.f32 %v1677, %v1741
        %v1806 = vadd.f32 %v1678, %v1742
        %v1807 = vadd.f32 %v1679, %v1743
        %v1808 = vadd.f32 %v1680, %v1744
        %v1809 = vadd.f32 %v1745, %v1747
        %v1810 = vadd.f32 %v1746, %v1748
        %v1811 = vadd.f32 %v1749, %v1751
        %v1812 = vadd.f32 %v1750, %v1752
        %v1813 = vadd.f32 %v1753, %v1755
        %v1814 = vadd.f32 %v1754, %v1756
        %v1815 = vadd.f32 %v1757, %v1759
        %v1816 = vadd.f32 %v1758, %v1760
        %v1817 = vadd.f32 %v1761, %v1763
        %v1818 = vadd.f32 %v1762, %v1764
        %v1819 = vadd.f32 %v1765, %v1767
        %v1820 = vadd.f32 %v1766, %v1768
        %v1821 = vadd.f32 %v1769, %v1771
        %v1822 = vadd.f32 %v1770, %v1772
        %v1823 = vadd.f32 %v1773, %v1775
        %v1824 = vadd.f32 %v1774, %v1776
        %v1825 = vadd.f32 %v1777, %v1779
        %v1826 = vadd.f32 %v1778, %v1780
        %v1827 = vadd.f32 %v1781, %v1783
        %v1828 = vadd.f32 %v1782, %v1784
        %v1829 = vadd.f32 %v1785, %v1787
        %v1830 = vadd.f32 %v1786, %v1788
        %v1831 = vadd.f32 %v1789, %v1791
        %v1832 = vadd.f32 %v1790, %v1792
        %v1833 = vadd.f32 %v1793, %v1795
        %v1834 = vadd.f32 %v1794, %v1796
        %v1835 = vadd.f32 %v1797, %v1799
        %v1836 = vadd.f32 %v1798, %v1800
        %v1837 = vadd.f32 %v1801, %v1803
        %v1838 = vadd.f32 %v1802, %v1804
        %v1839 = vadd.f32 %v1805, %v1807
        %v1840 = vadd.f32 %v1806, %v1808
        %v1841 = vadd.f32 %v1809, %v1810
        %v1842 = vadd.f32 %v1811, %v1812
        %v1843 = vadd.f32 %v1813, %v1814
        %v1844 = vadd.f32 %v1815, %v1816
        %v1845 = vadd.f32 %v1817, %v1818
        %v1846 = vadd.f32 %v1819, %v1820
        %v1847 = vadd.f32 %v1821, %v1822
        %v1848 = vadd.f32 %v1823, %v1824
        %v1849 = vadd.f32 %v1825, %v1826
        %v1850 = vadd.f32 %v1827, %v1828
        %v1851 = vadd.f32 %v1829, %v1830
        %v1852 = vadd.f32 %v1831, %v1832
        %v1853 = vadd.f32 %v1833, %v1834
        %v1854 = vadd.f32 %v1835, %v1836
        %v1855 = vadd.f32 %v1837, %v1838
        %v1856 = vadd.f32 %v1839, %v1840
        %1873 = vrot.lane.b32.xlu0 %v1841, 64
        %v1874 = vpop.permute.xlu0 %1873
        %1875 = vrot.lane.b32.xlu0 %v1842, 64
        %v1876 = vpop.permute.xlu0 %1875
        %1877 = vrot.lane.b32.xlu0 %v1843, 64
        %v1878 = vpop.permute.xlu0 %1877
        %1879 = vrot.lane.b32.xlu0 %v1844, 64
        %v1880 = vpop.permute.xlu0 %1879
        %1881 = vrot.lane.b32.xlu0 %v1845, 64
        %v1882 = vpop.permute.xlu0 %1881
        %1883 = vrot.lane.b32.xlu0 %v1846, 64
        %v1884 = vpop.permute.xlu0 %1883
        %1885 = vrot.lane.b32.xlu0 %v1847, 64
        %v1886 = vpop.permute.xlu0 %1885
        %1887 = vrot.lane.b32.xlu0 %v1848, 64
        %v1888 = vpop.permute.xlu0 %1887
        %1889 = vrot.lane.b32.xlu0 %v1849, 64
        %v1890 = vpop.permute.xlu0 %1889
        %1891 = vrot.lane.b32.xlu0 %v1850, 64
        %v1892 = vpop.permute.xlu0 %1891
        %1893 = vrot.lane.b32.xlu0 %v1851, 64
        %v1894 = vpop.permute.xlu0 %1893
        %1895 = vrot.lane.b32.xlu0 %v1852, 64
        %v1896 = vpop.permute.xlu0 %1895
        %1897 = vrot.lane.b32.xlu0 %v1853, 64
        %v1898 = vpop.permute.xlu0 %1897
        %1899 = vrot.lane.b32.xlu0 %v1854, 64
        %v1900 = vpop.permute.xlu0 %1899
        %1901 = vrot.lane.b32.xlu0 %v1855, 64
        %v1902 = vpop.permute.xlu0 %1901
        %1903 = vrot.lane.b32.xlu0 %v1856, 64
        %v1904 = vpop.permute.xlu0 %1903
        %v1921 = vadd.f32 %v1841, %v1874
        %v1922 = vadd.f32 %v1842, %v1876
        %v1923 = vadd.f32 %v1843, %v1878
        %v1924 = vadd.f32 %v1844, %v1880
        %v1925 = vadd.f32 %v1845, %v1882
        %v1926 = vadd.f32 %v1846, %v1884
        %v1927 = vadd.f32 %v1847, %v1886
        %v1928 = vadd.f32 %v1848, %v1888
        %v1929 = vadd.f32 %v1849, %v1890
        %v1930 = vadd.f32 %v1850, %v1892
        %v1931 = vadd.f32 %v1851, %v1894
        %v1932 = vadd.f32 %v1852, %v1896
        %v1933 = vadd.f32 %v1853, %v1898
        %v1934 = vadd.f32 %v1854, %v1900
        %v1935 = vadd.f32 %v1855, %v1902
        %v1936 = vadd.f32 %v1856, %v1904
        %1953 = vrot.lane.b32.xlu0 %v1921, 96
        %v1954 = vpop.permute.xlu0 %1953
        %1955 = vrot.lane.b32.xlu0 %v1922, 96
        %v1956 = vpop.permute.xlu0 %1955
        %1957 = vrot.lane.b32.xlu0 %v1923, 96
        %v1958 = vpop.permute.xlu0 %1957
        %1959 = vrot.lane.b32.xlu0 %v1924, 96
        %v1960 = vpop.permute.xlu0 %1959
        %1961 = vrot.lane.b32.xlu0 %v1925, 96
        %v1962 = vpop.permute.xlu0 %1961
        %1963 = vrot.lane.b32.xlu0 %v1926, 96
        %v1964 = vpop.permute.xlu0 %1963
        %1965 = vrot.lane.b32.xlu0 %v1927, 96
        %v1966 = vpop.permute.xlu0 %1965
        %1967 = vrot.lane.b32.xlu0 %v1928, 96
        %v1968 = vpop.permute.xlu0 %1967
        %1969 = vrot.lane.b32.xlu0 %v1929, 96
        %v1970 = vpop.permute.xlu0 %1969
        %1971 = vrot.lane.b32.xlu0 %v1930, 96
        %v1972 = vpop.permute.xlu0 %1971
        %1973 = vrot.lane.b32.xlu0 %v1931, 96
        %v1974 = vpop.permute.xlu0 %1973
        %1975 = vrot.lane.b32.xlu0 %v1932, 96
        %v1976 = vpop.permute.xlu0 %1975
        %1977 = vrot.lane.b32.xlu0 %v1933, 96
        %v1978 = vpop.permute.xlu0 %1977
        %1979 = vrot.lane.b32.xlu0 %v1934, 96
        %v1980 = vpop.permute.xlu0 %1979
        %1981 = vrot.lane.b32.xlu0 %v1935, 96
        %v1982 = vpop.permute.xlu0 %1981
        %1983 = vrot.lane.b32.xlu0 %v1936, 96
        %v1984 = vpop.permute.xlu0 %1983
        %v2001 = vadd.f32 %v1921, %v1954
        %v2002 = vadd.f32 %v1922, %v1956
        %v2003 = vadd.f32 %v1923, %v1958
        %v2004 = vadd.f32 %v1924, %v1960
        %v2005 = vadd.f32 %v1925, %v1962
        %v2006 = vadd.f32 %v1926, %v1964
        %v2007 = vadd.f32 %v1927, %v1966
        %v2008 = vadd.f32 %v1928, %v1968
        %v2009 = vadd.f32 %v1929, %v1970
        %v2010 = vadd.f32 %v1930, %v1972
        %v2011 = vadd.f32 %v1931, %v1974
        %v2012 = vadd.f32 %v1932, %v1976
        %v2013 = vadd.f32 %v1933, %v1978
        %v2014 = vadd.f32 %v1934, %v1980
        %v2015 = vadd.f32 %v1935, %v1982
        %v2016 = vadd.f32 %v1936, %v1984
        %v2017 = vrcp.pop %v2001
        %v2018 = vrcp.pop %v2002
        %v2019 = vrcp.pop %v2003
        %v2020 = vrcp.pop %v2004
        %v2021 = vrcp.pop %v2005
        %v2022 = vrcp.pop %v2006
        %v2023 = vrcp.pop %v2007
        %v2024 = vrcp.pop %v2008
        %v2025 = vrcp.pop %v2009
        %v2026 = vrcp.pop %v2010
        %v2027 = vrcp.pop %v2011
        %v2028 = vrcp.pop %v2012
        %v2029 = vrcp.pop %v2013
        %v2030 = vrcp.pop %v2014
        %v2031 = vrcp.pop %v2015
        %v2032 = vrcp.pop %v2016
        %v2033 = vld [vmem:[%s169] sm:$0xf]
        %v2034 = vld [vmem:[%s169 + $0x4] sm:$0xf]
        %v2035 = vld [vmem:[%s169 + $0xc] sm:$0xf]
        %v2036 = vld [vmem:[%s169 + $0x10] sm:$0xf]
        %v2037 = vld [vmem:[%s169 + $0x18] sm:$0xf]
        %v2038 = vld [vmem:[%s169 + $0x1c] sm:$0xf]
        %v2039 = vld [vmem:[%s169 + $0x24] sm:$0xf]
        %v2040 = vld [vmem:[%s169 + $0x28] sm:$0xf]
        %v2041 = vld [vmem:[%s169 + $0x30] sm:$0xf]
        %v2042 = vld [vmem:[%s169 + $0x34] sm:$0xf]
        %v2043 = vld [vmem:[%s169 + $0x3c] sm:$0xf]
        %v2044 = vld [vmem:[%s169 + $0x40] sm:$0xf]
        %v2045 = vld [vmem:[%s169 + $0x48] sm:$0xf]
        %v2046 = vld [vmem:[%s169 + $0x4c] sm:$0xf]
        %v2047 = vld [vmem:[%s169 + $0x54] sm:$0xf]
        %v2048 = vld [vmem:[%s169 + $0x58] sm:$0xf]
        %v2049 = vunpack.c.l.bf16 %v2033
        %v2050 = vunpack.c.l.bf16 %v2034
        %v2051 = vunpack.c.l.bf16 %v2035
        %v2052 = vunpack.c.l.bf16 %v2036
        %v2053 = vunpack.c.l.bf16 %v2037
        %v2054 = vunpack.c.l.bf16 %v2038
        %v2055 = vunpack.c.l.bf16 %v2039
        %v2056 = vunpack.c.l.bf16 %v2040
        %v2057 = vunpack.c.l.bf16 %v2041
        %v2058 = vunpack.c.l.bf16 %v2042
        %v2059 = vunpack.c.l.bf16 %v2043
        %v2060 = vunpack.c.l.bf16 %v2044
        %v2061 = vunpack.c.l.bf16 %v2045
        %v2062 = vunpack.c.l.bf16 %v2046
        %v2063 = vunpack.c.l.bf16 %v2047
        %v2064 = vunpack.c.l.bf16 %v2048
        %v2065 = vmul.f32 %v1617, %v2049
        %v2066 = vmul.f32 %v1621, %v2050
        %v2067 = vmul.f32 %v1625, %v2051
        %v2068 = vmul.f32 %v1629, %v2052
        %v2069 = vmul.f32 %v1633, %v2053
        %v2070 = vmul.f32 %v1637, %v2054
        %v2071 = vmul.f32 %v1641, %v2055
        %v2072 = vmul.f32 %v1645, %v2056
        %v2073 = vmul.f32 %v1649, %v2057
        %v2074 = vmul.f32 %v1653, %v2058
        %v2075 = vmul.f32 %v1657, %v2059
        %v2076 = vmul.f32 %v1661, %v2060
        %v2077 = vmul.f32 %v1665, %v2061
        %v2078 = vmul.f32 %v1669, %v2062
        %v2079 = vmul.f32 %v1673, %v2063
        %v2080 = vmul.f32 %v1677, %v2064
        %v2081 = vadd.f32 %v2065, 0.0
        %v2082 = vadd.f32 %v2066, 0.0
        %v2083 = vadd.f32 %v2067, 0.0
        %v2084 = vadd.f32 %v2068, 0.0
        %v2085 = vadd.f32 %v2069, 0.0
        %v2086 = vadd.f32 %v2070, 0.0
        %v2087 = vadd.f32 %v2071, 0.0
        %v2088 = vadd.f32 %v2072, 0.0
        %v2089 = vadd.f32 %v2073, 0.0
        %v2090 = vadd.f32 %v2074, 0.0
        %v2091 = vadd.f32 %v2075, 0.0
        %v2092 = vadd.f32 %v2076, 0.0
        %v2093 = vadd.f32 %v2077, 0.0
        %v2094 = vadd.f32 %v2078, 0.0
        %v2095 = vadd.f32 %v2079, 0.0
        %v2096 = vadd.f32 %v2080, 0.0
        %v2097 = vld [vmem:[%s169 + $0x8] sm:$0x1]
        %v2098 = vld [vmem:[%s169 + $0x14] sm:$0x1]
        %v2099 = vld [vmem:[%s169 + $0x20] sm:$0x1]
        %v2100 = vld [vmem:[%s169 + $0x2c] sm:$0x1]
        %v2101 = vld [vmem:[%s169 + $0x38] sm:$0x1]
        %v2102 = vld [vmem:[%s169 + $0x44] sm:$0x1]
        %v2103 = vld [vmem:[%s169 + $0x50] sm:$0x1]
        %v2104 = vld [vmem:[%s169 + $0x5c] sm:$0x1]
        %v2105 = vunpack.c.l.bf16 %v2097
        %v2106 = vunpack.c.l.bf16 %v2098
        %v2107 = vunpack.c.l.bf16 %v2099
        %v2108 = vunpack.c.l.bf16 %v2100
        %v2109 = vunpack.c.l.bf16 %v2101
        %v2110 = vunpack.c.l.bf16 %v2102
        %v2111 = vunpack.c.l.bf16 %v2103
        %v2112 = vunpack.c.l.bf16 %v2104
        %vm2137 = vcmask 1046528
        %v2138 = vrot.slane %v2049, 1
        %v2139 = vrot.slane %v2050, 1
        %v2140 = vsel %vm2137, %v2138, %v2139
        %v2141 = vrot.slane %v2105, 1
        %v2142 = vsel %vm2137, %v2139, %v2141
        %v2143 = vrot.slane %v2051, 1
        %v2144 = vrot.slane %v2052, 1
        %v2145 = vsel %vm2137, %v2143, %v2144
        %v2146 = vrot.slane %v2106, 1
        %v2147 = vsel %vm2137, %v2144, %v2146
        %v2148 = vrot.slane %v2053, 1
        %v2149 = vrot.slane %v2054, 1
        %v2150 = vsel %vm2137, %v2148, %v2149
        %v2151 = vrot.slane %v2107, 1
        %v2152 = vsel %vm2137, %v2149, %v2151
        %v2153 = vrot.slane %v2055, 1
        %v2154 = vrot.slane %v2056, 1
        %v2155 = vsel %vm2137, %v2153, %v2154
        %v2156 = vrot.slane %v2108, 1
        %v2157 = vsel %vm2137, %v2154, %v2156
        %v2158 = vrot.slane %v2057, 1
        %v2159 = vrot.slane %v2058, 1
        %v2160 = vsel %vm2137, %v2158, %v2159
        %v2161 = vrot.slane %v2109, 1
        %v2162 = vsel %vm2137, %v2159, %v2161
        %v2163 = vrot.slane %v2059, 1
        %v2164 = vrot.slane %v2060, 1
        %v2165 = vsel %vm2137, %v2163, %v2164
        %v2166 = vrot.slane %v2110, 1
        %v2167 = vsel %vm2137, %v2164, %v2166
        %v2168 = vrot.slane %v2061, 1
        %v2169 = vrot.slane %v2062, 1
        %v2170 = vsel %vm2137, %v2168, %v2169
        %v2171 = vrot.slane %v2111, 1
        %v2172 = vsel %vm2137, %v2169, %v2171
        %v2173 = vrot.slane %v2063, 1
        %v2174 = vrot.slane %v2064, 1
        %v2175 = vsel %vm2137, %v2173, %v2174
        %v2176 = vrot.slane %v2112, 1
        %v2177 = vsel %vm2137, %v2174, %v2176
        %2178 = vrot.lane.b32.xlu0 %v2140, 32
        %v2179 = vpop.permute.xlu0 %2178
        %2180 = vrot.lane.b32.xlu0 %v2142, 32
        %v2181 = vpop.permute.xlu0 %2180
        %2182 = vrot.lane.b32.xlu0 %v2145, 32
        %v2183 = vpop.permute.xlu0 %2182
        %2184 = vrot.lane.b32.xlu0 %v2147, 32
        %v2185 = vpop.permute.xlu0 %2184
        %2186 = vrot.lane.b32.xlu0 %v2150, 32
        %v2187 = vpop.permute.xlu0 %2186
        %2188 = vrot.lane.b32.xlu0 %v2152, 32
        %v2189 = vpop.permute.xlu0 %2188
        %2190 = vrot.lane.b32.xlu0 %v2155, 32
        %v2191 = vpop.permute.xlu0 %2190
        %2192 = vrot.lane.b32.xlu0 %v2157, 32
        %v2193 = vpop.permute.xlu0 %2192
        %2194 = vrot.lane.b32.xlu0 %v2160, 32
        %v2195 = vpop.permute.xlu0 %2194
        %2196 = vrot.lane.b32.xlu0 %v2162, 32
        %v2197 = vpop.permute.xlu0 %2196
        %2198 = vrot.lane.b32.xlu0 %v2165, 32
        %v2199 = vpop.permute.xlu0 %2198
        %2200 = vrot.lane.b32.xlu0 %v2167, 32
        %v2201 = vpop.permute.xlu0 %2200
        %2202 = vrot.lane.b32.xlu0 %v2170, 32
        %v2203 = vpop.permute.xlu0 %2202
        %2204 = vrot.lane.b32.xlu0 %v2172, 32
        %v2205 = vpop.permute.xlu0 %2204
        %2206 = vrot.lane.b32.xlu0 %v2175, 32
        %v2207 = vpop.permute.xlu0 %2206
        %2208 = vrot.lane.b32.xlu0 %v2177, 32
        %v2209 = vpop.permute.xlu0 %2208
        %v2226 = vmul.f32 %v1617, %v2179
        %v2227 = vmul.f32 %v1621, %v2181
        %v2228 = vmul.f32 %v1625, %v2183
        %v2229 = vmul.f32 %v1629, %v2185
        %v2230 = vmul.f32 %v1633, %v2187
        %v2231 = vmul.f32 %v1637, %v2189
        %v2232 = vmul.f32 %v1641, %v2191
        %v2233 = vmul.f32 %v1645, %v2193
        %v2234 = vmul.f32 %v1649, %v2195
        %v2235 = vmul.f32 %v1653, %v2197
        %v2236 = vmul.f32 %v1657, %v2199
        %v2237 = vmul.f32 %v1661, %v2201
        %v2238 = vmul.f32 %v1665, %v2203
        %v2239 = vmul.f32 %v1669, %v2205
        %v2240 = vmul.f32 %v1673, %v2207
        %v2241 = vmul.f32 %v1677, %v2209
        %2258 = vrot.lane.b32.xlu0 %v2226, 96
        %v2259 = vpop.permute.xlu0 %2258
        %2260 = vrot.lane.b32.xlu0 %v2227, 96
        %v2261 = vpop.permute.xlu0 %2260
        %2262 = vrot.lane.b32.xlu0 %v2228, 96
        %v2263 = vpop.permute.xlu0 %2262
        %2264 = vrot.lane.b32.xlu0 %v2229, 96
        %v2265 = vpop.permute.xlu0 %2264
        %2266 = vrot.lane.b32.xlu0 %v2230, 96
        %v2267 = vpop.permute.xlu0 %2266
        %2268 = vrot.lane.b32.xlu0 %v2231, 96
        %v2269 = vpop.permute.xlu0 %2268
        %2270 = vrot.lane.b32.xlu0 %v2232, 96
        %v2271 = vpop.permute.xlu0 %2270
        %2272 = vrot.lane.b32.xlu0 %v2233, 96
        %v2273 = vpop.permute.xlu0 %2272
        %2274 = vrot.lane.b32.xlu0 %v2234, 96
        %v2275 = vpop.permute.xlu0 %2274
        %2276 = vrot.lane.b32.xlu0 %v2235, 96
        %v2277 = vpop.permute.xlu0 %2276
        %2278 = vrot.lane.b32.xlu0 %v2236, 96
        %v2279 = vpop.permute.xlu0 %2278
        %2280 = vrot.lane.b32.xlu0 %v2237, 96
        %v2281 = vpop.permute.xlu0 %2280
        %2282 = vrot.lane.b32.xlu0 %v2238, 96
        %v2283 = vpop.permute.xlu0 %2282
        %2284 = vrot.lane.b32.xlu0 %v2239, 96
        %v2285 = vpop.permute.xlu0 %2284
        %2286 = vrot.lane.b32.xlu0 %v2240, 96
        %v2287 = vpop.permute.xlu0 %2286
        %2288 = vrot.lane.b32.xlu0 %v2241, 96
        %v2289 = vpop.permute.xlu0 %2288
        %v2306 = vadd.f32 %v2081, %v2259
        %v2307 = vadd.f32 %v2082, %v2261
        %v2308 = vadd.f32 %v2083, %v2263
        %v2309 = vadd.f32 %v2084, %v2265
        %v2310 = vadd.f32 %v2085, %v2267
        %v2311 = vadd.f32 %v2086, %v2269
        %v2312 = vadd.f32 %v2087, %v2271
        %v2313 = vadd.f32 %v2088, %v2273
        %v2314 = vadd.f32 %v2089, %v2275
        %v2315 = vadd.f32 %v2090, %v2277
        %v2316 = vadd.f32 %v2091, %v2279
        %v2317 = vadd.f32 %v2092, %v2281
        %v2318 = vadd.f32 %v2093, %v2283
        %v2319 = vadd.f32 %v2094, %v2285
        %v2320 = vadd.f32 %v2095, %v2287
        %v2321 = vadd.f32 %v2096, %v2289
        %v2322 = vld [vmem:[%s169] sm:$0xe]
        %v2323 = vld [vmem:[%s169 + $0xc] sm:$0xe]
        %v2324 = vld [vmem:[%s169 + $0x18] sm:$0xe]
        %v2325 = vld [vmem:[%s169 + $0x24] sm:$0xe]
        %v2326 = vld [vmem:[%s169 + $0x30] sm:$0xe]
        %v2327 = vld [vmem:[%s169 + $0x3c] sm:$0xe]
        %v2328 = vld [vmem:[%s169 + $0x48] sm:$0xe]
        %v2329 = vld [vmem:[%s169 + $0x54] sm:$0xe]
        %v2330 = vunpack.c.l.bf16 %v2322
        %v2331 = vunpack.c.l.bf16 %v2323
        %v2332 = vunpack.c.l.bf16 %v2324
        %v2333 = vunpack.c.l.bf16 %v2325
        %v2334 = vunpack.c.l.bf16 %v2326
        %v2335 = vunpack.c.l.bf16 %v2327
        %v2336 = vunpack.c.l.bf16 %v2328
        %v2337 = vunpack.c.l.bf16 %v2329
        %vm2346 = vcmask 1045504
        %v2347 = vrot.slane %v2330, 2
        %v2348 = vrot.slane %v2050, 2
        %v2349 = vsel %vm2346, %v2347, %v2348
        %v2350 = vrot.slane %v2105, 2
        %v2351 = vsel %vm2346, %v2348, %v2350
        %v2352 = vrot.slane %v2331, 2
        %v2353 = vrot.slane %v2052, 2
        %v2354 = vsel %vm2346, %v2352, %v2353
        %v2355 = vrot.slane %v2106, 2
        %v2356 = vsel %vm2346, %v2353, %v2355
        %v2357 = vrot.slane %v2332, 2
        %v2358 = vrot.slane %v2054, 2
        %v2359 = vsel %vm2346, %v2357, %v2358
        %v2360 = vrot.slane %v2107, 2
        %v2361 = vsel %vm2346, %v2358, %v2360
        %v2362 = vrot.slane %v2333, 2
        %v2363 = vrot.slane %v2056, 2
        %v2364 = vsel %vm2346, %v2362, %v2363
        %v2365 = vrot.slane %v2108, 2
        %v2366 = vsel %vm2346, %v2363, %v2365
        %v2367 = vrot.slane %v2334, 2
        %v2368 = vrot.slane %v2058, 2
        %v2369 = vsel %vm2346, %v2367, %v2368
        %v2370 = vrot.slane %v2109, 2
        %v2371 = vsel %vm2346, %v2368, %v2370
        %v2372 = vrot.slane %v2335, 2
        %v2373 = vrot.slane %v2060, 2
        %v2374 = vsel %vm2346, %v2372, %v2373
        %v2375 = vrot.slane %v2110, 2
        %v2376 = vsel %vm2346, %v2373, %v2375
        %v2377 = vrot.slane %v2336, 2
        %v2378 = vrot.slane %v2062, 2
        %v2379 = vsel %vm2346, %v2377, %v2378
        %v2380 = vrot.slane %v2111, 2
        %v2381 = vsel %vm2346, %v2378, %v2380
        %v2382 = vrot.slane %v2337, 2
        %v2383 = vrot.slane %v2064, 2
        %v2384 = vsel %vm2346, %v2382, %v2383
        %v2385 = vrot.slane %v2112, 2
        %v2386 = vsel %vm2346, %v2383, %v2385
        %2387 = vrot.lane.b32.xlu0 %v2349, 64
        %v2388 = vpop.permute.xlu0 %2387
        %2389 = vrot.lane.b32.xlu0 %v2351, 64
        %v2390 = vpop.permute.xlu0 %2389
        %2391 = vrot.lane.b32.xlu0 %v2354, 64
        %v2392 = vpop.permute.xlu0 %2391
        %2393 = vrot.lane.b32.xlu0 %v2356, 64
        %v2394 = vpop.permute.xlu0 %2393
        %2395 = vrot.lane.b32.xlu0 %v2359, 64
        %v2396 = vpop.permute.xlu0 %2395
        %2397 = vrot.lane.b32.xlu0 %v2361, 64
        %v2398 = vpop.permute.xlu0 %2397
        %2399 = vrot.lane.b32.xlu0 %v2364, 64
        %v2400 = vpop.permute.xlu0 %2399
        %2401 = vrot.lane.b32.xlu0 %v2366, 64
        %v2402 = vpop.permute.xlu0 %2401
        %2403 = vrot.lane.b32.xlu0 %v2369, 64
        %v2404 = vpop.permute.xlu0 %2403
        %2405 = vrot.lane.b32.xlu0 %v2371, 64
        %v2406 = vpop.permute.xlu0 %2405
        %2407 = vrot.lane.b32.xlu0 %v2374, 64
        %v2408 = vpop.permute.xlu0 %2407
        %2409 = vrot.lane.b32.xlu0 %v2376, 64
        %v2410 = vpop.permute.xlu0 %2409
        %2411 = vrot.lane.b32.xlu0 %v2379, 64
        %v2412 = vpop.permute.xlu0 %2411
        %2413 = vrot.lane.b32.xlu0 %v2381, 64
        %v2414 = vpop.permute.xlu0 %2413
        %2415 = vrot.lane.b32.xlu0 %v2384, 64
        %v2416 = vpop.permute.xlu0 %2415
        %2417 = vrot.lane.b32.xlu0 %v2386, 64
        %v2418 = vpop.permute.xlu0 %2417
        %v2435 = vmul.f32 %v1617, %v2388
        %v2436 = vmul.f32 %v1621, %v2390
        %v2437 = vmul.f32 %v1625, %v2392
        %v2438 = vmul.f32 %v1629, %v2394
        %v2439 = vmul.f32 %v1633, %v2396
        %v2440 = vmul.f32 %v1637, %v2398
        %v2441 = vmul.f32 %v1641, %v2400
        %v2442 = vmul.f32 %v1645, %v2402
        %v2443 = vmul.f32 %v1649, %v2404
        %v2444 = vmul.f32 %v1653, %v2406
        %v2445 = vmul.f32 %v1657, %v2408
        %v2446 = vmul.f32 %v1661, %v2410
        %v2447 = vmul.f32 %v1665, %v2412
        %v2448 = vmul.f32 %v1669, %v2414
        %v2449 = vmul.f32 %v1673, %v2416
        %v2450 = vmul.f32 %v1677, %v2418
        %2467 = vrot.lane.b32.xlu0 %v2435, 64
        %v2468 = vpop.permute.xlu0 %2467
        %2469 = vrot.lane.b32.xlu0 %v2436, 64
        %v2470 = vpop.permute.xlu0 %2469
        %2471 = vrot.lane.b32.xlu0 %v2437, 64
        %v2472 = vpop.permute.xlu0 %2471
        %2473 = vrot.lane.b32.xlu0 %v2438, 64
        %v2474 = vpop.permute.xlu0 %2473
        %2475 = vrot.lane.b32.xlu0 %v2439, 64
        %v2476 = vpop.permute.xlu0 %2475
        %2477 = vrot.lane.b32.xlu0 %v2440, 64
        %v2478 = vpop.permute.xlu0 %2477
        %2479 = vrot.lane.b32.xlu0 %v2441, 64
        %v2480 = vpop.permute.xlu0 %2479
        %2481 = vrot.lane.b32.xlu0 %v2442, 64
        %v2482 = vpop.permute.xlu0 %2481
        %2483 = vrot.lane.b32.xlu0 %v2443, 64
        %v2484 = vpop.permute.xlu0 %2483
        %2485 = vrot.lane.b32.xlu0 %v2444, 64
        %v2486 = vpop.permute.xlu0 %2485
        %2487 = vrot.lane.b32.xlu0 %v2445, 64
        %v2488 = vpop.permute.xlu0 %2487
        %2489 = vrot.lane.b32.xlu0 %v2446, 64
        %v2490 = vpop.permute.xlu0 %2489
        %2491 = vrot.lane.b32.xlu0 %v2447, 64
        %v2492 = vpop.permute.xlu0 %2491
        %2493 = vrot.lane.b32.xlu0 %v2448, 64
        %v2494 = vpop.permute.xlu0 %2493
        %2495 = vrot.lane.b32.xlu0 %v2449, 64
        %v2496 = vpop.permute.xlu0 %2495
        %2497 = vrot.lane.b32.xlu0 %v2450, 64
        %v2498 = vpop.permute.xlu0 %2497
        %v2515 = vadd.f32 %v2306, %v2468
        %v2516 = vadd.f32 %v2307, %v2470
        %v2517 = vadd.f32 %v2308, %v2472
        %v2518 = vadd.f32 %v2309, %v2474
        %v2519 = vadd.f32 %v2310, %v2476
        %v2520 = vadd.f32 %v2311, %v2478
        %v2521 = vadd.f32 %v2312, %v2480
        %v2522 = vadd.f32 %v2313, %v2482
        %v2523 = vadd.f32 %v2314, %v2484
        %v2524 = vadd.f32 %v2315, %v2486
        %v2525 = vadd.f32 %v2316, %v2488
        %v2526 = vadd.f32 %v2317, %v2490
        %v2527 = vadd.f32 %v2318, %v2492
        %v2528 = vadd.f32 %v2319, %v2494
        %v2529 = vadd.f32 %v2320, %v2496
        %v2530 = vadd.f32 %v2321, %v2498
        %v2531 = vld [vmem:[%s169 + $0x8] sm:$0x3]
        %v2532 = vld [vmem:[%s169 + $0x14] sm:$0x3]
        %v2533 = vld [vmem:[%s169 + $0x20] sm:$0x3]
        %v2534 = vld [vmem:[%s169 + $0x2c] sm:$0x3]
        %v2535 = vld [vmem:[%s169 + $0x38] sm:$0x3]
        %v2536 = vld [vmem:[%s169 + $0x44] sm:$0x3]
        %v2537 = vld [vmem:[%s169 + $0x50] sm:$0x3]
        %v2538 = vld [vmem:[%s169 + $0x5c] sm:$0x3]
        %v2539 = vunpack.c.l.bf16 %v2531
        %v2540 = vunpack.c.l.bf16 %v2532
        %v2541 = vunpack.c.l.bf16 %v2533
        %v2542 = vunpack.c.l.bf16 %v2534
        %v2543 = vunpack.c.l.bf16 %v2535
        %v2544 = vunpack.c.l.bf16 %v2536
        %v2545 = vunpack.c.l.bf16 %v2537
        %v2546 = vunpack.c.l.bf16 %v2538
        %vm2555 = vcmask 1044480
        %v2556 = vrot.slane %v2330, 3
        %v2557 = vrot.slane %v2050, 3
        %v2558 = vsel %vm2555, %v2556, %v2557
        %v2559 = vrot.slane %v2539, 3
        %v2560 = vsel %vm2555, %v2557, %v2559
        %v2561 = vrot.slane %v2331, 3
        %v2562 = vrot.slane %v2052, 3
        %v2563 = vsel %vm2555, %v2561, %v2562
        %v2564 = vrot.slane %v2540, 3
        %v2565 = vsel %vm2555, %v2562, %v2564
        %v2566 = vrot.slane %v2332, 3
        %v2567 = vrot.slane %v2054, 3
        %v2568 = vsel %vm2555, %v2566, %v2567
        %v2569 = vrot.slane %v2541, 3
        %v2570 = vsel %vm2555, %v2567, %v2569
        %v2571 = vrot.slane %v2333, 3
        %v2572 = vrot.slane %v2056, 3
        %v2573 = vsel %vm2555, %v2571, %v2572
        %v2574 = vrot.slane %v2542, 3
        %v2575 = vsel %vm2555, %v2572, %v2574
        %v2576 = vrot.slane %v2334, 3
        %v2577 = vrot.slane %v2058, 3
        %v2578 = vsel %vm2555, %v2576, %v2577
        %v2579 = vrot.slane %v2543, 3
        %v2580 = vsel %vm2555, %v2577, %v2579
        %v2581 = vrot.slane %v2335, 3
        %v2582 = vrot.slane %v2060, 3
        %v2583 = vsel %vm2555, %v2581, %v2582
        %v2584 = vrot.slane %v2544, 3
        %v2585 = vsel %vm2555, %v2582, %v2584
        %v2586 = vrot.slane %v2336, 3
        %v2587 = vrot.slane %v2062, 3
        %v2588 = vsel %vm2555, %v2586, %v2587
        %v2589 = vrot.slane %v2545, 3
        %v2590 = vsel %vm2555, %v2587, %v2589
        %v2591 = vrot.slane %v2337, 3
        %v2592 = vrot.slane %v2064, 3
        %v2593 = vsel %vm2555, %v2591, %v2592
        %v2594 = vrot.slane %v2546, 3
        %v2595 = vsel %vm2555, %v2592, %v2594
        %2596 = vrot.lane.b32.xlu0 %v2558, 96
        %v2597 = vpop.permute.xlu0 %2596
        %2598 = vrot.lane.b32.xlu0 %v2560, 96
        %v2599 = vpop.permute.xlu0 %2598
        %2600 = vrot.lane.b32.xlu0 %v2563, 96
        %v2601 = vpop.permute.xlu0 %2600
        %2602 = vrot.lane.b32.xlu0 %v2565, 96
        %v2603 = vpop.permute.xlu0 %2602
        %2604 = vrot.lane.b32.xlu0 %v2568, 96
        %v2605 = vpop.permute.xlu0 %2604
        %2606 = vrot.lane.b32.xlu0 %v2570, 96
        %v2607 = vpop.permute.xlu0 %2606
        %2608 = vrot.lane.b32.xlu0 %v2573, 96
        %v2609 = vpop.permute.xlu0 %2608
        %2610 = vrot.lane.b32.xlu0 %v2575, 96
        %v2611 = vpop.permute.xlu0 %2610
        %2612 = vrot.lane.b32.xlu0 %v2578, 96
        %v2613 = vpop.permute.xlu0 %2612
        %2614 = vrot.lane.b32.xlu0 %v2580, 96
        %v2615 = vpop.permute.xlu0 %2614
        %2616 = vrot.lane.b32.xlu0 %v2583, 96
        %v2617 = vpop.permute.xlu0 %2616
        %2618 = vrot.lane.b32.xlu0 %v2585, 96
        %v2619 = vpop.permute.xlu0 %2618
        %2620 = vrot.lane.b32.xlu0 %v2588, 96
        %v2621 = vpop.permute.xlu0 %2620
        %2622 = vrot.lane.b32.xlu0 %v2590, 96
        %v2623 = vpop.permute.xlu0 %2622
        %2624 = vrot.lane.b32.xlu0 %v2593, 96
        %v2625 = vpop.permute.xlu0 %2624
        %2626 = vrot.lane.b32.xlu0 %v2595, 96
        %v2627 = vpop.permute.xlu0 %2626
        %v2644 = vmul.f32 %v1617, %v2597
        %v2645 = vmul.f32 %v1621, %v2599
        %v2646 = vmul.f32 %v1625, %v2601
        %v2647 = vmul.f32 %v1629, %v2603
        %v2648 = vmul.f32 %v1633, %v2605
        %v2649 = vmul.f32 %v1637, %v2607
        %v2650 = vmul.f32 %v1641, %v2609
        %v2651 = vmul.f32 %v1645, %v2611
        %v2652 = vmul.f32 %v1649, %v2613
        %v2653 = vmul.f32 %v1653, %v2615
        %v2654 = vmul.f32 %v1657, %v2617
        %v2655 = vmul.f32 %v1661, %v2619
        %v2656 = vmul.f32 %v1665, %v2621
        %v2657 = vmul.f32 %v1669, %v2623
        %v2658 = vmul.f32 %v1673, %v2625
        %v2659 = vmul.f32 %v1677, %v2627
        %2676 = vrot.lane.b32.xlu0 %v2644, 32
        %v2677 = vpop.permute.xlu0 %2676
        %2678 = vrot.lane.b32.xlu0 %v2645, 32
        %v2679 = vpop.permute.xlu0 %2678
        %2680 = vrot.lane.b32.xlu0 %v2646, 32
        %v2681 = vpop.permute.xlu0 %2680
        %2682 = vrot.lane.b32.xlu0 %v2647, 32
        %v2683 = vpop.permute.xlu0 %2682
        %2684 = vrot.lane.b32.xlu0 %v2648, 32
        %v2685 = vpop.permute.xlu0 %2684
        %2686 = vrot.lane.b32.xlu0 %v2649, 32
        %v2687 = vpop.permute.xlu0 %2686
        %2688 = vrot.lane.b32.xlu0 %v2650, 32
        %v2689 = vpop.permute.xlu0 %2688
        %2690 = vrot.lane.b32.xlu0 %v2651, 32
        %v2691 = vpop.permute.xlu0 %2690
        %2692 = vrot.lane.b32.xlu0 %v2652, 32
        %v2693 = vpop.permute.xlu0 %2692
        %2694 = vrot.lane.b32.xlu0 %v2653, 32
        %v2695 = vpop.permute.xlu0 %2694
        %2696 = vrot.lane.b32.xlu0 %v2654, 32
        %v2697 = vpop.permute.xlu0 %2696
        %2698 = vrot.lane.b32.xlu0 %v2655, 32
        %v2699 = vpop.permute.xlu0 %2698
        %2700 = vrot.lane.b32.xlu0 %v2656, 32
        %v2701 = vpop.permute.xlu0 %2700
        %2702 = vrot.lane.b32.xlu0 %v2657, 32
        %v2703 = vpop.permute.xlu0 %2702
        %2704 = vrot.lane.b32.xlu0 %v2658, 32
        %v2705 = vpop.permute.xlu0 %2704
        %2706 = vrot.lane.b32.xlu0 %v2659, 32
        %v2707 = vpop.permute.xlu0 %2706
        %v2724 = vadd.f32 %v2515, %v2677
        %v2725 = vadd.f32 %v2516, %v2679
        %v2726 = vadd.f32 %v2517, %v2681
        %v2727 = vadd.f32 %v2518, %v2683
        %v2728 = vadd.f32 %v2519, %v2685
        %v2729 = vadd.f32 %v2520, %v2687
        %v2730 = vadd.f32 %v2521, %v2689
        %v2731 = vadd.f32 %v2522, %v2691
        %v2732 = vadd.f32 %v2523, %v2693
        %v2733 = vadd.f32 %v2524, %v2695
        %v2734 = vadd.f32 %v2525, %v2697
        %v2735 = vadd.f32 %v2526, %v2699
        %v2736 = vadd.f32 %v2527, %v2701
        %v2737 = vadd.f32 %v2528, %v2703
        %v2738 = vadd.f32 %v2529, %v2705
        %v2739 = vadd.f32 %v2530, %v2707
        %v2740 = vld [vmem:[%s169] sm:$0xc]
        %v2741 = vld [vmem:[%s169 + $0xc] sm:$0xc]
        %v2742 = vld [vmem:[%s169 + $0x18] sm:$0xc]
        %v2743 = vld [vmem:[%s169 + $0x24] sm:$0xc]
        %v2744 = vld [vmem:[%s169 + $0x30] sm:$0xc]
        %v2745 = vld [vmem:[%s169 + $0x3c] sm:$0xc]
        %v2746 = vld [vmem:[%s169 + $0x48] sm:$0xc]
        %v2747 = vld [vmem:[%s169 + $0x54] sm:$0xc]
        %v2748 = vunpack.c.l.bf16 %v2740
        %v2749 = vunpack.c.l.bf16 %v2741
        %v2750 = vunpack.c.l.bf16 %v2742
        %v2751 = vunpack.c.l.bf16 %v2743
        %v2752 = vunpack.c.l.bf16 %v2744
        %v2753 = vunpack.c.l.bf16 %v2745
        %v2754 = vunpack.c.l.bf16 %v2746
        %v2755 = vunpack.c.l.bf16 %v2747
        %vm2764 = vcmask 1043456
        %v2765 = vrot.slane %v2748, 4
        %v2766 = vrot.slane %v2050, 4
        %v2767 = vsel %vm2764, %v2765, %v2766
        %v2768 = vrot.slane %v2539, 4
        %v2769 = vsel %vm2764, %v2766, %v2768
        %v2770 = vrot.slane %v2749, 4
        %v2771 = vrot.slane %v2052, 4
        %v2772 = vsel %vm2764, %v2770, %v2771
        %v2773 = vrot.slane %v2540, 4
        %v2774 = vsel %vm2764, %v2771, %v2773
        %v2775 = vrot.slane %v2750, 4
        %v2776 = vrot.slane %v2054, 4
        %v2777 = vsel %vm2764, %v2775, %v2776
        %v2778 = vrot.slane %v2541, 4
        %v2779 = vsel %vm2764, %v2776, %v2778
        %v2780 = vrot.slane %v2751, 4
        %v2781 = vrot.slane %v2056, 4
        %v2782 = vsel %vm2764, %v2780, %v2781
        %v2783 = vrot.slane %v2542, 4
        %v2784 = vsel %vm2764, %v2781, %v2783
        %v2785 = vrot.slane %v2752, 4
        %v2786 = vrot.slane %v2058, 4
        %v2787 = vsel %vm2764, %v2785, %v2786
        %v2788 = vrot.slane %v2543, 4
        %v2789 = vsel %vm2764, %v2786, %v2788
        %v2790 = vrot.slane %v2753, 4
        %v2791 = vrot.slane %v2060, 4
        %v2792 = vsel %vm2764, %v2790, %v2791
        %v2793 = vrot.slane %v2544, 4
        %v2794 = vsel %vm2764, %v2791, %v2793
        %v2795 = vrot.slane %v2754, 4
        %v2796 = vrot.slane %v2062, 4
        %v2797 = vsel %vm2764, %v2795, %v2796
        %v2798 = vrot.slane %v2545, 4
        %v2799 = vsel %vm2764, %v2796, %v2798
        %v2800 = vrot.slane %v2755, 4
        %v2801 = vrot.slane %v2064, 4
        %v2802 = vsel %vm2764, %v2800, %v2801
        %v2803 = vrot.slane %v2546, 4
        %v2804 = vsel %vm2764, %v2801, %v2803
        %v2821 = vmul.f32 %v1618, %v2767
        %v2822 = vmul.f32 %v1622, %v2769
        %v2823 = vmul.f32 %v1626, %v2772
        %v2824 = vmul.f32 %v1630, %v2774
        %v2825 = vmul.f32 %v1634, %v2777
        %v2826 = vmul.f32 %v1638, %v2779
        %v2827 = vmul.f32 %v1642, %v2782
        %v2828 = vmul.f32 %v1646, %v2784
        %v2829 = vmul.f32 %v1650, %v2787
        %v2830 = vmul.f32 %v1654, %v2789
        %v2831 = vmul.f32 %v1658, %v2792
        %v2832 = vmul.f32 %v1662, %v2794
        %v2833 = vmul.f32 %v1666, %v2797
        %v2834 = vmul.f32 %v1670, %v2799
        %v2835 = vmul.f32 %v1674, %v2802
        %v2836 = vmul.f32 %v1678, %v2804
        %v2837 = vadd.f32 %v2724, %v2821
        %v2838 = vadd.f32 %v2725, %v2822
        %v2839 = vadd.f32 %v2726, %v2823
        %v2840 = vadd.f32 %v2727, %v2824
        %v2841 = vadd.f32 %v2728, %v2825
        %v2842 = vadd.f32 %v2729, %v2826
        %v2843 = vadd.f32 %v2730, %v2827
        %v2844 = vadd.f32 %v2731, %v2828
        %v2845 = vadd.f32 %v2732, %v2829
        %v2846 = vadd.f32 %v2733, %v2830
        %v2847 = vadd.f32 %v2734, %v2831
        %v2848 = vadd.f32 %v2735, %v2832
        %v2849 = vadd.f32 %v2736, %v2833
        %v2850 = vadd.f32 %v2737, %v2834
        %v2851 = vadd.f32 %v2738, %v2835
        %v2852 = vadd.f32 %v2739, %v2836
        %s2853 = scalar_lea.vmem %s169, 12
        %v2854 = vld [vmem:[%s2853] sm:$0xf]
        %v2855 = vld [vmem:[%s2853 + $0x4] sm:$0xf]
        %v2856 = vld [vmem:[%s2853 + $0xc] sm:$0xf]
        %v2857 = vld [vmem:[%s2853 + $0x10] sm:$0xf]
        %v2858 = vld [vmem:[%s2853 + $0x18] sm:$0xf]
        %v2859 = vld [vmem:[%s2853 + $0x1c] sm:$0xf]
        %v2860 = vld [vmem:[%s2853 + $0x24] sm:$0xf]
        %v2861 = vld [vmem:[%s2853 + $0x28] sm:$0xf]
        %v2862 = vld [vmem:[%s2853 + $0x30] sm:$0xf]
        %v2863 = vld [vmem:[%s2853 + $0x34] sm:$0xf]
        %v2864 = vld [vmem:[%s2853 + $0x3c] sm:$0xf]
        %v2865 = vld [vmem:[%s2853 + $0x40] sm:$0xf]
        %v2866 = vld [vmem:[%s2853 + $0x48] sm:$0xf]
        %v2867 = vld [vmem:[%s2853 + $0x4c] sm:$0xf]
        %v2868 = vld [vmem:[%s2853 + $0x54] sm:$0xf]
        %v2869 = vld [vmem:[%s2853 + $0x58] sm:$0xf]
        %v2870 = vunpack.c.l.bf16 %v2854
        %v2871 = vunpack.c.l.bf16 %v2855
        %v2872 = vunpack.c.l.bf16 %v2856
        %v2873 = vunpack.c.l.bf16 %v2857
        %v2874 = vunpack.c.l.bf16 %v2858
        %v2875 = vunpack.c.l.bf16 %v2859
        %v2876 = vunpack.c.l.bf16 %v2860
        %v2877 = vunpack.c.l.bf16 %v2861
        %v2878 = vunpack.c.l.bf16 %v2862
        %v2879 = vunpack.c.l.bf16 %v2863
        %v2880 = vunpack.c.l.bf16 %v2864
        %v2881 = vunpack.c.l.bf16 %v2865
        %v2882 = vunpack.c.l.bf16 %v2866
        %v2883 = vunpack.c.l.bf16 %v2867
        %v2884 = vunpack.c.l.bf16 %v2868
        %v2885 = vunpack.c.l.bf16 %v2869
        %2902 = vrot.lane.b32.xlu0 %v2870, 32
        %v2903 = vpop.permute.xlu0 %2902
        %2904 = vrot.lane.b32.xlu0 %v2871, 32
        %v2905 = vpop.permute.xlu0 %2904
        %2906 = vrot.lane.b32.xlu0 %v2872, 32
        %v2907 = vpop.permute.xlu0 %2906
        %2908 = vrot.lane.b32.xlu0 %v2873, 32
        %v2909 = vpop.permute.xlu0 %2908
        %2910 = vrot.lane.b32.xlu0 %v2874, 32
        %v2911 = vpop.permute.xlu0 %2910
        %2912 = vrot.lane.b32.xlu0 %v2875, 32
        %v2913 = vpop.permute.xlu0 %2912
        %2914 = vrot.lane.b32.xlu0 %v2876, 32
        %v2915 = vpop.permute.xlu0 %2914
        %2916 = vrot.lane.b32.xlu0 %v2877, 32
        %v2917 = vpop.permute.xlu0 %2916
        %2918 = vrot.lane.b32.xlu0 %v2878, 32
        %v2919 = vpop.permute.xlu0 %2918
        %2920 = vrot.lane.b32.xlu0 %v2879, 32
        %v2921 = vpop.permute.xlu0 %2920
        %2922 = vrot.lane.b32.xlu0 %v2880, 32
        %v2923 = vpop.permute.xlu0 %2922
        %2924 = vrot.lane.b32.xlu0 %v2881, 32
        %v2925 = vpop.permute.xlu0 %2924
        %2926 = vrot.lane.b32.xlu0 %v2882, 32
        %v2927 = vpop.permute.xlu0 %2926
        %2928 = vrot.lane.b32.xlu0 %v2883, 32
        %v2929 = vpop.permute.xlu0 %2928
        %2930 = vrot.lane.b32.xlu0 %v2884, 32
        %v2931 = vpop.permute.xlu0 %2930
        %2932 = vrot.lane.b32.xlu0 %v2885, 32
        %v2933 = vpop.permute.xlu0 %2932
        %v2950 = vmul.f32 %v1618, %v2903
        %v2951 = vmul.f32 %v1622, %v2905
        %v2952 = vmul.f32 %v1626, %v2907
        %v2953 = vmul.f32 %v1630, %v2909
        %v2954 = vmul.f32 %v1634, %v2911
        %v2955 = vmul.f32 %v1638, %v2913
        %v2956 = vmul.f32 %v1642, %v2915
        %v2957 = vmul.f32 %v1646, %v2917
        %v2958 = vmul.f32 %v1650, %v2919
        %v2959 = vmul.f32 %v1654, %v2921
        %v2960 = vmul.f32 %v1658, %v2923
        %v2961 = vmul.f32 %v1662, %v2925
        %v2962 = vmul.f32 %v1666, %v2927
        %v2963 = vmul.f32 %v1670, %v2929
        %v2964 = vmul.f32 %v1674, %v2931
        %v2965 = vmul.f32 %v1678, %v2933
        %2982 = vrot.lane.b32.xlu0 %v2950, 96
        %v2983 = vpop.permute.xlu0 %2982
        %2984 = vrot.lane.b32.xlu0 %v2951, 96
        %v2985 = vpop.permute.xlu0 %2984
        %2986 = vrot.lane.b32.xlu0 %v2952, 96
        %v2987 = vpop.permute.xlu0 %2986
        %2988 = vrot.lane.b32.xlu0 %v2953, 96
        %v2989 = vpop.permute.xlu0 %2988
        %2990 = vrot.lane.b32.xlu0 %v2954, 96
        %v2991 = vpop.permute.xlu0 %2990
        %2992 = vrot.lane.b32.xlu0 %v2955, 96
        %v2993 = vpop.permute.xlu0 %2992
        %2994 = vrot.lane.b32.xlu0 %v2956, 96
        %v2995 = vpop.permute.xlu0 %2994
        %2996 = vrot.lane.b32.xlu0 %v2957, 96
        %v2997 = vpop.permute.xlu0 %2996
        %2998 = vrot.lane.b32.xlu0 %v2958, 96
        %v2999 = vpop.permute.xlu0 %2998
        %3000 = vrot.lane.b32.xlu0 %v2959, 96
        %v3001 = vpop.permute.xlu0 %3000
        %3002 = vrot.lane.b32.xlu0 %v2960, 96
        %v3003 = vpop.permute.xlu0 %3002
        %3004 = vrot.lane.b32.xlu0 %v2961, 96
        %v3005 = vpop.permute.xlu0 %3004
        %3006 = vrot.lane.b32.xlu0 %v2962, 96
        %v3007 = vpop.permute.xlu0 %3006
        %3008 = vrot.lane.b32.xlu0 %v2963, 96
        %v3009 = vpop.permute.xlu0 %3008
        %3010 = vrot.lane.b32.xlu0 %v2964, 96
        %v3011 = vpop.permute.xlu0 %3010
        %3012 = vrot.lane.b32.xlu0 %v2965, 96
        %v3013 = vpop.permute.xlu0 %3012
        %v3030 = vadd.f32 %v2837, %v2983
        %v3031 = vadd.f32 %v2838, %v2985
        %v3032 = vadd.f32 %v2839, %v2987
        %v3033 = vadd.f32 %v2840, %v2989
        %v3034 = vadd.f32 %v2841, %v2991
        %v3035 = vadd.f32 %v2842, %v2993
        %v3036 = vadd.f32 %v2843, %v2995
        %v3037 = vadd.f32 %v2844, %v2997
        %v3038 = vadd.f32 %v2845, %v2999
        %v3039 = vadd.f32 %v2846, %v3001
        %v3040 = vadd.f32 %v2847, %v3003
        %v3041 = vadd.f32 %v2848, %v3005
        %v3042 = vadd.f32 %v2849, %v3007
        %v3043 = vadd.f32 %v2850, %v3009
        %v3044 = vadd.f32 %v2851, %v3011
        %v3045 = vadd.f32 %v2852, %v3013
        %v3046 = vld [vmem:[%s2853 + $0x8] sm:$0x1]
        %v3047 = vld [vmem:[%s2853 + $0x14] sm:$0x1]
        %v3048 = vld [vmem:[%s2853 + $0x20] sm:$0x1]
        %v3049 = vld [vmem:[%s2853 + $0x2c] sm:$0x1]
        %v3050 = vld [vmem:[%s2853 + $0x38] sm:$0x1]
        %v3051 = vld [vmem:[%s2853 + $0x44] sm:$0x1]
        %v3052 = vld [vmem:[%s2853 + $0x50] sm:$0x1]
        %v3053 = vld [vmem:[%s2853 + $0x5c] sm:$0x1]
        %v3054 = vunpack.c.l.bf16 %v3046
        %v3055 = vunpack.c.l.bf16 %v3047
        %v3056 = vunpack.c.l.bf16 %v3048
        %v3057 = vunpack.c.l.bf16 %v3049
        %v3058 = vunpack.c.l.bf16 %v3050
        %v3059 = vunpack.c.l.bf16 %v3051
        %v3060 = vunpack.c.l.bf16 %v3052
        %v3061 = vunpack.c.l.bf16 %v3053
        %v3070 = vrot.slane %v2870, 1
        %v3071 = vrot.slane %v2871, 1
        %v3072 = vsel %vm2137, %v3070, %v3071
        %v3073 = vrot.slane %v3054, 1
        %v3074 = vsel %vm2137, %v3071, %v3073
        %v3075 = vrot.slane %v2872, 1
        %v3076 = vrot.slane %v2873, 1
        %v3077 = vsel %vm2137, %v3075, %v3076
        %v3078 = vrot.slane %v3055, 1
        %v3079 = vsel %vm2137, %v3076, %v3078
        %v3080 = vrot.slane %v2874, 1
        %v3081 = vrot.slane %v2875, 1
        %v3082 = vsel %vm2137, %v3080, %v3081
        %v3083 = vrot.slane %v3056, 1
        %v3084 = vsel %vm2137, %v3081, %v3083
        %v3085 = vrot.slane %v2876, 1
        %v3086 = vrot.slane %v2877, 1
        %v3087 = vsel %vm2137, %v3085, %v3086
        %v3088 = vrot.slane %v3057, 1
        %v3089 = vsel %vm2137, %v3086, %v3088
        %v3090 = vrot.slane %v2878, 1
        %v3091 = vrot.slane %v2879, 1
        %v3092 = vsel %vm2137, %v3090, %v3091
        %v3093 = vrot.slane %v3058, 1
        %v3094 = vsel %vm2137, %v3091, %v3093
        %v3095 = vrot.slane %v2880, 1
        %v3096 = vrot.slane %v2881, 1
        %v3097 = vsel %vm2137, %v3095, %v3096
        %v3098 = vrot.slane %v3059, 1
        %v3099 = vsel %vm2137, %v3096, %v3098
        %v3100 = vrot.slane %v2882, 1
        %v3101 = vrot.slane %v2883, 1
        %v3102 = vsel %vm2137, %v3100, %v3101
        %v3103 = vrot.slane %v3060, 1
        %v3104 = vsel %vm2137, %v3101, %v3103
        %v3105 = vrot.slane %v2884, 1
        %v3106 = vrot.slane %v2885, 1
        %v3107 = vsel %vm2137, %v3105, %v3106
        %v3108 = vrot.slane %v3061, 1
        %v3109 = vsel %vm2137, %v3106, %v3108
        %3110 = vrot.lane.b32.xlu0 %v3072, 64
        %v3111 = vpop.permute.xlu0 %3110
        %3112 = vrot.lane.b32.xlu0 %v3074, 64
        %v3113 = vpop.permute.xlu0 %3112
        %3114 = vrot.lane.b32.xlu0 %v3077, 64
        %v3115 = vpop.permute.xlu0 %3114
        %3116 = vrot.lane.b32.xlu0 %v3079, 64
        %v3117 = vpop.permute.xlu0 %3116
        %3118 = vrot.lane.b32.xlu0 %v3082, 64
        %v3119 = vpop.permute.xlu0 %3118
        %3120 = vrot.lane.b32.xlu0 %v3084, 64
        %v3121 = vpop.permute.xlu0 %3120
        %3122 = vrot.lane.b32.xlu0 %v3087, 64
        %v3123 = vpop.permute.xlu0 %3122
        %3124 = vrot.lane.b32.xlu0 %v3089, 64
        %v3125 = vpop.permute.xlu0 %3124
        %3126 = vrot.lane.b32.xlu0 %v3092, 64
        %v3127 = vpop.permute.xlu0 %3126
        %3128 = vrot.lane.b32.xlu0 %v3094, 64
        %v3129 = vpop.permute.xlu0 %3128
        %3130 = vrot.lane.b32.xlu0 %v3097, 64
        %v3131 = vpop.permute.xlu0 %3130
        %3132 = vrot.lane.b32.xlu0 %v3099, 64
        %v3133 = vpop.permute.xlu0 %3132
        %3134 = vrot.lane.b32.xlu0 %v3102, 64
        %v3135 = vpop.permute.xlu0 %3134
        %3136 = vrot.lane.b32.xlu0 %v3104, 64
        %v3137 = vpop.permute.xlu0 %3136
        %3138 = vrot.lane.b32.xlu0 %v3107, 64
        %v3139 = vpop.permute.xlu0 %3138
        %3140 = vrot.lane.b32.xlu0 %v3109, 64
        %v3141 = vpop.permute.xlu0 %3140
        %v3158 = vmul.f32 %v1618, %v3111
        %v3159 = vmul.f32 %v1622, %v3113
        %v3160 = vmul.f32 %v1626, %v3115
        %v3161 = vmul.f32 %v1630, %v3117
        %v3162 = vmul.f32 %v1634, %v3119
        %v3163 = vmul.f32 %v1638, %v3121
        %v3164 = vmul.f32 %v1642, %v3123
        %v3165 = vmul.f32 %v1646, %v3125
        %v3166 = vmul.f32 %v1650, %v3127
        %v3167 = vmul.f32 %v1654, %v3129
        %v3168 = vmul.f32 %v1658, %v3131
        %v3169 = vmul.f32 %v1662, %v3133
        %v3170 = vmul.f32 %v1666, %v3135
        %v3171 = vmul.f32 %v1670, %v3137
        %v3172 = vmul.f32 %v1674, %v3139
        %v3173 = vmul.f32 %v1678, %v3141
        %3190 = vrot.lane.b32.xlu0 %v3158, 64
        %v3191 = vpop.permute.xlu0 %3190
        %3192 = vrot.lane.b32.xlu0 %v3159, 64
        %v3193 = vpop.permute.xlu0 %3192
        %3194 = vrot.lane.b32.xlu0 %v3160, 64
        %v3195 = vpop.permute.xlu0 %3194
        %3196 = vrot.lane.b32.xlu0 %v3161, 64
        %v3197 = vpop.permute.xlu0 %3196
        %3198 = vrot.lane.b32.xlu0 %v3162, 64
        %v3199 = vpop.permute.xlu0 %3198
        %3200 = vrot.lane.b32.xlu0 %v3163, 64
        %v3201 = vpop.permute.xlu0 %3200
        %3202 = vrot.lane.b32.xlu0 %v3164, 64
        %v3203 = vpop.permute.xlu0 %3202
        %3204 = vrot.lane.b32.xlu0 %v3165, 64
        %v3205 = vpop.permute.xlu0 %3204
        %3206 = vrot.lane.b32.xlu0 %v3166, 64
        %v3207 = vpop.permute.xlu0 %3206
        %3208 = vrot.lane.b32.xlu0 %v3167, 64
        %v3209 = vpop.permute.xlu0 %3208
        %3210 = vrot.lane.b32.xlu0 %v3168, 64
        %v3211 = vpop.permute.xlu0 %3210
        %3212 = vrot.lane.b32.xlu0 %v3169, 64
        %v3213 = vpop.permute.xlu0 %3212
        %3214 = vrot.lane.b32.xlu0 %v3170, 64
        %v3215 = vpop.permute.xlu0 %3214
        %3216 = vrot.lane.b32.xlu0 %v3171, 64
        %v3217 = vpop.permute.xlu0 %3216
        %3218 = vrot.lane.b32.xlu0 %v3172, 64
        %v3219 = vpop.permute.xlu0 %3218
        %3220 = vrot.lane.b32.xlu0 %v3173, 64
        %v3221 = vpop.permute.xlu0 %3220
        %v3238 = vadd.f32 %v3030, %v3191
        %v3239 = vadd.f32 %v3031, %v3193
        %v3240 = vadd.f32 %v3032, %v3195
        %v3241 = vadd.f32 %v3033, %v3197
        %v3242 = vadd.f32 %v3034, %v3199
        %v3243 = vadd.f32 %v3035, %v3201
        %v3244 = vadd.f32 %v3036, %v3203
        %v3245 = vadd.f32 %v3037, %v3205
        %v3246 = vadd.f32 %v3038, %v3207
        %v3247 = vadd.f32 %v3039, %v3209
        %v3248 = vadd.f32 %v3040, %v3211
        %v3249 = vadd.f32 %v3041, %v3213
        %v3250 = vadd.f32 %v3042, %v3215
        %v3251 = vadd.f32 %v3043, %v3217
        %v3252 = vadd.f32 %v3044, %v3219
        %v3253 = vadd.f32 %v3045, %v3221
        %v3254 = vld [vmem:[%s2853] sm:$0xe]
        %v3255 = vld [vmem:[%s2853 + $0xc] sm:$0xe]
        %v3256 = vld [vmem:[%s2853 + $0x18] sm:$0xe]
        %v3257 = vld [vmem:[%s2853 + $0x24] sm:$0xe]
        %v3258 = vld [vmem:[%s2853 + $0x30] sm:$0xe]
        %v3259 = vld [vmem:[%s2853 + $0x3c] sm:$0xe]
        %v3260 = vld [vmem:[%s2853 + $0x48] sm:$0xe]
        %v3261 = vld [vmem:[%s2853 + $0x54] sm:$0xe]
        %v3262 = vunpack.c.l.bf16 %v3254
        %v3263 = vunpack.c.l.bf16 %v3255
        %v3264 = vunpack.c.l.bf16 %v3256
        %v3265 = vunpack.c.l.bf16 %v3257
        %v3266 = vunpack.c.l.bf16 %v3258
        %v3267 = vunpack.c.l.bf16 %v3259
        %v3268 = vunpack.c.l.bf16 %v3260
        %v3269 = vunpack.c.l.bf16 %v3261
        %v3278 = vrot.slane %v3262, 2
        %v3279 = vrot.slane %v2871, 2
        %v3280 = vsel %vm2346, %v3278, %v3279
        %v3281 = vrot.slane %v3054, 2
        %v3282 = vsel %vm2346, %v3279, %v3281
        %v3283 = vrot.slane %v3263, 2
        %v3284 = vrot.slane %v2873, 2
        %v3285 = vsel %vm2346, %v3283, %v3284
        %v3286 = vrot.slane %v3055, 2
        %v3287 = vsel %vm2346, %v3284, %v3286
        %v3288 = vrot.slane %v3264, 2
        %v3289 = vrot.slane %v2875, 2
        %v3290 = vsel %vm2346, %v3288, %v3289
        %v3291 = vrot.slane %v3056, 2
        %v3292 = vsel %vm2346, %v3289, %v3291
        %v3293 = vrot.slane %v3265, 2
        %v3294 = vrot.slane %v2877, 2
        %v3295 = vsel %vm2346, %v3293, %v3294
        %v3296 = vrot.slane %v3057, 2
        %v3297 = vsel %vm2346, %v3294, %v3296
        %v3298 = vrot.slane %v3266, 2
        %v3299 = vrot.slane %v2879, 2
        %v3300 = vsel %vm2346, %v3298, %v3299
        %v3301 = vrot.slane %v3058, 2
        %v3302 = vsel %vm2346, %v3299, %v3301
        %v3303 = vrot.slane %v3267, 2
        %v3304 = vrot.slane %v2881, 2
        %v3305 = vsel %vm2346, %v3303, %v3304
        %v3306 = vrot.slane %v3059, 2
        %v3307 = vsel %vm2346, %v3304, %v3306
        %v3308 = vrot.slane %v3268, 2
        %v3309 = vrot.slane %v2883, 2
        %v3310 = vsel %vm2346, %v3308, %v3309
        %v3311 = vrot.slane %v3060, 2
        %v3312 = vsel %vm2346, %v3309, %v3311
        %v3313 = vrot.slane %v3269, 2
        %v3314 = vrot.slane %v2885, 2
        %v3315 = vsel %vm2346, %v3313, %v3314
        %v3316 = vrot.slane %v3061, 2
        %v3317 = vsel %vm2346, %v3314, %v3316
        %3318 = vrot.lane.b32.xlu0 %v3280, 96
        %v3319 = vpop.permute.xlu0 %3318
        %3320 = vrot.lane.b32.xlu0 %v3282, 96
        %v3321 = vpop.permute.xlu0 %3320
        %3322 = vrot.lane.b32.xlu0 %v3285, 96
        %v3323 = vpop.permute.xlu0 %3322
        %3324 = vrot.lane.b32.xlu0 %v3287, 96
        %v3325 = vpop.permute.xlu0 %3324
        %3326 = vrot.lane.b32.xlu0 %v3290, 96
        %v3327 = vpop.permute.xlu0 %3326
        %3328 = vrot.lane.b32.xlu0 %v3292, 96
        %v3329 = vpop.permute.xlu0 %3328
        %3330 = vrot.lane.b32.xlu0 %v3295, 96
        %v3331 = vpop.permute.xlu0 %3330
        %3332 = vrot.lane.b32.xlu0 %v3297, 96
        %v3333 = vpop.permute.xlu0 %3332
        %3334 = vrot.lane.b32.xlu0 %v3300, 96
        %v3335 = vpop.permute.xlu0 %3334
        %3336 = vrot.lane.b32.xlu0 %v3302, 96
        %v3337 = vpop.permute.xlu0 %3336
        %3338 = vrot.lane.b32.xlu0 %v3305, 96
        %v3339 = vpop.permute.xlu0 %3338
        %3340 = vrot.lane.b32.xlu0 %v3307, 96
        %v3341 = vpop.permute.xlu0 %3340
        %3342 = vrot.lane.b32.xlu0 %v3310, 96
        %v3343 = vpop.permute.xlu0 %3342
        %3344 = vrot.lane.b32.xlu0 %v3312, 96
        %v3345 = vpop.permute.xlu0 %3344
        %3346 = vrot.lane.b32.xlu0 %v3315, 96
        %v3347 = vpop.permute.xlu0 %3346
        %3348 = vrot.lane.b32.xlu0 %v3317, 96
        %v3349 = vpop.permute.xlu0 %3348
        %v3366 = vmul.f32 %v1618, %v3319
        %v3367 = vmul.f32 %v1622, %v3321
        %v3368 = vmul.f32 %v1626, %v3323
        %v3369 = vmul.f32 %v1630, %v3325
        %v3370 = vmul.f32 %v1634, %v3327
        %v3371 = vmul.f32 %v1638, %v3329
        %v3372 = vmul.f32 %v1642, %v3331
        %v3373 = vmul.f32 %v1646, %v3333
        %v3374 = vmul.f32 %v1650, %v3335
        %v3375 = vmul.f32 %v1654, %v3337
        %v3376 = vmul.f32 %v1658, %v3339
        %v3377 = vmul.f32 %v1662, %v3341
        %v3378 = vmul.f32 %v1666, %v3343
        %v3379 = vmul.f32 %v1670, %v3345
        %v3380 = vmul.f32 %v1674, %v3347
        %v3381 = vmul.f32 %v1678, %v3349
        %3398 = vrot.lane.b32.xlu0 %v3366, 32
        %v3399 = vpop.permute.xlu0 %3398
        %3400 = vrot.lane.b32.xlu0 %v3367, 32
        %v3401 = vpop.permute.xlu0 %3400
        %3402 = vrot.lane.b32.xlu0 %v3368, 32
        %v3403 = vpop.permute.xlu0 %3402
        %3404 = vrot.lane.b32.xlu0 %v3369, 32
        %v3405 = vpop.permute.xlu0 %3404
        %3406 = vrot.lane.b32.xlu0 %v3370, 32
        %v3407 = vpop.permute.xlu0 %3406
        %3408 = vrot.lane.b32.xlu0 %v3371, 32
        %v3409 = vpop.permute.xlu0 %3408
        %3410 = vrot.lane.b32.xlu0 %v3372, 32
        %v3411 = vpop.permute.xlu0 %3410
        %3412 = vrot.lane.b32.xlu0 %v3373, 32
        %v3413 = vpop.permute.xlu0 %3412
        %3414 = vrot.lane.b32.xlu0 %v3374, 32
        %v3415 = vpop.permute.xlu0 %3414
        %3416 = vrot.lane.b32.xlu0 %v3375, 32
        %v3417 = vpop.permute.xlu0 %3416
        %3418 = vrot.lane.b32.xlu0 %v3376, 32
        %v3419 = vpop.permute.xlu0 %3418
        %3420 = vrot.lane.b32.xlu0 %v3377, 32
        %v3421 = vpop.permute.xlu0 %3420
        %3422 = vrot.lane.b32.xlu0 %v3378, 32
        %v3423 = vpop.permute.xlu0 %3422
        %3424 = vrot.lane.b32.xlu0 %v3379, 32
        %v3425 = vpop.permute.xlu0 %3424
        %3426 = vrot.lane.b32.xlu0 %v3380, 32
        %v3427 = vpop.permute.xlu0 %3426
        %3428 = vrot.lane.b32.xlu0 %v3381, 32
        %v3429 = vpop.permute.xlu0 %3428
        %v3446 = vadd.f32 %v3238, %v3399
        %v3447 = vadd.f32 %v3239, %v3401
        %v3448 = vadd.f32 %v3240, %v3403
        %v3449 = vadd.f32 %v3241, %v3405
        %v3450 = vadd.f32 %v3242, %v3407
        %v3451 = vadd.f32 %v3243, %v3409
        %v3452 = vadd.f32 %v3244, %v3411
        %v3453 = vadd.f32 %v3245, %v3413
        %v3454 = vadd.f32 %v3246, %v3415
        %v3455 = vadd.f32 %v3247, %v3417
        %v3456 = vadd.f32 %v3248, %v3419
        %v3457 = vadd.f32 %v3249, %v3421
        %v3458 = vadd.f32 %v3250, %v3423
        %v3459 = vadd.f32 %v3251, %v3425
        %v3460 = vadd.f32 %v3252, %v3427
        %v3461 = vadd.f32 %v3253, %v3429
        %v3462 = vld [vmem:[%s2853 + $0x8] sm:$0x3]
        %v3463 = vld [vmem:[%s2853 + $0x14] sm:$0x3]
        %v3464 = vld [vmem:[%s2853 + $0x20] sm:$0x3]
        %v3465 = vld [vmem:[%s2853 + $0x2c] sm:$0x3]
        %v3466 = vld [vmem:[%s2853 + $0x38] sm:$0x3]
        %v3467 = vld [vmem:[%s2853 + $0x44] sm:$0x3]
        %v3468 = vld [vmem:[%s2853 + $0x50] sm:$0x3]
        %v3469 = vld [vmem:[%s2853 + $0x5c] sm:$0x3]
        %v3470 = vunpack.c.l.bf16 %v3462
        %v3471 = vunpack.c.l.bf16 %v3463
        %v3472 = vunpack.c.l.bf16 %v3464
        %v3473 = vunpack.c.l.bf16 %v3465
        %v3474 = vunpack.c.l.bf16 %v3466
        %v3475 = vunpack.c.l.bf16 %v3467
        %v3476 = vunpack.c.l.bf16 %v3468
        %v3477 = vunpack.c.l.bf16 %v3469
        %v3486 = vrot.slane %v3262, 3
        %v3487 = vrot.slane %v2871, 3
        %v3488 = vsel %vm2555, %v3486, %v3487
        %v3489 = vrot.slane %v3470, 3
        %v3490 = vsel %vm2555, %v3487, %v3489
        %v3491 = vrot.slane %v3263, 3
        %v3492 = vrot.slane %v2873, 3
        %v3493 = vsel %vm2555, %v3491, %v3492
        %v3494 = vrot.slane %v3471, 3
        %v3495 = vsel %vm2555, %v3492, %v3494
        %v3496 = vrot.slane %v3264, 3
        %v3497 = vrot.slane %v2875, 3
        %v3498 = vsel %vm2555, %v3496, %v3497
        %v3499 = vrot.slane %v3472, 3
        %v3500 = vsel %vm2555, %v3497, %v3499
        %v3501 = vrot.slane %v3265, 3
        %v3502 = vrot.slane %v2877, 3
        %v3503 = vsel %vm2555, %v3501, %v3502
        %v3504 = vrot.slane %v3473, 3
        %v3505 = vsel %vm2555, %v3502, %v3504
        %v3506 = vrot.slane %v3266, 3
        %v3507 = vrot.slane %v2879, 3
        %v3508 = vsel %vm2555, %v3506, %v3507
        %v3509 = vrot.slane %v3474, 3
        %v3510 = vsel %vm2555, %v3507, %v3509
        %v3511 = vrot.slane %v3267, 3
        %v3512 = vrot.slane %v2881, 3
        %v3513 = vsel %vm2555, %v3511, %v3512
        %v3514 = vrot.slane %v3475, 3
        %v3515 = vsel %vm2555, %v3512, %v3514
        %v3516 = vrot.slane %v3268, 3
        %v3517 = vrot.slane %v2883, 3
        %v3518 = vsel %vm2555, %v3516, %v3517
        %v3519 = vrot.slane %v3476, 3
        %v3520 = vsel %vm2555, %v3517, %v3519
        %v3521 = vrot.slane %v3269, 3
        %v3522 = vrot.slane %v2885, 3
        %v3523 = vsel %vm2555, %v3521, %v3522
        %v3524 = vrot.slane %v3477, 3
        %v3525 = vsel %vm2555, %v3522, %v3524
        %v3542 = vmul.f32 %v1619, %v3488
        %v3543 = vmul.f32 %v1623, %v3490
        %v3544 = vmul.f32 %v1627, %v3493
        %v3545 = vmul.f32 %v1631, %v3495
        %v3546 = vmul.f32 %v1635, %v3498
        %v3547 = vmul.f32 %v1639, %v3500
        %v3548 = vmul.f32 %v1643, %v3503
        %v3549 = vmul.f32 %v1647, %v3505
        %v3550 = vmul.f32 %v1651, %v3508
        %v3551 = vmul.f32 %v1655, %v3510
        %v3552 = vmul.f32 %v1659, %v3513
        %v3553 = vmul.f32 %v1663, %v3515
        %v3554 = vmul.f32 %v1667, %v3518
        %v3555 = vmul.f32 %v1671, %v3520
        %v3556 = vmul.f32 %v1675, %v3523
        %v3557 = vmul.f32 %v1679, %v3525
        %v3558 = vadd.f32 %v3446, %v3542
        %v3559 = vadd.f32 %v3447, %v3543
        %v3560 = vadd.f32 %v3448, %v3544
        %v3561 = vadd.f32 %v3449, %v3545
        %v3562 = vadd.f32 %v3450, %v3546
        %v3563 = vadd.f32 %v3451, %v3547
        %v3564 = vadd.f32 %v3452, %v3548
        %v3565 = vadd.f32 %v3453, %v3549
        %v3566 = vadd.f32 %v3454, %v3550
        %v3567 = vadd.f32 %v3455, %v3551
        %v3568 = vadd.f32 %v3456, %v3552
        %v3569 = vadd.f32 %v3457, %v3553
        %v3570 = vadd.f32 %v3458, %v3554
        %v3571 = vadd.f32 %v3459, %v3555
        %v3572 = vadd.f32 %v3460, %v3556
        %v3573 = vadd.f32 %v3461, %v3557
        %v3574 = vld [vmem:[%s2853] sm:$0xc]
        %v3575 = vld [vmem:[%s2853 + $0xc] sm:$0xc]
        %v3576 = vld [vmem:[%s2853 + $0x18] sm:$0xc]
        %v3577 = vld [vmem:[%s2853 + $0x24] sm:$0xc]
        %v3578 = vld [vmem:[%s2853 + $0x30] sm:$0xc]
        %v3579 = vld [vmem:[%s2853 + $0x3c] sm:$0xc]
        %v3580 = vld [vmem:[%s2853 + $0x48] sm:$0xc]
        %v3581 = vld [vmem:[%s2853 + $0x54] sm:$0xc]
        %v3582 = vunpack.c.l.bf16 %v3574
        %v3583 = vunpack.c.l.bf16 %v3575
        %v3584 = vunpack.c.l.bf16 %v3576
        %v3585 = vunpack.c.l.bf16 %v3577
        %v3586 = vunpack.c.l.bf16 %v3578
        %v3587 = vunpack.c.l.bf16 %v3579
        %v3588 = vunpack.c.l.bf16 %v3580
        %v3589 = vunpack.c.l.bf16 %v3581
        %v3598 = vrot.slane %v3582, 4
        %v3599 = vrot.slane %v2871, 4
        %v3600 = vsel %vm2764, %v3598, %v3599
        %v3601 = vrot.slane %v3470, 4
        %v3602 = vsel %vm2764, %v3599, %v3601
        %v3603 = vrot.slane %v3583, 4
        %v3604 = vrot.slane %v2873, 4
        %v3605 = vsel %vm2764, %v3603, %v3604
        %v3606 = vrot.slane %v3471, 4
        %v3607 = vsel %vm2764, %v3604, %v3606
        %v3608 = vrot.slane %v3584, 4
        %v3609 = vrot.slane %v2875, 4
        %v3610 = vsel %vm2764, %v3608, %v3609
        %v3611 = vrot.slane %v3472, 4
        %v3612 = vsel %vm2764, %v3609, %v3611
        %v3613 = vrot.slane %v3585, 4
        %v3614 = vrot.slane %v2877, 4
        %v3615 = vsel %vm2764, %v3613, %v3614
        %v3616 = vrot.slane %v3473, 4
        %v3617 = vsel %vm2764, %v3614, %v3616
        %v3618 = vrot.slane %v3586, 4
        %v3619 = vrot.slane %v2879, 4
        %v3620 = vsel %vm2764, %v3618, %v3619
        %v3621 = vrot.slane %v3474, 4
        %v3622 = vsel %vm2764, %v3619, %v3621
        %v3623 = vrot.slane %v3587, 4
        %v3624 = vrot.slane %v2881, 4
        %v3625 = vsel %vm2764, %v3623, %v3624
        %v3626 = vrot.slane %v3475, 4
        %v3627 = vsel %vm2764, %v3624, %v3626
        %v3628 = vrot.slane %v3588, 4
        %v3629 = vrot.slane %v2883, 4
        %v3630 = vsel %vm2764, %v3628, %v3629
        %v3631 = vrot.slane %v3476, 4
        %v3632 = vsel %vm2764, %v3629, %v3631
        %v3633 = vrot.slane %v3589, 4
        %v3634 = vrot.slane %v2885, 4
        %v3635 = vsel %vm2764, %v3633, %v3634
        %v3636 = vrot.slane %v3477, 4
        %v3637 = vsel %vm2764, %v3634, %v3636
        %3638 = vrot.lane.b32.xlu0 %v3600, 32
        %v3639 = vpop.permute.xlu0 %3638
        %3640 = vrot.lane.b32.xlu0 %v3602, 32
        %v3641 = vpop.permute.xlu0 %3640
        %3642 = vrot.lane.b32.xlu0 %v3605, 32
        %v3643 = vpop.permute.xlu0 %3642
        %3644 = vrot.lane.b32.xlu0 %v3607, 32
        %v3645 = vpop.permute.xlu0 %3644
        %3646 = vrot.lane.b32.xlu0 %v3610, 32
        %v3647 = vpop.permute.xlu0 %3646
        %3648 = vrot.lane.b32.xlu0 %v3612, 32
        %v3649 = vpop.permute.xlu0 %3648
        %3650 = vrot.lane.b32.xlu0 %v3615, 32
        %v3651 = vpop.permute.xlu0 %3650
        %3652 = vrot.lane.b32.xlu0 %v3617, 32
        %v3653 = vpop.permute.xlu0 %3652
        %3654 = vrot.lane.b32.xlu0 %v3620, 32
        %v3655 = vpop.permute.xlu0 %3654
        %3656 = vrot.lane.b32.xlu0 %v3622, 32
        %v3657 = vpop.permute.xlu0 %3656
        %3658 = vrot.lane.b32.xlu0 %v3625, 32
        %v3659 = vpop.permute.xlu0 %3658
        %3660 = vrot.lane.b32.xlu0 %v3627, 32
        %v3661 = vpop.permute.xlu0 %3660
        %3662 = vrot.lane.b32.xlu0 %v3630, 32
        %v3663 = vpop.permute.xlu0 %3662
        %3664 = vrot.lane.b32.xlu0 %v3632, 32
        %v3665 = vpop.permute.xlu0 %3664
        %3666 = vrot.lane.b32.xlu0 %v3635, 32
        %v3667 = vpop.permute.xlu0 %3666
        %3668 = vrot.lane.b32.xlu0 %v3637, 32
        %v3669 = vpop.permute.xlu0 %3668
        %v3686 = vmul.f32 %v1619, %v3639
        %v3687 = vmul.f32 %v1623, %v3641
        %v3688 = vmul.f32 %v1627, %v3643
        %v3689 = vmul.f32 %v1631, %v3645
        %v3690 = vmul.f32 %v1635, %v3647
        %v3691 = vmul.f32 %v1639, %v3649
        %v3692 = vmul.f32 %v1643, %v3651
        %v3693 = vmul.f32 %v1647, %v3653
        %v3694 = vmul.f32 %v1651, %v3655
        %v3695 = vmul.f32 %v1655, %v3657
        %v3696 = vmul.f32 %v1659, %v3659
        %v3697 = vmul.f32 %v1663, %v3661
        %v3698 = vmul.f32 %v1667, %v3663
        %v3699 = vmul.f32 %v1671, %v3665
        %v3700 = vmul.f32 %v1675, %v3667
        %v3701 = vmul.f32 %v1679, %v3669
        %3718 = vrot.lane.b32.xlu0 %v3686, 96
        %v3719 = vpop.permute.xlu0 %3718
        %3720 = vrot.lane.b32.xlu0 %v3687, 96
        %v3721 = vpop.permute.xlu0 %3720
        %3722 = vrot.lane.b32.xlu0 %v3688, 96
        %v3723 = vpop.permute.xlu0 %3722
        %3724 = vrot.lane.b32.xlu0 %v3689, 96
        %v3725 = vpop.permute.xlu0 %3724
        %3726 = vrot.lane.b32.xlu0 %v3690, 96
        %v3727 = vpop.permute.xlu0 %3726
        %3728 = vrot.lane.b32.xlu0 %v3691, 96
        %v3729 = vpop.permute.xlu0 %3728
        %3730 = vrot.lane.b32.xlu0 %v3692, 96
        %v3731 = vpop.permute.xlu0 %3730
        %3732 = vrot.lane.b32.xlu0 %v3693, 96
        %v3733 = vpop.permute.xlu0 %3732
        %3734 = vrot.lane.b32.xlu0 %v3694, 96
        %v3735 = vpop.permute.xlu0 %3734
        %3736 = vrot.lane.b32.xlu0 %v3695, 96
        %v3737 = vpop.permute.xlu0 %3736
        %3738 = vrot.lane.b32.xlu0 %v3696, 96
        %v3739 = vpop.permute.xlu0 %3738
        %3740 = vrot.lane.b32.xlu0 %v3697, 96
        %v3741 = vpop.permute.xlu0 %3740
        %3742 = vrot.lane.b32.xlu0 %v3698, 96
        %v3743 = vpop.permute.xlu0 %3742
        %3744 = vrot.lane.b32.xlu0 %v3699, 96
        %v3745 = vpop.permute.xlu0 %3744
        %3746 = vrot.lane.b32.xlu0 %v3700, 96
        %v3747 = vpop.permute.xlu0 %3746
        %3748 = vrot.lane.b32.xlu0 %v3701, 96
        %v3749 = vpop.permute.xlu0 %3748
        %v3766 = vadd.f32 %v3558, %v3719
        %v3767 = vadd.f32 %v3559, %v3721
        %v3768 = vadd.f32 %v3560, %v3723
        %v3769 = vadd.f32 %v3561, %v3725
        %v3770 = vadd.f32 %v3562, %v3727
        %v3771 = vadd.f32 %v3563, %v3729
        %v3772 = vadd.f32 %v3564, %v3731
        %v3773 = vadd.f32 %v3565, %v3733
        %v3774 = vadd.f32 %v3566, %v3735
        %v3775 = vadd.f32 %v3567, %v3737
        %v3776 = vadd.f32 %v3568, %v3739
        %v3777 = vadd.f32 %v3569, %v3741
        %v3778 = vadd.f32 %v3570, %v3743
        %v3779 = vadd.f32 %v3571, %v3745
        %v3780 = vadd.f32 %v3572, %v3747
        %v3781 = vadd.f32 %v3573, %v3749
        %v3782 = vld [vmem:[%s171] sm:$0xf]
        %v3783 = vld [vmem:[%s171 + $0x4] sm:$0xf]
        %v3784 = vld [vmem:[%s171 + $0xc] sm:$0xf]
        %v3785 = vld [vmem:[%s171 + $0x10] sm:$0xf]
        %v3786 = vld [vmem:[%s171 + $0x18] sm:$0xf]
        %v3787 = vld [vmem:[%s171 + $0x1c] sm:$0xf]
        %v3788 = vld [vmem:[%s171 + $0x24] sm:$0xf]
        %v3789 = vld [vmem:[%s171 + $0x28] sm:$0xf]
        %v3790 = vld [vmem:[%s171 + $0x30] sm:$0xf]
        %v3791 = vld [vmem:[%s171 + $0x34] sm:$0xf]
        %v3792 = vld [vmem:[%s171 + $0x3c] sm:$0xf]
        %v3793 = vld [vmem:[%s171 + $0x40] sm:$0xf]
        %v3794 = vld [vmem:[%s171 + $0x48] sm:$0xf]
        %v3795 = vld [vmem:[%s171 + $0x4c] sm:$0xf]
        %v3796 = vld [vmem:[%s171 + $0x54] sm:$0xf]
        %v3797 = vld [vmem:[%s171 + $0x58] sm:$0xf]
        %v3798 = vunpack.c.l.bf16 %v3782
        %v3799 = vunpack.c.l.bf16 %v3783
        %v3800 = vunpack.c.l.bf16 %v3784
        %v3801 = vunpack.c.l.bf16 %v3785
        %v3802 = vunpack.c.l.bf16 %v3786
        %v3803 = vunpack.c.l.bf16 %v3787
        %v3804 = vunpack.c.l.bf16 %v3788
        %v3805 = vunpack.c.l.bf16 %v3789
        %v3806 = vunpack.c.l.bf16 %v3790
        %v3807 = vunpack.c.l.bf16 %v3791
        %v3808 = vunpack.c.l.bf16 %v3792
        %v3809 = vunpack.c.l.bf16 %v3793
        %v3810 = vunpack.c.l.bf16 %v3794
        %v3811 = vunpack.c.l.bf16 %v3795
        %v3812 = vunpack.c.l.bf16 %v3796
        %v3813 = vunpack.c.l.bf16 %v3797
        %3830 = vrot.lane.b32.xlu0 %v3798, 64
        %v3831 = vpop.permute.xlu0 %3830
        %3832 = vrot.lane.b32.xlu0 %v3799, 64
        %v3833 = vpop.permute.xlu0 %3832
        %3834 = vrot.lane.b32.xlu0 %v3800, 64
        %v3835 = vpop.permute.xlu0 %3834
        %3836 = vrot.lane.b32.xlu0 %v3801, 64
        %v3837 = vpop.permute.xlu0 %3836
        %3838 = vrot.lane.b32.xlu0 %v3802, 64
        %v3839 = vpop.permute.xlu0 %3838
        %3840 = vrot.lane.b32.xlu0 %v3803, 64
        %v3841 = vpop.permute.xlu0 %3840
        %3842 = vrot.lane.b32.xlu0 %v3804, 64
        %v3843 = vpop.permute.xlu0 %3842
        %3844 = vrot.lane.b32.xlu0 %v3805, 64
        %v3845 = vpop.permute.xlu0 %3844
        %3846 = vrot.lane.b32.xlu0 %v3806, 64
        %v3847 = vpop.permute.xlu0 %3846
        %3848 = vrot.lane.b32.xlu0 %v3807, 64
        %v3849 = vpop.permute.xlu0 %3848
        %3850 = vrot.lane.b32.xlu0 %v3808, 64
        %v3851 = vpop.permute.xlu0 %3850
        %3852 = vrot.lane.b32.xlu0 %v3809, 64
        %v3853 = vpop.permute.xlu0 %3852
        %3854 = vrot.lane.b32.xlu0 %v3810, 64
        %v3855 = vpop.permute.xlu0 %3854
        %3856 = vrot.lane.b32.xlu0 %v3811, 64
        %v3857 = vpop.permute.xlu0 %3856
        %3858 = vrot.lane.b32.xlu0 %v3812, 64
        %v3859 = vpop.permute.xlu0 %3858
        %3860 = vrot.lane.b32.xlu0 %v3813, 64
        %v3861 = vpop.permute.xlu0 %3860
        %v3878 = vmul.f32 %v1619, %v3831
        %v3879 = vmul.f32 %v1623, %v3833
        %v3880 = vmul.f32 %v1627, %v3835
        %v3881 = vmul.f32 %v1631, %v3837
        %v3882 = vmul.f32 %v1635, %v3839
        %v3883 = vmul.f32 %v1639, %v3841
        %v3884 = vmul.f32 %v1643, %v3843
        %v3885 = vmul.f32 %v1647, %v3845
        %v3886 = vmul.f32 %v1651, %v3847
        %v3887 = vmul.f32 %v1655, %v3849
        %v3888 = vmul.f32 %v1659, %v3851
        %v3889 = vmul.f32 %v1663, %v3853
        %v3890 = vmul.f32 %v1667, %v3855
        %v3891 = vmul.f32 %v1671, %v3857
        %v3892 = vmul.f32 %v1675, %v3859
        %v3893 = vmul.f32 %v1679, %v3861
        %3910 = vrot.lane.b32.xlu0 %v3878, 64
        %v3911 = vpop.permute.xlu0 %3910
        %3912 = vrot.lane.b32.xlu0 %v3879, 64
        %v3913 = vpop.permute.xlu0 %3912
        %3914 = vrot.lane.b32.xlu0 %v3880, 64
        %v3915 = vpop.permute.xlu0 %3914
        %3916 = vrot.lane.b32.xlu0 %v3881, 64
        %v3917 = vpop.permute.xlu0 %3916
        %3918 = vrot.lane.b32.xlu0 %v3882, 64
        %v3919 = vpop.permute.xlu0 %3918
        %3920 = vrot.lane.b32.xlu0 %v3883, 64
        %v3921 = vpop.permute.xlu0 %3920
        %3922 = vrot.lane.b32.xlu0 %v3884, 64
        %v3923 = vpop.permute.xlu0 %3922
        %3924 = vrot.lane.b32.xlu0 %v3885, 64
        %v3925 = vpop.permute.xlu0 %3924
        %3926 = vrot.lane.b32.xlu0 %v3886, 64
        %v3927 = vpop.permute.xlu0 %3926
        %3928 = vrot.lane.b32.xlu0 %v3887, 64
        %v3929 = vpop.permute.xlu0 %3928
        %3930 = vrot.lane.b32.xlu0 %v3888, 64
        %v3931 = vpop.permute.xlu0 %3930
        %3932 = vrot.lane.b32.xlu0 %v3889, 64
        %v3933 = vpop.permute.xlu0 %3932
        %3934 = vrot.lane.b32.xlu0 %v3890, 64
        %v3935 = vpop.permute.xlu0 %3934
        %3936 = vrot.lane.b32.xlu0 %v3891, 64
        %v3937 = vpop.permute.xlu0 %3936
        %3938 = vrot.lane.b32.xlu0 %v3892, 64
        %v3939 = vpop.permute.xlu0 %3938
        %3940 = vrot.lane.b32.xlu0 %v3893, 64
        %v3941 = vpop.permute.xlu0 %3940
        %v3958 = vadd.f32 %v3766, %v3911
        %v3959 = vadd.f32 %v3767, %v3913
        %v3960 = vadd.f32 %v3768, %v3915
        %v3961 = vadd.f32 %v3769, %v3917
        %v3962 = vadd.f32 %v3770, %v3919
        %v3963 = vadd.f32 %v3771, %v3921
        %v3964 = vadd.f32 %v3772, %v3923
        %v3965 = vadd.f32 %v3773, %v3925
        %v3966 = vadd.f32 %v3774, %v3927
        %v3967 = vadd.f32 %v3775, %v3929
        %v3968 = vadd.f32 %v3776, %v3931
        %v3969 = vadd.f32 %v3777, %v3933
        %v3970 = vadd.f32 %v3778, %v3935
        %v3971 = vadd.f32 %v3779, %v3937
        %v3972 = vadd.f32 %v3780, %v3939
        %v3973 = vadd.f32 %v3781, %v3941
        %v3974 = vld [vmem:[%s171 + $0x8] sm:$0x1]
        %v3975 = vld [vmem:[%s171 + $0x14] sm:$0x1]
        %v3976 = vld [vmem:[%s171 + $0x20] sm:$0x1]
        %v3977 = vld [vmem:[%s171 + $0x2c] sm:$0x1]
        %v3978 = vld [vmem:[%s171 + $0x38] sm:$0x1]
        %v3979 = vld [vmem:[%s171 + $0x44] sm:$0x1]
        %v3980 = vld [vmem:[%s171 + $0x50] sm:$0x1]
        %v3981 = vld [vmem:[%s171 + $0x5c] sm:$0x1]
        %v3982 = vunpack.c.l.bf16 %v3974
        %v3983 = vunpack.c.l.bf16 %v3975
        %v3984 = vunpack.c.l.bf16 %v3976
        %v3985 = vunpack.c.l.bf16 %v3977
        %v3986 = vunpack.c.l.bf16 %v3978
        %v3987 = vunpack.c.l.bf16 %v3979
        %v3988 = vunpack.c.l.bf16 %v3980
        %v3989 = vunpack.c.l.bf16 %v3981
        %v3998 = vrot.slane %v3798, 1
        %v3999 = vrot.slane %v3799, 1
        %v4000 = vsel %vm2137, %v3998, %v3999
        %v4001 = vrot.slane %v3982, 1
        %v4002 = vsel %vm2137, %v3999, %v4001
        %v4003 = vrot.slane %v3800, 1
        %v4004 = vrot.slane %v3801, 1
        %v4005 = vsel %vm2137, %v4003, %v4004
        %v4006 = vrot.slane %v3983, 1
        %v4007 = vsel %vm2137, %v4004, %v4006
        %v4008 = vrot.slane %v3802, 1
        %v4009 = vrot.slane %v3803, 1
        %v4010 = vsel %vm2137, %v4008, %v4009
        %v4011 = vrot.slane %v3984, 1
        %v4012 = vsel %vm2137, %v4009, %v4011
        %v4013 = vrot.slane %v3804, 1
        %v4014 = vrot.slane %v3805, 1
        %v4015 = vsel %vm2137, %v4013, %v4014
        %v4016 = vrot.slane %v3985, 1
        %v4017 = vsel %vm2137, %v4014, %v4016
        %v4018 = vrot.slane %v3806, 1
        %v4019 = vrot.slane %v3807, 1
        %v4020 = vsel %vm2137, %v4018, %v4019
        %v4021 = vrot.slane %v3986, 1
        %v4022 = vsel %vm2137, %v4019, %v4021
        %v4023 = vrot.slane %v3808, 1
        %v4024 = vrot.slane %v3809, 1
        %v4025 = vsel %vm2137, %v4023, %v4024
        %v4026 = vrot.slane %v3987, 1
        %v4027 = vsel %vm2137, %v4024, %v4026
        %v4028 = vrot.slane %v3810, 1
        %v4029 = vrot.slane %v3811, 1
        %v4030 = vsel %vm2137, %v4028, %v4029
        %v4031 = vrot.slane %v3988, 1
        %v4032 = vsel %vm2137, %v4029, %v4031
        %v4033 = vrot.slane %v3812, 1
        %v4034 = vrot.slane %v3813, 1
        %v4035 = vsel %vm2137, %v4033, %v4034
        %v4036 = vrot.slane %v3989, 1
        %v4037 = vsel %vm2137, %v4034, %v4036
        %4038 = vrot.lane.b32.xlu0 %v4000, 96
        %v4039 = vpop.permute.xlu0 %4038
        %4040 = vrot.lane.b32.xlu0 %v4002, 96
        %v4041 = vpop.permute.xlu0 %4040
        %4042 = vrot.lane.b32.xlu0 %v4005, 96
        %v4043 = vpop.permute.xlu0 %4042
        %4044 = vrot.lane.b32.xlu0 %v4007, 96
        %v4045 = vpop.permute.xlu0 %4044
        %4046 = vrot.lane.b32.xlu0 %v4010, 96
        %v4047 = vpop.permute.xlu0 %4046
        %4048 = vrot.lane.b32.xlu0 %v4012, 96
        %v4049 = vpop.permute.xlu0 %4048
        %4050 = vrot.lane.b32.xlu0 %v4015, 96
        %v4051 = vpop.permute.xlu0 %4050
        %4052 = vrot.lane.b32.xlu0 %v4017, 96
        %v4053 = vpop.permute.xlu0 %4052
        %4054 = vrot.lane.b32.xlu0 %v4020, 96
        %v4055 = vpop.permute.xlu0 %4054
        %4056 = vrot.lane.b32.xlu0 %v4022, 96
        %v4057 = vpop.permute.xlu0 %4056
        %4058 = vrot.lane.b32.xlu0 %v4025, 96
        %v4059 = vpop.permute.xlu0 %4058
        %4060 = vrot.lane.b32.xlu0 %v4027, 96
        %v4061 = vpop.permute.xlu0 %4060
        %4062 = vrot.lane.b32.xlu0 %v4030, 96
        %v4063 = vpop.permute.xlu0 %4062
        %4064 = vrot.lane.b32.xlu0 %v4032, 96
        %v4065 = vpop.permute.xlu0 %4064
        %4066 = vrot.lane.b32.xlu0 %v4035, 96
        %v4067 = vpop.permute.xlu0 %4066
        %4068 = vrot.lane.b32.xlu0 %v4037, 96
        %v4069 = vpop.permute.xlu0 %4068
        %v4086 = vmul.f32 %v1619, %v4039
        %v4087 = vmul.f32 %v1623, %v4041
        %v4088 = vmul.f32 %v1627, %v4043
        %v4089 = vmul.f32 %v1631, %v4045
        %v4090 = vmul.f32 %v1635, %v4047
        %v4091 = vmul.f32 %v1639, %v4049
        %v4092 = vmul.f32 %v1643, %v4051
        %v4093 = vmul.f32 %v1647, %v4053
        %v4094 = vmul.f32 %v1651, %v4055
        %v4095 = vmul.f32 %v1655, %v4057
        %v4096 = vmul.f32 %v1659, %v4059
        %v4097 = vmul.f32 %v1663, %v4061
        %v4098 = vmul.f32 %v1667, %v4063
        %v4099 = vmul.f32 %v1671, %v4065
        %v4100 = vmul.f32 %v1675, %v4067
        %v4101 = vmul.f32 %v1679, %v4069
        %4118 = vrot.lane.b32.xlu0 %v4086, 32
        %v4119 = vpop.permute.xlu0 %4118
        %4120 = vrot.lane.b32.xlu0 %v4087, 32
        %v4121 = vpop.permute.xlu0 %4120
        %4122 = vrot.lane.b32.xlu0 %v4088, 32
        %v4123 = vpop.permute.xlu0 %4122
        %4124 = vrot.lane.b32.xlu0 %v4089, 32
        %v4125 = vpop.permute.xlu0 %4124
        %4126 = vrot.lane.b32.xlu0 %v4090, 32
        %v4127 = vpop.permute.xlu0 %4126
        %4128 = vrot.lane.b32.xlu0 %v4091, 32
        %v4129 = vpop.permute.xlu0 %4128
        %4130 = vrot.lane.b32.xlu0 %v4092, 32
        %v4131 = vpop.permute.xlu0 %4130
        %4132 = vrot.lane.b32.xlu0 %v4093, 32
        %v4133 = vpop.permute.xlu0 %4132
        %4134 = vrot.lane.b32.xlu0 %v4094, 32
        %v4135 = vpop.permute.xlu0 %4134
        %4136 = vrot.lane.b32.xlu0 %v4095, 32
        %v4137 = vpop.permute.xlu0 %4136
        %4138 = vrot.lane.b32.xlu0 %v4096, 32
        %v4139 = vpop.permute.xlu0 %4138
        %4140 = vrot.lane.b32.xlu0 %v4097, 32
        %v4141 = vpop.permute.xlu0 %4140
        %4142 = vrot.lane.b32.xlu0 %v4098, 32
        %v4143 = vpop.permute.xlu0 %4142
        %4144 = vrot.lane.b32.xlu0 %v4099, 32
        %v4145 = vpop.permute.xlu0 %4144
        %4146 = vrot.lane.b32.xlu0 %v4100, 32
        %v4147 = vpop.permute.xlu0 %4146
        %4148 = vrot.lane.b32.xlu0 %v4101, 32
        %v4149 = vpop.permute.xlu0 %4148
        %v4166 = vadd.f32 %v3958, %v4119
        %v4167 = vadd.f32 %v3959, %v4121
        %v4168 = vadd.f32 %v3960, %v4123
        %v4169 = vadd.f32 %v3961, %v4125
        %v4170 = vadd.f32 %v3962, %v4127
        %v4171 = vadd.f32 %v3963, %v4129
        %v4172 = vadd.f32 %v3964, %v4131
        %v4173 = vadd.f32 %v3965, %v4133
        %v4174 = vadd.f32 %v3966, %v4135
        %v4175 = vadd.f32 %v3967, %v4137
        %v4176 = vadd.f32 %v3968, %v4139
        %v4177 = vadd.f32 %v3969, %v4141
        %v4178 = vadd.f32 %v3970, %v4143
        %v4179 = vadd.f32 %v3971, %v4145
        %v4180 = vadd.f32 %v3972, %v4147
        %v4181 = vadd.f32 %v3973, %v4149
        %v4182 = vld [vmem:[%s171] sm:$0xe]
        %v4183 = vld [vmem:[%s171 + $0xc] sm:$0xe]
        %v4184 = vld [vmem:[%s171 + $0x18] sm:$0xe]
        %v4185 = vld [vmem:[%s171 + $0x24] sm:$0xe]
        %v4186 = vld [vmem:[%s171 + $0x30] sm:$0xe]
        %v4187 = vld [vmem:[%s171 + $0x3c] sm:$0xe]
        %v4188 = vld [vmem:[%s171 + $0x48] sm:$0xe]
        %v4189 = vld [vmem:[%s171 + $0x54] sm:$0xe]
        %v4190 = vunpack.c.l.bf16 %v4182
        %v4191 = vunpack.c.l.bf16 %v4183
        %v4192 = vunpack.c.l.bf16 %v4184
        %v4193 = vunpack.c.l.bf16 %v4185
        %v4194 = vunpack.c.l.bf16 %v4186
        %v4195 = vunpack.c.l.bf16 %v4187
        %v4196 = vunpack.c.l.bf16 %v4188
        %v4197 = vunpack.c.l.bf16 %v4189
        %v4206 = vrot.slane %v4190, 2
        %v4207 = vrot.slane %v3799, 2
        %v4208 = vsel %vm2346, %v4206, %v4207
        %v4209 = vrot.slane %v3982, 2
        %v4210 = vsel %vm2346, %v4207, %v4209
        %v4211 = vrot.slane %v4191, 2
        %v4212 = vrot.slane %v3801, 2
        %v4213 = vsel %vm2346, %v4211, %v4212
        %v4214 = vrot.slane %v3983, 2
        %v4215 = vsel %vm2346, %v4212, %v4214
        %v4216 = vrot.slane %v4192, 2
        %v4217 = vrot.slane %v3803, 2
        %v4218 = vsel %vm2346, %v4216, %v4217
        %v4219 = vrot.slane %v3984, 2
        %v4220 = vsel %vm2346, %v4217, %v4219
        %v4221 = vrot.slane %v4193, 2
        %v4222 = vrot.slane %v3805, 2
        %v4223 = vsel %vm2346, %v4221, %v4222
        %v4224 = vrot.slane %v3985, 2
        %v4225 = vsel %vm2346, %v4222, %v4224
        %v4226 = vrot.slane %v4194, 2
        %v4227 = vrot.slane %v3807, 2
        %v4228 = vsel %vm2346, %v4226, %v4227
        %v4229 = vrot.slane %v3986, 2
        %v4230 = vsel %vm2346, %v4227, %v4229
        %v4231 = vrot.slane %v4195, 2
        %v4232 = vrot.slane %v3809, 2
        %v4233 = vsel %vm2346, %v4231, %v4232
        %v4234 = vrot.slane %v3987, 2
        %v4235 = vsel %vm2346, %v4232, %v4234
        %v4236 = vrot.slane %v4196, 2
        %v4237 = vrot.slane %v3811, 2
        %v4238 = vsel %vm2346, %v4236, %v4237
        %v4239 = vrot.slane %v3988, 2
        %v4240 = vsel %vm2346, %v4237, %v4239
        %v4241 = vrot.slane %v4197, 2
        %v4242 = vrot.slane %v3813, 2
        %v4243 = vsel %vm2346, %v4241, %v4242
        %v4244 = vrot.slane %v3989, 2
        %v4245 = vsel %vm2346, %v4242, %v4244
        %v4262 = vmul.f32 %v1620, %v4208
        %v4263 = vmul.f32 %v1624, %v4210
        %v4264 = vmul.f32 %v1628, %v4213
        %v4265 = vmul.f32 %v1632, %v4215
        %v4266 = vmul.f32 %v1636, %v4218
        %v4267 = vmul.f32 %v1640, %v4220
        %v4268 = vmul.f32 %v1644, %v4223
        %v4269 = vmul.f32 %v1648, %v4225
        %v4270 = vmul.f32 %v1652, %v4228
        %v4271 = vmul.f32 %v1656, %v4230
        %v4272 = vmul.f32 %v1660, %v4233
        %v4273 = vmul.f32 %v1664, %v4235
        %v4274 = vmul.f32 %v1668, %v4238
        %v4275 = vmul.f32 %v1672, %v4240
        %v4276 = vmul.f32 %v1676, %v4243
        %v4277 = vmul.f32 %v1680, %v4245
        %v4278 = vadd.f32 %v4166, %v4262
        %v4279 = vadd.f32 %v4167, %v4263
        %v4280 = vadd.f32 %v4168, %v4264
        %v4281 = vadd.f32 %v4169, %v4265
        %v4282 = vadd.f32 %v4170, %v4266
        %v4283 = vadd.f32 %v4171, %v4267
        %v4284 = vadd.f32 %v4172, %v4268
        %v4285 = vadd.f32 %v4173, %v4269
        %v4286 = vadd.f32 %v4174, %v4270
        %v4287 = vadd.f32 %v4175, %v4271
        %v4288 = vadd.f32 %v4176, %v4272
        %v4289 = vadd.f32 %v4177, %v4273
        %v4290 = vadd.f32 %v4178, %v4274
        %v4291 = vadd.f32 %v4179, %v4275
        %v4292 = vadd.f32 %v4180, %v4276
        %v4293 = vadd.f32 %v4181, %v4277
        %v4294 = vld [vmem:[%s171 + $0x8] sm:$0x3]
        %v4295 = vld [vmem:[%s171 + $0x14] sm:$0x3]
        %v4296 = vld [vmem:[%s171 + $0x20] sm:$0x3]
        %v4297 = vld [vmem:[%s171 + $0x2c] sm:$0x3]
        %v4298 = vld [vmem:[%s171 + $0x38] sm:$0x3]
        %v4299 = vld [vmem:[%s171 + $0x44] sm:$0x3]
        %v4300 = vld [vmem:[%s171 + $0x50] sm:$0x3]
        %v4301 = vld [vmem:[%s171 + $0x5c] sm:$0x3]
        %v4302 = vunpack.c.l.bf16 %v4294
        %v4303 = vunpack.c.l.bf16 %v4295
        %v4304 = vunpack.c.l.bf16 %v4296
        %v4305 = vunpack.c.l.bf16 %v4297
        %v4306 = vunpack.c.l.bf16 %v4298
        %v4307 = vunpack.c.l.bf16 %v4299
        %v4308 = vunpack.c.l.bf16 %v4300
        %v4309 = vunpack.c.l.bf16 %v4301
        %v4318 = vrot.slane %v4190, 3
        %v4319 = vrot.slane %v3799, 3
        %v4320 = vsel %vm2555, %v4318, %v4319
        %v4321 = vrot.slane %v4302, 3
        %v4322 = vsel %vm2555, %v4319, %v4321
        %v4323 = vrot.slane %v4191, 3
        %v4324 = vrot.slane %v3801, 3
        %v4325 = vsel %vm2555, %v4323, %v4324
        %v4326 = vrot.slane %v4303, 3
        %v4327 = vsel %vm2555, %v4324, %v4326
        %v4328 = vrot.slane %v4192, 3
        %v4329 = vrot.slane %v3803, 3
        %v4330 = vsel %vm2555, %v4328, %v4329
        %v4331 = vrot.slane %v4304, 3
        %v4332 = vsel %vm2555, %v4329, %v4331
        %v4333 = vrot.slane %v4193, 3
        %v4334 = vrot.slane %v3805, 3
        %v4335 = vsel %vm2555, %v4333, %v4334
        %v4336 = vrot.slane %v4305, 3
        %v4337 = vsel %vm2555, %v4334, %v4336
        %v4338 = vrot.slane %v4194, 3
        %v4339 = vrot.slane %v3807, 3
        %v4340 = vsel %vm2555, %v4338, %v4339
        %v4341 = vrot.slane %v4306, 3
        %v4342 = vsel %vm2555, %v4339, %v4341
        %v4343 = vrot.slane %v4195, 3
        %v4344 = vrot.slane %v3809, 3
        %v4345 = vsel %vm2555, %v4343, %v4344
        %v4346 = vrot.slane %v4307, 3
        %v4347 = vsel %vm2555, %v4344, %v4346
        %v4348 = vrot.slane %v4196, 3
        %v4349 = vrot.slane %v3811, 3
        %v4350 = vsel %vm2555, %v4348, %v4349
        %v4351 = vrot.slane %v4308, 3
        %v4352 = vsel %vm2555, %v4349, %v4351
        %v4353 = vrot.slane %v4197, 3
        %v4354 = vrot.slane %v3813, 3
        %v4355 = vsel %vm2555, %v4353, %v4354
        %v4356 = vrot.slane %v4309, 3
        %v4357 = vsel %vm2555, %v4354, %v4356
        %4358 = vrot.lane.b32.xlu0 %v4320, 32
        %v4359 = vpop.permute.xlu0 %4358
        %4360 = vrot.lane.b32.xlu0 %v4322, 32
        %v4361 = vpop.permute.xlu0 %4360
        %4362 = vrot.lane.b32.xlu0 %v4325, 32
        %v4363 = vpop.permute.xlu0 %4362
        %4364 = vrot.lane.b32.xlu0 %v4327, 32
        %v4365 = vpop.permute.xlu0 %4364
        %4366 = vrot.lane.b32.xlu0 %v4330, 32
        %v4367 = vpop.permute.xlu0 %4366
        %4368 = vrot.lane.b32.xlu0 %v4332, 32
        %v4369 = vpop.permute.xlu0 %4368
        %4370 = vrot.lane.b32.xlu0 %v4335, 32
        %v4371 = vpop.permute.xlu0 %4370
        %4372 = vrot.lane.b32.xlu0 %v4337, 32
        %v4373 = vpop.permute.xlu0 %4372
        %4374 = vrot.lane.b32.xlu0 %v4340, 32
        %v4375 = vpop.permute.xlu0 %4374
        %4376 = vrot.lane.b32.xlu0 %v4342, 32
        %v4377 = vpop.permute.xlu0 %4376
        %4378 = vrot.lane.b32.xlu0 %v4345, 32
        %v4379 = vpop.permute.xlu0 %4378
        %4380 = vrot.lane.b32.xlu0 %v4347, 32
        %v4381 = vpop.permute.xlu0 %4380
        %4382 = vrot.lane.b32.xlu0 %v4350, 32
        %v4383 = vpop.permute.xlu0 %4382
        %4384 = vrot.lane.b32.xlu0 %v4352, 32
        %v4385 = vpop.permute.xlu0 %4384
        %4386 = vrot.lane.b32.xlu0 %v4355, 32
        %v4387 = vpop.permute.xlu0 %4386
        %4388 = vrot.lane.b32.xlu0 %v4357, 32
        %v4389 = vpop.permute.xlu0 %4388
        %v4406 = vmul.f32 %v1620, %v4359
        %v4407 = vmul.f32 %v1624, %v4361
        %v4408 = vmul.f32 %v1628, %v4363
        %v4409 = vmul.f32 %v1632, %v4365
        %v4410 = vmul.f32 %v1636, %v4367
        %v4411 = vmul.f32 %v1640, %v4369
        %v4412 = vmul.f32 %v1644, %v4371
        %v4413 = vmul.f32 %v1648, %v4373
        %v4414 = vmul.f32 %v1652, %v4375
        %v4415 = vmul.f32 %v1656, %v4377
        %v4416 = vmul.f32 %v1660, %v4379
        %v4417 = vmul.f32 %v1664, %v4381
        %v4418 = vmul.f32 %v1668, %v4383
        %v4419 = vmul.f32 %v1672, %v4385
        %v4420 = vmul.f32 %v1676, %v4387
        %v4421 = vmul.f32 %v1680, %v4389
        %4438 = vrot.lane.b32.xlu0 %v4406, 96
        %v4439 = vpop.permute.xlu0 %4438
        %4440 = vrot.lane.b32.xlu0 %v4407, 96
        %v4441 = vpop.permute.xlu0 %4440
        %4442 = vrot.lane.b32.xlu0 %v4408, 96
        %v4443 = vpop.permute.xlu0 %4442
        %4444 = vrot.lane.b32.xlu0 %v4409, 96
        %v4445 = vpop.permute.xlu0 %4444
        %4446 = vrot.lane.b32.xlu0 %v4410, 96
        %v4447 = vpop.permute.xlu0 %4446
        %4448 = vrot.lane.b32.xlu0 %v4411, 96
        %v4449 = vpop.permute.xlu0 %4448
        %4450 = vrot.lane.b32.xlu0 %v4412, 96
        %v4451 = vpop.permute.xlu0 %4450
        %4452 = vrot.lane.b32.xlu0 %v4413, 96
        %v4453 = vpop.permute.xlu0 %4452
        %4454 = vrot.lane.b32.xlu0 %v4414, 96
        %v4455 = vpop.permute.xlu0 %4454
        %4456 = vrot.lane.b32.xlu0 %v4415, 96
        %v4457 = vpop.permute.xlu0 %4456
        %4458 = vrot.lane.b32.xlu0 %v4416, 96
        %v4459 = vpop.permute.xlu0 %4458
        %4460 = vrot.lane.b32.xlu0 %v4417, 96
        %v4461 = vpop.permute.xlu0 %4460
        %4462 = vrot.lane.b32.xlu0 %v4418, 96
        %v4463 = vpop.permute.xlu0 %4462
        %4464 = vrot.lane.b32.xlu0 %v4419, 96
        %v4465 = vpop.permute.xlu0 %4464
        %4466 = vrot.lane.b32.xlu0 %v4420, 96
        %v4467 = vpop.permute.xlu0 %4466
        %4468 = vrot.lane.b32.xlu0 %v4421, 96
        %v4469 = vpop.permute.xlu0 %4468
        %v4486 = vadd.f32 %v4278, %v4439
        %v4487 = vadd.f32 %v4279, %v4441
        %v4488 = vadd.f32 %v4280, %v4443
        %v4489 = vadd.f32 %v4281, %v4445
        %v4490 = vadd.f32 %v4282, %v4447
        %v4491 = vadd.f32 %v4283, %v4449
        %v4492 = vadd.f32 %v4284, %v4451
        %v4493 = vadd.f32 %v4285, %v4453
        %v4494 = vadd.f32 %v4286, %v4455
        %v4495 = vadd.f32 %v4287, %v4457
        %v4496 = vadd.f32 %v4288, %v4459
        %v4497 = vadd.f32 %v4289, %v4461
        %v4498 = vadd.f32 %v4290, %v4463
        %v4499 = vadd.f32 %v4291, %v4465
        %v4500 = vadd.f32 %v4292, %v4467
        %v4501 = vadd.f32 %v4293, %v4469
        %v4502 = vld [vmem:[%s171] sm:$0xc]
        %v4503 = vld [vmem:[%s171 + $0xc] sm:$0xc]
        %v4504 = vld [vmem:[%s171 + $0x18] sm:$0xc]
        %v4505 = vld [vmem:[%s171 + $0x24] sm:$0xc]
        %v4506 = vld [vmem:[%s171 + $0x30] sm:$0xc]
        %v4507 = vld [vmem:[%s171 + $0x3c] sm:$0xc]
        %v4508 = vld [vmem:[%s171 + $0x48] sm:$0xc]
        %v4509 = vld [vmem:[%s171 + $0x54] sm:$0xc]
        %v4510 = vunpack.c.l.bf16 %v4502
        %v4511 = vunpack.c.l.bf16 %v4503
        %v4512 = vunpack.c.l.bf16 %v4504
        %v4513 = vunpack.c.l.bf16 %v4505
        %v4514 = vunpack.c.l.bf16 %v4506
        %v4515 = vunpack.c.l.bf16 %v4507
        %v4516 = vunpack.c.l.bf16 %v4508
        %v4517 = vunpack.c.l.bf16 %v4509
        %v4526 = vrot.slane %v4510, 4
        %v4527 = vrot.slane %v3799, 4
        %v4528 = vsel %vm2764, %v4526, %v4527
        %v4529 = vrot.slane %v4302, 4
        %v4530 = vsel %vm2764, %v4527, %v4529
        %v4531 = vrot.slane %v4511, 4
        %v4532 = vrot.slane %v3801, 4
        %v4533 = vsel %vm2764, %v4531, %v4532
        %v4534 = vrot.slane %v4303, 4
        %v4535 = vsel %vm2764, %v4532, %v4534
        %v4536 = vrot.slane %v4512, 4
        %v4537 = vrot.slane %v3803, 4
        %v4538 = vsel %vm2764, %v4536, %v4537
        %v4539 = vrot.slane %v4304, 4
        %v4540 = vsel %vm2764, %v4537, %v4539
        %v4541 = vrot.slane %v4513, 4
        %v4542 = vrot.slane %v3805, 4
        %v4543 = vsel %vm2764, %v4541, %v4542
        %v4544 = vrot.slane %v4305, 4
        %v4545 = vsel %vm2764, %v4542, %v4544
        %v4546 = vrot.slane %v4514, 4
        %v4547 = vrot.slane %v3807, 4
        %v4548 = vsel %vm2764, %v4546, %v4547
        %v4549 = vrot.slane %v4306, 4
        %v4550 = vsel %vm2764, %v4547, %v4549
        %v4551 = vrot.slane %v4515, 4
        %v4552 = vrot.slane %v3809, 4
        %v4553 = vsel %vm2764, %v4551, %v4552
        %v4554 = vrot.slane %v4307, 4
        %v4555 = vsel %vm2764, %v4552, %v4554
        %v4556 = vrot.slane %v4516, 4
        %v4557 = vrot.slane %v3811, 4
        %v4558 = vsel %vm2764, %v4556, %v4557
        %v4559 = vrot.slane %v4308, 4
        %v4560 = vsel %vm2764, %v4557, %v4559
        %v4561 = vrot.slane %v4517, 4
        %v4562 = vrot.slane %v3813, 4
        %v4563 = vsel %vm2764, %v4561, %v4562
        %v4564 = vrot.slane %v4309, 4
        %v4565 = vsel %vm2764, %v4562, %v4564
        %4566 = vrot.lane.b32.xlu0 %v4528, 64
        %v4567 = vpop.permute.xlu0 %4566
        %4568 = vrot.lane.b32.xlu0 %v4530, 64
        %v4569 = vpop.permute.xlu0 %4568
        %4570 = vrot.lane.b32.xlu0 %v4533, 64
        %v4571 = vpop.permute.xlu0 %4570
        %4572 = vrot.lane.b32.xlu0 %v4535, 64
        %v4573 = vpop.permute.xlu0 %4572
        %4574 = vrot.lane.b32.xlu0 %v4538, 64
        %v4575 = vpop.permute.xlu0 %4574
        %4576 = vrot.lane.b32.xlu0 %v4540, 64
        %v4577 = vpop.permute.xlu0 %4576
        %4578 = vrot.lane.b32.xlu0 %v4543, 64
        %v4579 = vpop.permute.xlu0 %4578
        %4580 = vrot.lane.b32.xlu0 %v4545, 64
        %v4581 = vpop.permute.xlu0 %4580
        %4582 = vrot.lane.b32.xlu0 %v4548, 64
        %v4583 = vpop.permute.xlu0 %4582
        %4584 = vrot.lane.b32.xlu0 %v4550, 64
        %v4585 = vpop.permute.xlu0 %4584
        %4586 = vrot.lane.b32.xlu0 %v4553, 64
        %v4587 = vpop.permute.xlu0 %4586
        %4588 = vrot.lane.b32.xlu0 %v4555, 64
        %v4589 = vpop.permute.xlu0 %4588
        %4590 = vrot.lane.b32.xlu0 %v4558, 64
        %v4591 = vpop.permute.xlu0 %4590
        %4592 = vrot.lane.b32.xlu0 %v4560, 64
        %v4593 = vpop.permute.xlu0 %4592
        %4594 = vrot.lane.b32.xlu0 %v4563, 64
        %v4595 = vpop.permute.xlu0 %4594
        %4596 = vrot.lane.b32.xlu0 %v4565, 64
        %v4597 = vpop.permute.xlu0 %4596
        %v4614 = vmul.f32 %v1620, %v4567
        %v4615 = vmul.f32 %v1624, %v4569
        %v4616 = vmul.f32 %v1628, %v4571
        %v4617 = vmul.f32 %v1632, %v4573
        %v4618 = vmul.f32 %v1636, %v4575
        %v4619 = vmul.f32 %v1640, %v4577
        %v4620 = vmul.f32 %v1644, %v4579
        %v4621 = vmul.f32 %v1648, %v4581
        %v4622 = vmul.f32 %v1652, %v4583
        %v4623 = vmul.f32 %v1656, %v4585
        %v4624 = vmul.f32 %v1660, %v4587
        %v4625 = vmul.f32 %v1664, %v4589
        %v4626 = vmul.f32 %v1668, %v4591
        %v4627 = vmul.f32 %v1672, %v4593
        %v4628 = vmul.f32 %v1676, %v4595
        %v4629 = vmul.f32 %v1680, %v4597
        %4646 = vrot.lane.b32.xlu0 %v4614, 64
        %v4647 = vpop.permute.xlu0 %4646
        %4648 = vrot.lane.b32.xlu0 %v4615, 64
        %v4649 = vpop.permute.xlu0 %4648
        %4650 = vrot.lane.b32.xlu0 %v4616, 64
        %v4651 = vpop.permute.xlu0 %4650
        %4652 = vrot.lane.b32.xlu0 %v4617, 64
        %v4653 = vpop.permute.xlu0 %4652
        %4654 = vrot.lane.b32.xlu0 %v4618, 64
        %v4655 = vpop.permute.xlu0 %4654
        %4656 = vrot.lane.b32.xlu0 %v4619, 64
        %v4657 = vpop.permute.xlu0 %4656
        %4658 = vrot.lane.b32.xlu0 %v4620, 64
        %v4659 = vpop.permute.xlu0 %4658
        %4660 = vrot.lane.b32.xlu0 %v4621, 64
        %v4661 = vpop.permute.xlu0 %4660
        %4662 = vrot.lane.b32.xlu0 %v4622, 64
        %v4663 = vpop.permute.xlu0 %4662
        %4664 = vrot.lane.b32.xlu0 %v4623, 64
        %v4665 = vpop.permute.xlu0 %4664
        %4666 = vrot.lane.b32.xlu0 %v4624, 64
        %v4667 = vpop.permute.xlu0 %4666
        %4668 = vrot.lane.b32.xlu0 %v4625, 64
        %v4669 = vpop.permute.xlu0 %4668
        %4670 = vrot.lane.b32.xlu0 %v4626, 64
        %v4671 = vpop.permute.xlu0 %4670
        %4672 = vrot.lane.b32.xlu0 %v4627, 64
        %v4673 = vpop.permute.xlu0 %4672
        %4674 = vrot.lane.b32.xlu0 %v4628, 64
        %v4675 = vpop.permute.xlu0 %4674
        %4676 = vrot.lane.b32.xlu0 %v4629, 64
        %v4677 = vpop.permute.xlu0 %4676
        %v4694 = vadd.f32 %v4486, %v4647
        %v4695 = vadd.f32 %v4487, %v4649
        %v4696 = vadd.f32 %v4488, %v4651
        %v4697 = vadd.f32 %v4489, %v4653
        %v4698 = vadd.f32 %v4490, %v4655
        %v4699 = vadd.f32 %v4491, %v4657
        %v4700 = vadd.f32 %v4492, %v4659
        %v4701 = vadd.f32 %v4493, %v4661
        %v4702 = vadd.f32 %v4494, %v4663
        %v4703 = vadd.f32 %v4495, %v4665
        %v4704 = vadd.f32 %v4496, %v4667
        %v4705 = vadd.f32 %v4497, %v4669
        %v4706 = vadd.f32 %v4498, %v4671
        %v4707 = vadd.f32 %v4499, %v4673
        %v4708 = vadd.f32 %v4500, %v4675
        %v4709 = vadd.f32 %v4501, %v4677
        %s4710 = scalar_lea.vmem %s169, 36
        %v4711 = vld [vmem:[%s4710] sm:$0xf]
        %v4712 = vld [vmem:[%s4710 + $0x4] sm:$0xf]
        %v4713 = vld [vmem:[%s4710 + $0xc] sm:$0xf]
        %v4714 = vld [vmem:[%s4710 + $0x10] sm:$0xf]
        %v4715 = vld [vmem:[%s4710 + $0x18] sm:$0xf]
        %v4716 = vld [vmem:[%s4710 + $0x1c] sm:$0xf]
        %v4717 = vld [vmem:[%s4710 + $0x24] sm:$0xf]
        %v4718 = vld [vmem:[%s4710 + $0x28] sm:$0xf]
        %v4719 = vld [vmem:[%s4710 + $0x30] sm:$0xf]
        %v4720 = vld [vmem:[%s4710 + $0x34] sm:$0xf]
        %v4721 = vld [vmem:[%s4710 + $0x3c] sm:$0xf]
        %v4722 = vld [vmem:[%s4710 + $0x40] sm:$0xf]
        %v4723 = vld [vmem:[%s4710 + $0x48] sm:$0xf]
        %v4724 = vld [vmem:[%s4710 + $0x4c] sm:$0xf]
        %v4725 = vld [vmem:[%s4710 + $0x54] sm:$0xf]
        %v4726 = vld [vmem:[%s4710 + $0x58] sm:$0xf]
        %v4727 = vunpack.c.l.bf16 %v4711
        %v4728 = vunpack.c.l.bf16 %v4712
        %v4729 = vunpack.c.l.bf16 %v4713
        %v4730 = vunpack.c.l.bf16 %v4714
        %v4731 = vunpack.c.l.bf16 %v4715
        %v4732 = vunpack.c.l.bf16 %v4716
        %v4733 = vunpack.c.l.bf16 %v4717
        %v4734 = vunpack.c.l.bf16 %v4718
        %v4735 = vunpack.c.l.bf16 %v4719
        %v4736 = vunpack.c.l.bf16 %v4720
        %v4737 = vunpack.c.l.bf16 %v4721
        %v4738 = vunpack.c.l.bf16 %v4722
        %v4739 = vunpack.c.l.bf16 %v4723
        %v4740 = vunpack.c.l.bf16 %v4724
        %v4741 = vunpack.c.l.bf16 %v4725
        %v4742 = vunpack.c.l.bf16 %v4726
        %4759 = vrot.lane.b32.xlu0 %v4727, 96
        %v4760 = vpop.permute.xlu0 %4759
        %4761 = vrot.lane.b32.xlu0 %v4728, 96
        %v4762 = vpop.permute.xlu0 %4761
        %4763 = vrot.lane.b32.xlu0 %v4729, 96
        %v4764 = vpop.permute.xlu0 %4763
        %4765 = vrot.lane.b32.xlu0 %v4730, 96
        %v4766 = vpop.permute.xlu0 %4765
        %4767 = vrot.lane.b32.xlu0 %v4731, 96
        %v4768 = vpop.permute.xlu0 %4767
        %4769 = vrot.lane.b32.xlu0 %v4732, 96
        %v4770 = vpop.permute.xlu0 %4769
        %4771 = vrot.lane.b32.xlu0 %v4733, 96
        %v4772 = vpop.permute.xlu0 %4771
        %4773 = vrot.lane.b32.xlu0 %v4734, 96
        %v4774 = vpop.permute.xlu0 %4773
        %4775 = vrot.lane.b32.xlu0 %v4735, 96
        %v4776 = vpop.permute.xlu0 %4775
        %4777 = vrot.lane.b32.xlu0 %v4736, 96
        %v4778 = vpop.permute.xlu0 %4777
        %4779 = vrot.lane.b32.xlu0 %v4737, 96
        %v4780 = vpop.permute.xlu0 %4779
        %4781 = vrot.lane.b32.xlu0 %v4738, 96
        %v4782 = vpop.permute.xlu0 %4781
        %4783 = vrot.lane.b32.xlu0 %v4739, 96
        %v4784 = vpop.permute.xlu0 %4783
        %4785 = vrot.lane.b32.xlu0 %v4740, 96
        %v4786 = vpop.permute.xlu0 %4785
        %4787 = vrot.lane.b32.xlu0 %v4741, 96
        %v4788 = vpop.permute.xlu0 %4787
        %4789 = vrot.lane.b32.xlu0 %v4742, 96
        %v4790 = vpop.permute.xlu0 %4789
        %v4807 = vmul.f32 %v1620, %v4760
        %v4808 = vmul.f32 %v1624, %v4762
        %v4809 = vmul.f32 %v1628, %v4764
        %v4810 = vmul.f32 %v1632, %v4766
        %v4811 = vmul.f32 %v1636, %v4768
        %v4812 = vmul.f32 %v1640, %v4770
        %v4813 = vmul.f32 %v1644, %v4772
        %v4814 = vmul.f32 %v1648, %v4774
        %v4815 = vmul.f32 %v1652, %v4776
        %v4816 = vmul.f32 %v1656, %v4778
        %v4817 = vmul.f32 %v1660, %v4780
        %v4818 = vmul.f32 %v1664, %v4782
        %v4819 = vmul.f32 %v1668, %v4784
        %v4820 = vmul.f32 %v1672, %v4786
        %v4821 = vmul.f32 %v1676, %v4788
        %v4822 = vmul.f32 %v1680, %v4790
        %4839 = vrot.lane.b32.xlu0 %v4807, 32
        %v4840 = vpop.permute.xlu0 %4839
        %4841 = vrot.lane.b32.xlu0 %v4808, 32
        %v4842 = vpop.permute.xlu0 %4841
        %4843 = vrot.lane.b32.xlu0 %v4809, 32
        %v4844 = vpop.permute.xlu0 %4843
        %4845 = vrot.lane.b32.xlu0 %v4810, 32
        %v4846 = vpop.permute.xlu0 %4845
        %4847 = vrot.lane.b32.xlu0 %v4811, 32
        %v4848 = vpop.permute.xlu0 %4847
        %4849 = vrot.lane.b32.xlu0 %v4812, 32
        %v4850 = vpop.permute.xlu0 %4849
        %4851 = vrot.lane.b32.xlu0 %v4813, 32
        %v4852 = vpop.permute.xlu0 %4851
        %4853 = vrot.lane.b32.xlu0 %v4814, 32
        %v4854 = vpop.permute.xlu0 %4853
        %4855 = vrot.lane.b32.xlu0 %v4815, 32
        %v4856 = vpop.permute.xlu0 %4855
        %4857 = vrot.lane.b32.xlu0 %v4816, 32
        %v4858 = vpop.permute.xlu0 %4857
        %4859 = vrot.lane.b32.xlu0 %v4817, 32
        %v4860 = vpop.permute.xlu0 %4859
        %4861 = vrot.lane.b32.xlu0 %v4818, 32
        %v4862 = vpop.permute.xlu0 %4861
        %4863 = vrot.lane.b32.xlu0 %v4819, 32
        %v4864 = vpop.permute.xlu0 %4863
        %4865 = vrot.lane.b32.xlu0 %v4820, 32
        %v4866 = vpop.permute.xlu0 %4865
        %4867 = vrot.lane.b32.xlu0 %v4821, 32
        %v4868 = vpop.permute.xlu0 %4867
        %4869 = vrot.lane.b32.xlu0 %v4822, 32
        %v4870 = vpop.permute.xlu0 %4869
        %v4887 = vadd.f32 %v4694, %v4840
        %v4888 = vadd.f32 %v4695, %v4842
        %v4889 = vadd.f32 %v4696, %v4844
        %v4890 = vadd.f32 %v4697, %v4846
        %v4891 = vadd.f32 %v4698, %v4848
        %v4892 = vadd.f32 %v4699, %v4850
        %v4893 = vadd.f32 %v4700, %v4852
        %v4894 = vadd.f32 %v4701, %v4854
        %v4895 = vadd.f32 %v4702, %v4856
        %v4896 = vadd.f32 %v4703, %v4858
        %v4897 = vadd.f32 %v4704, %v4860
        %v4898 = vadd.f32 %v4705, %v4862
        %v4899 = vadd.f32 %v4706, %v4864
        %v4900 = vadd.f32 %v4707, %v4866
        %v4901 = vadd.f32 %v4708, %v4868
        %v4902 = vadd.f32 %v4709, %v4870
        %v4903 = vld [vmem:[#allocation2 + $0x20] sm:$0xff]
        %v4904 = vld [vmem:[#allocation2 + $0x60] sm:$0xff]
        %v4905 = vld [vmem:[#allocation2 + $0xa0] sm:$0xff]
        %v4906 = vld [vmem:[#allocation2 + $0xe0] sm:$0xff]
        %v4907 = vld [vmem:[#allocation2 + $0x120] sm:$0xff]
        %v4908 = vld [vmem:[#allocation2 + $0x160] sm:$0xff]
        %v4909 = vld [vmem:[#allocation2 + $0x1a0] sm:$0xff]
        %v4910 = vld [vmem:[#allocation2 + $0x1e0] sm:$0xff]
        %v4911 = vld [vmem:[#allocation2 + $0x220] sm:$0xff]
        %v4912 = vld [vmem:[#allocation2 + $0x260] sm:$0xff]
        %v4913 = vld [vmem:[#allocation2 + $0x2a0] sm:$0xff]
        %v4914 = vld [vmem:[#allocation2 + $0x2e0] sm:$0xff]
        %v4915 = vld [vmem:[#allocation2 + $0x320] sm:$0xff]
        %v4916 = vld [vmem:[#allocation2 + $0x360] sm:$0xff]
        %v4917 = vld [vmem:[#allocation2 + $0x3a0] sm:$0xff]
        %v4918 = vld [vmem:[#allocation2 + $0x3e0] sm:$0xff]
        %v4919 = vld [vmem:[%s4710 + $0x8] sm:$0x1]
        %v4920 = vld [vmem:[%s4710 + $0x14] sm:$0x1]
        %v4921 = vld [vmem:[%s4710 + $0x20] sm:$0x1]
        %v4922 = vld [vmem:[%s4710 + $0x2c] sm:$0x1]
        %v4923 = vld [vmem:[%s4710 + $0x38] sm:$0x1]
        %v4924 = vld [vmem:[%s4710 + $0x44] sm:$0x1]
        %v4925 = vld [vmem:[%s4710 + $0x50] sm:$0x1]
        %v4926 = vld [vmem:[%s4710 + $0x5c] sm:$0x1]
        %v4927 = vunpack.c.l.bf16 %v4919
        %v4928 = vunpack.c.l.bf16 %v4920
        %v4929 = vunpack.c.l.bf16 %v4921
        %v4930 = vunpack.c.l.bf16 %v4922
        %v4931 = vunpack.c.l.bf16 %v4923
        %v4932 = vunpack.c.l.bf16 %v4924
        %v4933 = vunpack.c.l.bf16 %v4925
        %v4934 = vunpack.c.l.bf16 %v4926
        %v4943 = vrot.slane %v4727, 1
        %v4944 = vrot.slane %v4728, 1
        %v4945 = vsel %vm2137, %v4943, %v4944
        %v4946 = vrot.slane %v4927, 1
        %v4947 = vsel %vm2137, %v4944, %v4946
        %v4948 = vrot.slane %v4729, 1
        %v4949 = vrot.slane %v4730, 1
        %v4950 = vsel %vm2137, %v4948, %v4949
        %v4951 = vrot.slane %v4928, 1
        %v4952 = vsel %vm2137, %v4949, %v4951
        %v4953 = vrot.slane %v4731, 1
        %v4954 = vrot.slane %v4732, 1
        %v4955 = vsel %vm2137, %v4953, %v4954
        %v4956 = vrot.slane %v4929, 1
        %v4957 = vsel %vm2137, %v4954, %v4956
        %v4958 = vrot.slane %v4733, 1
        %v4959 = vrot.slane %v4734, 1
        %v4960 = vsel %vm2137, %v4958, %v4959
        %v4961 = vrot.slane %v4930, 1
        %v4962 = vsel %vm2137, %v4959, %v4961
        %v4963 = vrot.slane %v4735, 1
        %v4964 = vrot.slane %v4736, 1
        %v4965 = vsel %vm2137, %v4963, %v4964
        %v4966 = vrot.slane %v4931, 1
        %v4967 = vsel %vm2137, %v4964, %v4966
        %v4968 = vrot.slane %v4737, 1
        %v4969 = vrot.slane %v4738, 1
        %v4970 = vsel %vm2137, %v4968, %v4969
        %v4971 = vrot.slane %v4932, 1
        %v4972 = vsel %vm2137, %v4969, %v4971
        %v4973 = vrot.slane %v4739, 1
        %v4974 = vrot.slane %v4740, 1
        %v4975 = vsel %vm2137, %v4973, %v4974
        %v4976 = vrot.slane %v4933, 1
        %v4977 = vsel %vm2137, %v4974, %v4976
        %v4978 = vrot.slane %v4741, 1
        %v4979 = vrot.slane %v4742, 1
        %v4980 = vsel %vm2137, %v4978, %v4979
        %v4981 = vrot.slane %v4934, 1
        %v4982 = vsel %vm2137, %v4979, %v4981
        %v4999 = vmul.f32 %v4903, %v4945
        %v5000 = vmul.f32 %v4904, %v4947
        %v5001 = vmul.f32 %v4905, %v4950
        %v5002 = vmul.f32 %v4906, %v4952
        %v5003 = vmul.f32 %v4907, %v4955
        %v5004 = vmul.f32 %v4908, %v4957
        %v5005 = vmul.f32 %v4909, %v4960
        %v5006 = vmul.f32 %v4910, %v4962
        %v5007 = vmul.f32 %v4911, %v4965
        %v5008 = vmul.f32 %v4912, %v4967
        %v5009 = vmul.f32 %v4913, %v4970
        %v5010 = vmul.f32 %v4914, %v4972
        %v5011 = vmul.f32 %v4915, %v4975
        %v5012 = vmul.f32 %v4916, %v4977
        %v5013 = vmul.f32 %v4917, %v4980
        %v5014 = vmul.f32 %v4918, %v4982
        %v5015 = vadd.f32 %v4887, %v4999
        %v5016 = vadd.f32 %v4888, %v5000
        %v5017 = vadd.f32 %v4889, %v5001
        %v5018 = vadd.f32 %v4890, %v5002
        %v5019 = vadd.f32 %v4891, %v5003
        %v5020 = vadd.f32 %v4892, %v5004
        %v5021 = vadd.f32 %v4893, %v5005
        %v5022 = vadd.f32 %v4894, %v5006
        %v5023 = vadd.f32 %v4895, %v5007
        %v5024 = vadd.f32 %v4896, %v5008
        %v5025 = vadd.f32 %v4897, %v5009
        %v5026 = vadd.f32 %v4898, %v5010
        %v5027 = vadd.f32 %v4899, %v5011
        %v5028 = vadd.f32 %v4900, %v5012
        %v5029 = vadd.f32 %v4901, %v5013
        %v5030 = vadd.f32 %v4902, %v5014
        %v5031 = vld [vmem:[%s4710] sm:$0xe]
        %v5032 = vld [vmem:[%s4710 + $0xc] sm:$0xe]
        %v5033 = vld [vmem:[%s4710 + $0x18] sm:$0xe]
        %v5034 = vld [vmem:[%s4710 + $0x24] sm:$0xe]
        %v5035 = vld [vmem:[%s4710 + $0x30] sm:$0xe]
        %v5036 = vld [vmem:[%s4710 + $0x3c] sm:$0xe]
        %v5037 = vld [vmem:[%s4710 + $0x48] sm:$0xe]
        %v5038 = vld [vmem:[%s4710 + $0x54] sm:$0xe]
        %v5039 = vunpack.c.l.bf16 %v5031
        %v5040 = vunpack.c.l.bf16 %v5032
        %v5041 = vunpack.c.l.bf16 %v5033
        %v5042 = vunpack.c.l.bf16 %v5034
        %v5043 = vunpack.c.l.bf16 %v5035
        %v5044 = vunpack.c.l.bf16 %v5036
        %v5045 = vunpack.c.l.bf16 %v5037
        %v5046 = vunpack.c.l.bf16 %v5038
        %v5055 = vrot.slane %v5039, 2
        %v5056 = vrot.slane %v4728, 2
        %v5057 = vsel %vm2346, %v5055, %v5056
        %v5058 = vrot.slane %v4927, 2
        %v5059 = vsel %vm2346, %v5056, %v5058
        %v5060 = vrot.slane %v5040, 2
        %v5061 = vrot.slane %v4730, 2
        %v5062 = vsel %vm2346, %v5060, %v5061
        %v5063 = vrot.slane %v4928, 2
        %v5064 = vsel %vm2346, %v5061, %v5063
        %v5065 = vrot.slane %v5041, 2
        %v5066 = vrot.slane %v4732, 2
        %v5067 = vsel %vm2346, %v5065, %v5066
        %v5068 = vrot.slane %v4929, 2
        %v5069 = vsel %vm2346, %v5066, %v5068
        %v5070 = vrot.slane %v5042, 2
        %v5071 = vrot.slane %v4734, 2
        %v5072 = vsel %vm2346, %v5070, %v5071
        %v5073 = vrot.slane %v4930, 2
        %v5074 = vsel %vm2346, %v5071, %v5073
        %v5075 = vrot.slane %v5043, 2
        %v5076 = vrot.slane %v4736, 2
        %v5077 = vsel %vm2346, %v5075, %v5076
        %v5078 = vrot.slane %v4931, 2
        %v5079 = vsel %vm2346, %v5076, %v5078
        %v5080 = vrot.slane %v5044, 2
        %v5081 = vrot.slane %v4738, 2
        %v5082 = vsel %vm2346, %v5080, %v5081
        %v5083 = vrot.slane %v4932, 2
        %v5084 = vsel %vm2346, %v5081, %v5083
        %v5085 = vrot.slane %v5045, 2
        %v5086 = vrot.slane %v4740, 2
        %v5087 = vsel %vm2346, %v5085, %v5086
        %v5088 = vrot.slane %v4933, 2
        %v5089 = vsel %vm2346, %v5086, %v5088
        %v5090 = vrot.slane %v5046, 2
        %v5091 = vrot.slane %v4742, 2
        %v5092 = vsel %vm2346, %v5090, %v5091
        %v5093 = vrot.slane %v4934, 2
        %v5094 = vsel %vm2346, %v5091, %v5093
        %5095 = vrot.lane.b32.xlu0 %v5057, 32
        %v5096 = vpop.permute.xlu0 %5095
        %5097 = vrot.lane.b32.xlu0 %v5059, 32
        %v5098 = vpop.permute.xlu0 %5097
        %5099 = vrot.lane.b32.xlu0 %v5062, 32
        %v5100 = vpop.permute.xlu0 %5099
        %5101 = vrot.lane.b32.xlu0 %v5064, 32
        %v5102 = vpop.permute.xlu0 %5101
        %5103 = vrot.lane.b32.xlu0 %v5067, 32
        %v5104 = vpop.permute.xlu0 %5103
        %5105 = vrot.lane.b32.xlu0 %v5069, 32
        %v5106 = vpop.permute.xlu0 %5105
        %5107 = vrot.lane.b32.xlu0 %v5072, 32
        %v5108 = vpop.permute.xlu0 %5107
        %5109 = vrot.lane.b32.xlu0 %v5074, 32
        %v5110 = vpop.permute.xlu0 %5109
        %5111 = vrot.lane.b32.xlu0 %v5077, 32
        %v5112 = vpop.permute.xlu0 %5111
        %5113 = vrot.lane.b32.xlu0 %v5079, 32
        %v5114 = vpop.permute.xlu0 %5113
        %5115 = vrot.lane.b32.xlu0 %v5082, 32
        %v5116 = vpop.permute.xlu0 %5115
        %5117 = vrot.lane.b32.xlu0 %v5084, 32
        %v5118 = vpop.permute.xlu0 %5117
        %5119 = vrot.lane.b32.xlu0 %v5087, 32
        %v5120 = vpop.permute.xlu0 %5119
        %5121 = vrot.lane.b32.xlu0 %v5089, 32
        %v5122 = vpop.permute.xlu0 %5121
        %5123 = vrot.lane.b32.xlu0 %v5092, 32
        %v5124 = vpop.permute.xlu0 %5123
        %5125 = vrot.lane.b32.xlu0 %v5094, 32
        %v5126 = vpop.permute.xlu0 %5125
        %v5143 = vmul.f32 %v4903, %v5096
        %v5144 = vmul.f32 %v4904, %v5098
        %v5145 = vmul.f32 %v4905, %v5100
        %v5146 = vmul.f32 %v4906, %v5102
        %v5147 = vmul.f32 %v4907, %v5104
        %v5148 = vmul.f32 %v4908, %v5106
        %v5149 = vmul.f32 %v4909, %v5108
        %v5150 = vmul.f32 %v4910, %v5110
        %v5151 = vmul.f32 %v4911, %v5112
        %v5152 = vmul.f32 %v4912, %v5114
        %v5153 = vmul.f32 %v4913, %v5116
        %v5154 = vmul.f32 %v4914, %v5118
        %v5155 = vmul.f32 %v4915, %v5120
        %v5156 = vmul.f32 %v4916, %v5122
        %v5157 = vmul.f32 %v4917, %v5124
        %v5158 = vmul.f32 %v4918, %v5126
        %5175 = vrot.lane.b32.xlu0 %v5143, 96
        %v5176 = vpop.permute.xlu0 %5175
        %5177 = vrot.lane.b32.xlu0 %v5144, 96
        %v5178 = vpop.permute.xlu0 %5177
        %5179 = vrot.lane.b32.xlu0 %v5145, 96
        %v5180 = vpop.permute.xlu0 %5179
        %5181 = vrot.lane.b32.xlu0 %v5146, 96
        %v5182 = vpop.permute.xlu0 %5181
        %5183 = vrot.lane.b32.xlu0 %v5147, 96
        %v5184 = vpop.permute.xlu0 %5183
        %5185 = vrot.lane.b32.xlu0 %v5148, 96
        %v5186 = vpop.permute.xlu0 %5185
        %5187 = vrot.lane.b32.xlu0 %v5149, 96
        %v5188 = vpop.permute.xlu0 %5187
        %5189 = vrot.lane.b32.xlu0 %v5150, 96
        %v5190 = vpop.permute.xlu0 %5189
        %5191 = vrot.lane.b32.xlu0 %v5151, 96
        %v5192 = vpop.permute.xlu0 %5191
        %5193 = vrot.lane.b32.xlu0 %v5152, 96
        %v5194 = vpop.permute.xlu0 %5193
        %5195 = vrot.lane.b32.xlu0 %v5153, 96
        %v5196 = vpop.permute.xlu0 %5195
        %5197 = vrot.lane.b32.xlu0 %v5154, 96
        %v5198 = vpop.permute.xlu0 %5197
        %5199 = vrot.lane.b32.xlu0 %v5155, 96
        %v5200 = vpop.permute.xlu0 %5199
        %5201 = vrot.lane.b32.xlu0 %v5156, 96
        %v5202 = vpop.permute.xlu0 %5201
        %5203 = vrot.lane.b32.xlu0 %v5157, 96
        %v5204 = vpop.permute.xlu0 %5203
        %5205 = vrot.lane.b32.xlu0 %v5158, 96
        %v5206 = vpop.permute.xlu0 %5205
        %v5223 = vadd.f32 %v5015, %v5176
        %v5224 = vadd.f32 %v5016, %v5178
        %v5225 = vadd.f32 %v5017, %v5180
        %v5226 = vadd.f32 %v5018, %v5182
        %v5227 = vadd.f32 %v5019, %v5184
        %v5228 = vadd.f32 %v5020, %v5186
        %v5229 = vadd.f32 %v5021, %v5188
        %v5230 = vadd.f32 %v5022, %v5190
        %v5231 = vadd.f32 %v5023, %v5192
        %v5232 = vadd.f32 %v5024, %v5194
        %v5233 = vadd.f32 %v5025, %v5196
        %v5234 = vadd.f32 %v5026, %v5198
        %v5235 = vadd.f32 %v5027, %v5200
        %v5236 = vadd.f32 %v5028, %v5202
        %v5237 = vadd.f32 %v5029, %v5204
        %v5238 = vadd.f32 %v5030, %v5206
        %v5239 = vld [vmem:[%s4710 + $0x8] sm:$0x3]
        %v5240 = vld [vmem:[%s4710 + $0x14] sm:$0x3]
        %v5241 = vld [vmem:[%s4710 + $0x20] sm:$0x3]
        %v5242 = vld [vmem:[%s4710 + $0x2c] sm:$0x3]
        %v5243 = vld [vmem:[%s4710 + $0x38] sm:$0x3]
        %v5244 = vld [vmem:[%s4710 + $0x44] sm:$0x3]
        %v5245 = vld [vmem:[%s4710 + $0x50] sm:$0x3]
        %v5246 = vld [vmem:[%s4710 + $0x5c] sm:$0x3]
        %v5247 = vunpack.c.l.bf16 %v5239
        %v5248 = vunpack.c.l.bf16 %v5240
        %v5249 = vunpack.c.l.bf16 %v5241
        %v5250 = vunpack.c.l.bf16 %v5242
        %v5251 = vunpack.c.l.bf16 %v5243
        %v5252 = vunpack.c.l.bf16 %v5244
        %v5253 = vunpack.c.l.bf16 %v5245
        %v5254 = vunpack.c.l.bf16 %v5246
        %v5263 = vrot.slane %v5039, 3
        %v5264 = vrot.slane %v4728, 3
        %v5265 = vsel %vm2555, %v5263, %v5264
        %v5266 = vrot.slane %v5247, 3
        %v5267 = vsel %vm2555, %v5264, %v5266
        %v5268 = vrot.slane %v5040, 3
        %v5269 = vrot.slane %v4730, 3
        %v5270 = vsel %vm2555, %v5268, %v5269
        %v5271 = vrot.slane %v5248, 3
        %v5272 = vsel %vm2555, %v5269, %v5271
        %v5273 = vrot.slane %v5041, 3
        %v5274 = vrot.slane %v4732, 3
        %v5275 = vsel %vm2555, %v5273, %v5274
        %v5276 = vrot.slane %v5249, 3
        %v5277 = vsel %vm2555, %v5274, %v5276
        %v5278 = vrot.slane %v5042, 3
        %v5279 = vrot.slane %v4734, 3
        %v5280 = vsel %vm2555, %v5278, %v5279
        %v5281 = vrot.slane %v5250, 3
        %v5282 = vsel %vm2555, %v5279, %v5281
        %v5283 = vrot.slane %v5043, 3
        %v5284 = vrot.slane %v4736, 3
        %v5285 = vsel %vm2555, %v5283, %v5284
        %v5286 = vrot.slane %v5251, 3
        %v5287 = vsel %vm2555, %v5284, %v5286
        %v5288 = vrot.slane %v5044, 3
        %v5289 = vrot.slane %v4738, 3
        %v5290 = vsel %vm2555, %v5288, %v5289
        %v5291 = vrot.slane %v5252, 3
        %v5292 = vsel %vm2555, %v5289, %v5291
        %v5293 = vrot.slane %v5045, 3
        %v5294 = vrot.slane %v4740, 3
        %v5295 = vsel %vm2555, %v5293, %v5294
        %v5296 = vrot.slane %v5253, 3
        %v5297 = vsel %vm2555, %v5294, %v5296
        %v5298 = vrot.slane %v5046, 3
        %v5299 = vrot.slane %v4742, 3
        %v5300 = vsel %vm2555, %v5298, %v5299
        %v5301 = vrot.slane %v5254, 3
        %v5302 = vsel %vm2555, %v5299, %v5301
        %5303 = vrot.lane.b32.xlu0 %v5265, 64
        %v5304 = vpop.permute.xlu0 %5303
        %5305 = vrot.lane.b32.xlu0 %v5267, 64
        %v5306 = vpop.permute.xlu0 %5305
        %5307 = vrot.lane.b32.xlu0 %v5270, 64
        %v5308 = vpop.permute.xlu0 %5307
        %5309 = vrot.lane.b32.xlu0 %v5272, 64
        %v5310 = vpop.permute.xlu0 %5309
        %5311 = vrot.lane.b32.xlu0 %v5275, 64
        %v5312 = vpop.permute.xlu0 %5311
        %5313 = vrot.lane.b32.xlu0 %v5277, 64
        %v5314 = vpop.permute.xlu0 %5313
        %5315 = vrot.lane.b32.xlu0 %v5280, 64
        %v5316 = vpop.permute.xlu0 %5315
        %5317 = vrot.lane.b32.xlu0 %v5282, 64
        %v5318 = vpop.permute.xlu0 %5317
        %5319 = vrot.lane.b32.xlu0 %v5285, 64
        %v5320 = vpop.permute.xlu0 %5319
        %5321 = vrot.lane.b32.xlu0 %v5287, 64
        %v5322 = vpop.permute.xlu0 %5321
        %5323 = vrot.lane.b32.xlu0 %v5290, 64
        %v5324 = vpop.permute.xlu0 %5323
        %5325 = vrot.lane.b32.xlu0 %v5292, 64
        %v5326 = vpop.permute.xlu0 %5325
        %5327 = vrot.lane.b32.xlu0 %v5295, 64
        %v5328 = vpop.permute.xlu0 %5327
        %5329 = vrot.lane.b32.xlu0 %v5297, 64
        %v5330 = vpop.permute.xlu0 %5329
        %5331 = vrot.lane.b32.xlu0 %v5300, 64
        %v5332 = vpop.permute.xlu0 %5331
        %5333 = vrot.lane.b32.xlu0 %v5302, 64
        %v5334 = vpop.permute.xlu0 %5333
        %v5351 = vmul.f32 %v4903, %v5304
        %v5352 = vmul.f32 %v4904, %v5306
        %v5353 = vmul.f32 %v4905, %v5308
        %v5354 = vmul.f32 %v4906, %v5310
        %v5355 = vmul.f32 %v4907, %v5312
        %v5356 = vmul.f32 %v4908, %v5314
        %v5357 = vmul.f32 %v4909, %v5316
        %v5358 = vmul.f32 %v4910, %v5318
        %v5359 = vmul.f32 %v4911, %v5320
        %v5360 = vmul.f32 %v4912, %v5322
        %v5361 = vmul.f32 %v4913, %v5324
        %v5362 = vmul.f32 %v4914, %v5326
        %v5363 = vmul.f32 %v4915, %v5328
        %v5364 = vmul.f32 %v4916, %v5330
        %v5365 = vmul.f32 %v4917, %v5332
        %v5366 = vmul.f32 %v4918, %v5334
        %5383 = vrot.lane.b32.xlu0 %v5351, 64
        %v5384 = vpop.permute.xlu0 %5383
        %5385 = vrot.lane.b32.xlu0 %v5352, 64
        %v5386 = vpop.permute.xlu0 %5385
        %5387 = vrot.lane.b32.xlu0 %v5353, 64
        %v5388 = vpop.permute.xlu0 %5387
        %5389 = vrot.lane.b32.xlu0 %v5354, 64
        %v5390 = vpop.permute.xlu0 %5389
        %5391 = vrot.lane.b32.xlu0 %v5355, 64
        %v5392 = vpop.permute.xlu0 %5391
        %5393 = vrot.lane.b32.xlu0 %v5356, 64
        %v5394 = vpop.permute.xlu0 %5393
        %5395 = vrot.lane.b32.xlu0 %v5357, 64
        %v5396 = vpop.permute.xlu0 %5395
        %5397 = vrot.lane.b32.xlu0 %v5358, 64
        %v5398 = vpop.permute.xlu0 %5397
        %5399 = vrot.lane.b32.xlu0 %v5359, 64
        %v5400 = vpop.permute.xlu0 %5399
        %5401 = vrot.lane.b32.xlu0 %v5360, 64
        %v5402 = vpop.permute.xlu0 %5401
        %5403 = vrot.lane.b32.xlu0 %v5361, 64
        %v5404 = vpop.permute.xlu0 %5403
        %5405 = vrot.lane.b32.xlu0 %v5362, 64
        %v5406 = vpop.permute.xlu0 %5405
        %5407 = vrot.lane.b32.xlu0 %v5363, 64
        %v5408 = vpop.permute.xlu0 %5407
        %5409 = vrot.lane.b32.xlu0 %v5364, 64
        %v5410 = vpop.permute.xlu0 %5409
        %5411 = vrot.lane.b32.xlu0 %v5365, 64
        %v5412 = vpop.permute.xlu0 %5411
        %5413 = vrot.lane.b32.xlu0 %v5366, 64
        %v5414 = vpop.permute.xlu0 %5413
        %v5431 = vadd.f32 %v5223, %v5384
        %v5432 = vadd.f32 %v5224, %v5386
        %v5433 = vadd.f32 %v5225, %v5388
        %v5434 = vadd.f32 %v5226, %v5390
        %v5435 = vadd.f32 %v5227, %v5392
        %v5436 = vadd.f32 %v5228, %v5394
        %v5437 = vadd.f32 %v5229, %v5396
        %v5438 = vadd.f32 %v5230, %v5398
        %v5439 = vadd.f32 %v5231, %v5400
        %v5440 = vadd.f32 %v5232, %v5402
        %v5441 = vadd.f32 %v5233, %v5404
        %v5442 = vadd.f32 %v5234, %v5406
        %v5443 = vadd.f32 %v5235, %v5408
        %v5444 = vadd.f32 %v5236, %v5410
        %v5445 = vadd.f32 %v5237, %v5412
        %v5446 = vadd.f32 %v5238, %v5414
        %v5447 = vld [vmem:[%s4710] sm:$0xc]
        %v5448 = vld [vmem:[%s4710 + $0xc] sm:$0xc]
        %v5449 = vld [vmem:[%s4710 + $0x18] sm:$0xc]
        %v5450 = vld [vmem:[%s4710 + $0x24] sm:$0xc]
        %v5451 = vld [vmem:[%s4710 + $0x30] sm:$0xc]
        %v5452 = vld [vmem:[%s4710 + $0x3c] sm:$0xc]
        %v5453 = vld [vmem:[%s4710 + $0x48] sm:$0xc]
        %v5454 = vld [vmem:[%s4710 + $0x54] sm:$0xc]
        %v5455 = vunpack.c.l.bf16 %v5447
        %v5456 = vunpack.c.l.bf16 %v5448
        %v5457 = vunpack.c.l.bf16 %v5449
        %v5458 = vunpack.c.l.bf16 %v5450
        %v5459 = vunpack.c.l.bf16 %v5451
        %v5460 = vunpack.c.l.bf16 %v5452
        %v5461 = vunpack.c.l.bf16 %v5453
        %v5462 = vunpack.c.l.bf16 %v5454
        %v5471 = vrot.slane %v5455, 4
        %v5472 = vrot.slane %v4728, 4
        %v5473 = vsel %vm2764, %v5471, %v5472
        %v5474 = vrot.slane %v5247, 4
        %v5475 = vsel %vm2764, %v5472, %v5474
        %v5476 = vrot.slane %v5456, 4
        %v5477 = vrot.slane %v4730, 4
        %v5478 = vsel %vm2764, %v5476, %v5477
        %v5479 = vrot.slane %v5248, 4
        %v5480 = vsel %vm2764, %v5477, %v5479
        %v5481 = vrot.slane %v5457, 4
        %v5482 = vrot.slane %v4732, 4
        %v5483 = vsel %vm2764, %v5481, %v5482
        %v5484 = vrot.slane %v5249, 4
        %v5485 = vsel %vm2764, %v5482, %v5484
        %v5486 = vrot.slane %v5458, 4
        %v5487 = vrot.slane %v4734, 4
        %v5488 = vsel %vm2764, %v5486, %v5487
        %v5489 = vrot.slane %v5250, 4
        %v5490 = vsel %vm2764, %v5487, %v5489
        %v5491 = vrot.slane %v5459, 4
        %v5492 = vrot.slane %v4736, 4
        %v5493 = vsel %vm2764, %v5491, %v5492
        %v5494 = vrot.slane %v5251, 4
        %v5495 = vsel %vm2764, %v5492, %v5494
        %v5496 = vrot.slane %v5460, 4
        %v5497 = vrot.slane %v4738, 4
        %v5498 = vsel %vm2764, %v5496, %v5497
        %v5499 = vrot.slane %v5252, 4
        %v5500 = vsel %vm2764, %v5497, %v5499
        %v5501 = vrot.slane %v5461, 4
        %v5502 = vrot.slane %v4740, 4
        %v5503 = vsel %vm2764, %v5501, %v5502
        %v5504 = vrot.slane %v5253, 4
        %v5505 = vsel %vm2764, %v5502, %v5504
        %v5506 = vrot.slane %v5462, 4
        %v5507 = vrot.slane %v4742, 4
        %v5508 = vsel %vm2764, %v5506, %v5507
        %v5509 = vrot.slane %v5254, 4
        %v5510 = vsel %vm2764, %v5507, %v5509
        %5511 = vrot.lane.b32.xlu0 %v5473, 96
        %v5512 = vpop.permute.xlu0 %5511
        %5513 = vrot.lane.b32.xlu0 %v5475, 96
        %v5514 = vpop.permute.xlu0 %5513
        %5515 = vrot.lane.b32.xlu0 %v5478, 96
        %v5516 = vpop.permute.xlu0 %5515
        %5517 = vrot.lane.b32.xlu0 %v5480, 96
        %v5518 = vpop.permute.xlu0 %5517
        %5519 = vrot.lane.b32.xlu0 %v5483, 96
        %v5520 = vpop.permute.xlu0 %5519
        %5521 = vrot.lane.b32.xlu0 %v5485, 96
        %v5522 = vpop.permute.xlu0 %5521
        %5523 = vrot.lane.b32.xlu0 %v5488, 96
        %v5524 = vpop.permute.xlu0 %5523
        %5525 = vrot.lane.b32.xlu0 %v5490, 96
        %v5526 = vpop.permute.xlu0 %5525
        %5527 = vrot.lane.b32.xlu0 %v5493, 96
        %v5528 = vpop.permute.xlu0 %5527
        %5529 = vrot.lane.b32.xlu0 %v5495, 96
        %v5530 = vpop.permute.xlu0 %5529
        %5531 = vrot.lane.b32.xlu0 %v5498, 96
        %v5532 = vpop.permute.xlu0 %5531
        %5533 = vrot.lane.b32.xlu0 %v5500, 96
        %v5534 = vpop.permute.xlu0 %5533
        %5535 = vrot.lane.b32.xlu0 %v5503, 96
        %v5536 = vpop.permute.xlu0 %5535
        %5537 = vrot.lane.b32.xlu0 %v5505, 96
        %v5538 = vpop.permute.xlu0 %5537
        %5539 = vrot.lane.b32.xlu0 %v5508, 96
        %v5540 = vpop.permute.xlu0 %5539
        %5541 = vrot.lane.b32.xlu0 %v5510, 96
        %v5542 = vpop.permute.xlu0 %5541
        %v5559 = vmul.f32 %v4903, %v5512
        %v5560 = vmul.f32 %v4904, %v5514
        %v5561 = vmul.f32 %v4905, %v5516
        %v5562 = vmul.f32 %v4906, %v5518
        %v5563 = vmul.f32 %v4907, %v5520
        %v5564 = vmul.f32 %v4908, %v5522
        %v5565 = vmul.f32 %v4909, %v5524
        %v5566 = vmul.f32 %v4910, %v5526
        %v5567 = vmul.f32 %v4911, %v5528
        %v5568 = vmul.f32 %v4912, %v5530
        %v5569 = vmul.f32 %v4913, %v5532
        %v5570 = vmul.f32 %v4914, %v5534
        %v5571 = vmul.f32 %v4915, %v5536
        %v5572 = vmul.f32 %v4916, %v5538
        %v5573 = vmul.f32 %v4917, %v5540
        %v5574 = vmul.f32 %v4918, %v5542
        %5591 = vrot.lane.b32.xlu0 %v5559, 32
        %v5592 = vpop.permute.xlu0 %5591
        %5593 = vrot.lane.b32.xlu0 %v5560, 32
        %v5594 = vpop.permute.xlu0 %5593
        %5595 = vrot.lane.b32.xlu0 %v5561, 32
        %v5596 = vpop.permute.xlu0 %5595
        %5597 = vrot.lane.b32.xlu0 %v5562, 32
        %v5598 = vpop.permute.xlu0 %5597
        %5599 = vrot.lane.b32.xlu0 %v5563, 32
        %v5600 = vpop.permute.xlu0 %5599
        %5601 = vrot.lane.b32.xlu0 %v5564, 32
        %v5602 = vpop.permute.xlu0 %5601
        %5603 = vrot.lane.b32.xlu0 %v5565, 32
        %v5604 = vpop.permute.xlu0 %5603
        %5605 = vrot.lane.b32.xlu0 %v5566, 32
        %v5606 = vpop.permute.xlu0 %5605
        %5607 = vrot.lane.b32.xlu0 %v5567, 32
        %v5608 = vpop.permute.xlu0 %5607
        %5609 = vrot.lane.b32.xlu0 %v5568, 32
        %v5610 = vpop.permute.xlu0 %5609
        %5611 = vrot.lane.b32.xlu0 %v5569, 32
        %v5612 = vpop.permute.xlu0 %5611
        %5613 = vrot.lane.b32.xlu0 %v5570, 32
        %v5614 = vpop.permute.xlu0 %5613
        %5615 = vrot.lane.b32.xlu0 %v5571, 32
        %v5616 = vpop.permute.xlu0 %5615
        %5617 = vrot.lane.b32.xlu0 %v5572, 32
        %v5618 = vpop.permute.xlu0 %5617
        %5619 = vrot.lane.b32.xlu0 %v5573, 32
        %v5620 = vpop.permute.xlu0 %5619
        %5621 = vrot.lane.b32.xlu0 %v5574, 32
        %v5622 = vpop.permute.xlu0 %5621
        %v5639 = vadd.f32 %v5431, %v5592
        %v5640 = vadd.f32 %v5432, %v5594
        %v5641 = vadd.f32 %v5433, %v5596
        %v5642 = vadd.f32 %v5434, %v5598
        %v5643 = vadd.f32 %v5435, %v5600
        %v5644 = vadd.f32 %v5436, %v5602
        %v5645 = vadd.f32 %v5437, %v5604
        %v5646 = vadd.f32 %v5438, %v5606
        %v5647 = vadd.f32 %v5439, %v5608
        %v5648 = vadd.f32 %v5440, %v5610
        %v5649 = vadd.f32 %v5441, %v5612
        %v5650 = vadd.f32 %v5442, %v5614
        %v5651 = vadd.f32 %v5443, %v5616
        %v5652 = vadd.f32 %v5444, %v5618
        %v5653 = vadd.f32 %v5445, %v5620
        %v5654 = vadd.f32 %v5446, %v5622
        %v5655 = vld [vmem:[#allocation2 + $0x28] sm:$0xff]
        %v5656 = vld [vmem:[#allocation2 + $0x68] sm:$0xff]
        %v5657 = vld [vmem:[#allocation2 + $0xa8] sm:$0xff]
        %v5658 = vld [vmem:[#allocation2 + $0xe8] sm:$0xff]
        %v5659 = vld [vmem:[#allocation2 + $0x128] sm:$0xff]
        %v5660 = vld [vmem:[#allocation2 + $0x168] sm:$0xff]
        %v5661 = vld [vmem:[#allocation2 + $0x1a8] sm:$0xff]
        %v5662 = vld [vmem:[#allocation2 + $0x1e8] sm:$0xff]
        %v5663 = vld [vmem:[#allocation2 + $0x228] sm:$0xff]
        %v5664 = vld [vmem:[#allocation2 + $0x268] sm:$0xff]
        %v5665 = vld [vmem:[#allocation2 + $0x2a8] sm:$0xff]
        %v5666 = vld [vmem:[#allocation2 + $0x2e8] sm:$0xff]
        %v5667 = vld [vmem:[#allocation2 + $0x328] sm:$0xff]
        %v5668 = vld [vmem:[#allocation2 + $0x368] sm:$0xff]
        %v5669 = vld [vmem:[#allocation2 + $0x3a8] sm:$0xff]
        %v5670 = vld [vmem:[#allocation2 + $0x3e8] sm:$0xff]
        %s5671 = scalar_lea.vmem %s169, 48
        %v5672 = vld [vmem:[%s5671] sm:$0xf]
        %v5673 = vld [vmem:[%s5671 + $0x4] sm:$0xf]
        %v5674 = vld [vmem:[%s5671 + $0xc] sm:$0xf]
        %v5675 = vld [vmem:[%s5671 + $0x10] sm:$0xf]
        %v5676 = vld [vmem:[%s5671 + $0x18] sm:$0xf]
        %v5677 = vld [vmem:[%s5671 + $0x1c] sm:$0xf]
        %v5678 = vld [vmem:[%s5671 + $0x24] sm:$0xf]
        %v5679 = vld [vmem:[%s5671 + $0x28] sm:$0xf]
        %v5680 = vld [vmem:[%s5671 + $0x30] sm:$0xf]
        %v5681 = vld [vmem:[%s5671 + $0x34] sm:$0xf]
        %v5682 = vld [vmem:[%s5671 + $0x3c] sm:$0xf]
        %v5683 = vld [vmem:[%s5671 + $0x40] sm:$0xf]
        %v5684 = vld [vmem:[%s5671 + $0x48] sm:$0xf]
        %v5685 = vld [vmem:[%s5671 + $0x4c] sm:$0xf]
        %v5686 = vld [vmem:[%s5671 + $0x54] sm:$0xf]
        %v5687 = vld [vmem:[%s5671 + $0x58] sm:$0xf]
        %v5688 = vunpack.c.l.bf16 %v5672
        %v5689 = vunpack.c.l.bf16 %v5673
        %v5690 = vunpack.c.l.bf16 %v5674
        %v5691 = vunpack.c.l.bf16 %v5675
        %v5692 = vunpack.c.l.bf16 %v5676
        %v5693 = vunpack.c.l.bf16 %v5677
        %v5694 = vunpack.c.l.bf16 %v5678
        %v5695 = vunpack.c.l.bf16 %v5679
        %v5696 = vunpack.c.l.bf16 %v5680
        %v5697 = vunpack.c.l.bf16 %v5681
        %v5698 = vunpack.c.l.bf16 %v5682
        %v5699 = vunpack.c.l.bf16 %v5683
        %v5700 = vunpack.c.l.bf16 %v5684
        %v5701 = vunpack.c.l.bf16 %v5685
        %v5702 = vunpack.c.l.bf16 %v5686
        %v5703 = vunpack.c.l.bf16 %v5687
        %v5704 = vmul.f32 %v5655, %v5688
        %v5705 = vmul.f32 %v5656, %v5689
        %v5706 = vmul.f32 %v5657, %v5690
        %v5707 = vmul.f32 %v5658, %v5691
        %v5708 = vmul.f32 %v5659, %v5692
        %v5709 = vmul.f32 %v5660, %v5693
        %v5710 = vmul.f32 %v5661, %v5694
        %v5711 = vmul.f32 %v5662, %v5695
        %v5712 = vmul.f32 %v5663, %v5696
        %v5713 = vmul.f32 %v5664, %v5697
        %v5714 = vmul.f32 %v5665, %v5698
        %v5715 = vmul.f32 %v5666, %v5699
        %v5716 = vmul.f32 %v5667, %v5700
        %v5717 = vmul.f32 %v5668, %v5701
        %v5718 = vmul.f32 %v5669, %v5702
        %v5719 = vmul.f32 %v5670, %v5703
        %v5720 = vadd.f32 %v5639, %v5704
        %v5721 = vadd.f32 %v5640, %v5705
        %v5722 = vadd.f32 %v5641, %v5706
        %v5723 = vadd.f32 %v5642, %v5707
        %v5724 = vadd.f32 %v5643, %v5708
        %v5725 = vadd.f32 %v5644, %v5709
        %v5726 = vadd.f32 %v5645, %v5710
        %v5727 = vadd.f32 %v5646, %v5711
        %v5728 = vadd.f32 %v5647, %v5712
        %v5729 = vadd.f32 %v5648, %v5713
        %v5730 = vadd.f32 %v5649, %v5714
        %v5731 = vadd.f32 %v5650, %v5715
        %v5732 = vadd.f32 %v5651, %v5716
        %v5733 = vadd.f32 %v5652, %v5717
        %v5734 = vadd.f32 %v5653, %v5718
        %v5735 = vadd.f32 %v5654, %v5719
        %v5736 = vld [vmem:[%s5671 + $0x8] sm:$0x1]
        %v5737 = vld [vmem:[%s5671 + $0x14] sm:$0x1]
        %v5738 = vld [vmem:[%s5671 + $0x20] sm:$0x1]
        %v5739 = vld [vmem:[%s5671 + $0x2c] sm:$0x1]
        %v5740 = vld [vmem:[%s5671 + $0x38] sm:$0x1]
        %v5741 = vld [vmem:[%s5671 + $0x44] sm:$0x1]
        %v5742 = vld [vmem:[%s5671 + $0x50] sm:$0x1]
        %v5743 = vld [vmem:[%s5671 + $0x5c] sm:$0x1]
        %v5744 = vunpack.c.l.bf16 %v5736
        %v5745 = vunpack.c.l.bf16 %v5737
        %v5746 = vunpack.c.l.bf16 %v5738
        %v5747 = vunpack.c.l.bf16 %v5739
        %v5748 = vunpack.c.l.bf16 %v5740
        %v5749 = vunpack.c.l.bf16 %v5741
        %v5750 = vunpack.c.l.bf16 %v5742
        %v5751 = vunpack.c.l.bf16 %v5743
        %v5776 = vrot.slane %v5688, 1
        %v5777 = vrot.slane %v5689, 1
        %v5778 = vsel %vm2137, %v5776, %v5777
        %v5779 = vrot.slane %v5744, 1
        %v5780 = vsel %vm2137, %v5777, %v5779
        %v5781 = vrot.slane %v5690, 1
        %v5782 = vrot.slane %v5691, 1
        %v5783 = vsel %vm2137, %v5781, %v5782
        %v5784 = vrot.slane %v5745, 1
        %v5785 = vsel %vm2137, %v5782, %v5784
        %v5786 = vrot.slane %v5692, 1
        %v5787 = vrot.slane %v5693, 1
        %v5788 = vsel %vm2137, %v5786, %v5787
        %v5789 = vrot.slane %v5746, 1
        %v5790 = vsel %vm2137, %v5787, %v5789
        %v5791 = vrot.slane %v5694, 1
        %v5792 = vrot.slane %v5695, 1
        %v5793 = vsel %vm2137, %v5791, %v5792
        %v5794 = vrot.slane %v5747, 1
        %v5795 = vsel %vm2137, %v5792, %v5794
        %v5796 = vrot.slane %v5696, 1
        %v5797 = vrot.slane %v5697, 1
        %v5798 = vsel %vm2137, %v5796, %v5797
        %v5799 = vrot.slane %v5748, 1
        %v5800 = vsel %vm2137, %v5797, %v5799
        %v5801 = vrot.slane %v5698, 1
        %v5802 = vrot.slane %v5699, 1
        %v5803 = vsel %vm2137, %v5801, %v5802
        %v5804 = vrot.slane %v5749, 1
        %v5805 = vsel %vm2137, %v5802, %v5804
        %v5806 = vrot.slane %v5700, 1
        %v5807 = vrot.slane %v5701, 1
        %v5808 = vsel %vm2137, %v5806, %v5807
        %v5809 = vrot.slane %v5750, 1
        %v5810 = vsel %vm2137, %v5807, %v5809
        %v5811 = vrot.slane %v5702, 1
        %v5812 = vrot.slane %v5703, 1
        %v5813 = vsel %vm2137, %v5811, %v5812
        %v5814 = vrot.slane %v5751, 1
        %v5815 = vsel %vm2137, %v5812, %v5814
        %5816 = vrot.lane.b32.xlu0 %v5778, 32
        %v5817 = vpop.permute.xlu0 %5816
        %5818 = vrot.lane.b32.xlu0 %v5780, 32
        %v5819 = vpop.permute.xlu0 %5818
        %5820 = vrot.lane.b32.xlu0 %v5783, 32
        %v5821 = vpop.permute.xlu0 %5820
        %5822 = vrot.lane.b32.xlu0 %v5785, 32
        %v5823 = vpop.permute.xlu0 %5822
        %5824 = vrot.lane.b32.xlu0 %v5788, 32
        %v5825 = vpop.permute.xlu0 %5824
        %5826 = vrot.lane.b32.xlu0 %v5790, 32
        %v5827 = vpop.permute.xlu0 %5826
        %5828 = vrot.lane.b32.xlu0 %v5793, 32
        %v5829 = vpop.permute.xlu0 %5828
        %5830 = vrot.lane.b32.xlu0 %v5795, 32
        %v5831 = vpop.permute.xlu0 %5830
        %5832 = vrot.lane.b32.xlu0 %v5798, 32
        %v5833 = vpop.permute.xlu0 %5832
        %5834 = vrot.lane.b32.xlu0 %v5800, 32
        %v5835 = vpop.permute.xlu0 %5834
        %5836 = vrot.lane.b32.xlu0 %v5803, 32
        %v5837 = vpop.permute.xlu0 %5836
        %5838 = vrot.lane.b32.xlu0 %v5805, 32
        %v5839 = vpop.permute.xlu0 %5838
        %5840 = vrot.lane.b32.xlu0 %v5808, 32
        %v5841 = vpop.permute.xlu0 %5840
        %5842 = vrot.lane.b32.xlu0 %v5810, 32
        %v5843 = vpop.permute.xlu0 %5842
        %5844 = vrot.lane.b32.xlu0 %v5813, 32
        %v5845 = vpop.permute.xlu0 %5844
        %5846 = vrot.lane.b32.xlu0 %v5815, 32
        %v5847 = vpop.permute.xlu0 %5846
        %v5864 = vmul.f32 %v5655, %v5817
        %v5865 = vmul.f32 %v5656, %v5819
        %v5866 = vmul.f32 %v5657, %v5821
        %v5867 = vmul.f32 %v5658, %v5823
        %v5868 = vmul.f32 %v5659, %v5825
        %v5869 = vmul.f32 %v5660, %v5827
        %v5870 = vmul.f32 %v5661, %v5829
        %v5871 = vmul.f32 %v5662, %v5831
        %v5872 = vmul.f32 %v5663, %v5833
        %v5873 = vmul.f32 %v5664, %v5835
        %v5874 = vmul.f32 %v5665, %v5837
        %v5875 = vmul.f32 %v5666, %v5839
        %v5876 = vmul.f32 %v5667, %v5841
        %v5877 = vmul.f32 %v5668, %v5843
        %v5878 = vmul.f32 %v5669, %v5845
        %v5879 = vmul.f32 %v5670, %v5847
        %5896 = vrot.lane.b32.xlu0 %v5864, 96
        %v5897 = vpop.permute.xlu0 %5896
        %5898 = vrot.lane.b32.xlu0 %v5865, 96
        %v5899 = vpop.permute.xlu0 %5898
        %5900 = vrot.lane.b32.xlu0 %v5866, 96
        %v5901 = vpop.permute.xlu0 %5900
        %5902 = vrot.lane.b32.xlu0 %v5867, 96
        %v5903 = vpop.permute.xlu0 %5902
        %5904 = vrot.lane.b32.xlu0 %v5868, 96
        %v5905 = vpop.permute.xlu0 %5904
        %5906 = vrot.lane.b32.xlu0 %v5869, 96
        %v5907 = vpop.permute.xlu0 %5906
        %5908 = vrot.lane.b32.xlu0 %v5870, 96
        %v5909 = vpop.permute.xlu0 %5908
        %5910 = vrot.lane.b32.xlu0 %v5871, 96
        %v5911 = vpop.permute.xlu0 %5910
        %5912 = vrot.lane.b32.xlu0 %v5872, 96
        %v5913 = vpop.permute.xlu0 %5912
        %5914 = vrot.lane.b32.xlu0 %v5873, 96
        %v5915 = vpop.permute.xlu0 %5914
        %5916 = vrot.lane.b32.xlu0 %v5874, 96
        %v5917 = vpop.permute.xlu0 %5916
        %5918 = vrot.lane.b32.xlu0 %v5875, 96
        %v5919 = vpop.permute.xlu0 %5918
        %5920 = vrot.lane.b32.xlu0 %v5876, 96
        %v5921 = vpop.permute.xlu0 %5920
        %5922 = vrot.lane.b32.xlu0 %v5877, 96
        %v5923 = vpop.permute.xlu0 %5922
        %5924 = vrot.lane.b32.xlu0 %v5878, 96
        %v5925 = vpop.permute.xlu0 %5924
        %5926 = vrot.lane.b32.xlu0 %v5879, 96
        %v5927 = vpop.permute.xlu0 %5926
        %v5944 = vadd.f32 %v5720, %v5897
        %v5945 = vadd.f32 %v5721, %v5899
        %v5946 = vadd.f32 %v5722, %v5901
        %v5947 = vadd.f32 %v5723, %v5903
        %v5948 = vadd.f32 %v5724, %v5905
        %v5949 = vadd.f32 %v5725, %v5907
        %v5950 = vadd.f32 %v5726, %v5909
        %v5951 = vadd.f32 %v5727, %v5911
        %v5952 = vadd.f32 %v5728, %v5913
        %v5953 = vadd.f32 %v5729, %v5915
        %v5954 = vadd.f32 %v5730, %v5917
        %v5955 = vadd.f32 %v5731, %v5919
        %v5956 = vadd.f32 %v5732, %v5921
        %v5957 = vadd.f32 %v5733, %v5923
        %v5958 = vadd.f32 %v5734, %v5925
        %v5959 = vadd.f32 %v5735, %v5927
        %v5960 = vld [vmem:[%s5671] sm:$0xe]
        %v5961 = vld [vmem:[%s5671 + $0xc] sm:$0xe]
        %v5962 = vld [vmem:[%s5671 + $0x18] sm:$0xe]
        %v5963 = vld [vmem:[%s5671 + $0x24] sm:$0xe]
        %v5964 = vld [vmem:[%s5671 + $0x30] sm:$0xe]
        %v5965 = vld [vmem:[%s5671 + $0x3c] sm:$0xe]
        %v5966 = vld [vmem:[%s5671 + $0x48] sm:$0xe]
        %v5967 = vld [vmem:[%s5671 + $0x54] sm:$0xe]
        %v5968 = vunpack.c.l.bf16 %v5960
        %v5969 = vunpack.c.l.bf16 %v5961
        %v5970 = vunpack.c.l.bf16 %v5962
        %v5971 = vunpack.c.l.bf16 %v5963
        %v5972 = vunpack.c.l.bf16 %v5964
        %v5973 = vunpack.c.l.bf16 %v5965
        %v5974 = vunpack.c.l.bf16 %v5966
        %v5975 = vunpack.c.l.bf16 %v5967
        %v5984 = vrot.slane %v5968, 2
        %v5985 = vrot.slane %v5689, 2
        %v5986 = vsel %vm2346, %v5984, %v5985
        %v5987 = vrot.slane %v5744, 2
        %v5988 = vsel %vm2346, %v5985, %v5987
        %v5989 = vrot.slane %v5969, 2
        %v5990 = vrot.slane %v5691, 2
        %v5991 = vsel %vm2346, %v5989, %v5990
        %v5992 = vrot.slane %v5745, 2
        %v5993 = vsel %vm2346, %v5990, %v5992
        %v5994 = vrot.slane %v5970, 2
        %v5995 = vrot.slane %v5693, 2
        %v5996 = vsel %vm2346, %v5994, %v5995
        %v5997 = vrot.slane %v5746, 2
        %v5998 = vsel %vm2346, %v5995, %v5997
        %v5999 = vrot.slane %v5971, 2
        %v6000 = vrot.slane %v5695, 2
        %v6001 = vsel %vm2346, %v5999, %v6000
        %v6002 = vrot.slane %v5747, 2
        %v6003 = vsel %vm2346, %v6000, %v6002
        %v6004 = vrot.slane %v5972, 2
        %v6005 = vrot.slane %v5697, 2
        %v6006 = vsel %vm2346, %v6004, %v6005
        %v6007 = vrot.slane %v5748, 2
        %v6008 = vsel %vm2346, %v6005, %v6007
        %v6009 = vrot.slane %v5973, 2
        %v6010 = vrot.slane %v5699, 2
        %v6011 = vsel %vm2346, %v6009, %v6010
        %v6012 = vrot.slane %v5749, 2
        %v6013 = vsel %vm2346, %v6010, %v6012
        %v6014 = vrot.slane %v5974, 2
        %v6015 = vrot.slane %v5701, 2
        %v6016 = vsel %vm2346, %v6014, %v6015
        %v6017 = vrot.slane %v5750, 2
        %v6018 = vsel %vm2346, %v6015, %v6017
        %v6019 = vrot.slane %v5975, 2
        %v6020 = vrot.slane %v5703, 2
        %v6021 = vsel %vm2346, %v6019, %v6020
        %v6022 = vrot.slane %v5751, 2
        %v6023 = vsel %vm2346, %v6020, %v6022
        %6024 = vrot.lane.b32.xlu0 %v5986, 64
        %v6025 = vpop.permute.xlu0 %6024
        %6026 = vrot.lane.b32.xlu0 %v5988, 64
        %v6027 = vpop.permute.xlu0 %6026
        %6028 = vrot.lane.b32.xlu0 %v5991, 64
        %v6029 = vpop.permute.xlu0 %6028
        %6030 = vrot.lane.b32.xlu0 %v5993, 64
        %v6031 = vpop.permute.xlu0 %6030
        %6032 = vrot.lane.b32.xlu0 %v5996, 64
        %v6033 = vpop.permute.xlu0 %6032
        %6034 = vrot.lane.b32.xlu0 %v5998, 64
        %v6035 = vpop.permute.xlu0 %6034
        %6036 = vrot.lane.b32.xlu0 %v6001, 64
        %v6037 = vpop.permute.xlu0 %6036
        %6038 = vrot.lane.b32.xlu0 %v6003, 64
        %v6039 = vpop.permute.xlu0 %6038
        %6040 = vrot.lane.b32.xlu0 %v6006, 64
        %v6041 = vpop.permute.xlu0 %6040
        %6042 = vrot.lane.b32.xlu0 %v6008, 64
        %v6043 = vpop.permute.xlu0 %6042
        %6044 = vrot.lane.b32.xlu0 %v6011, 64
        %v6045 = vpop.permute.xlu0 %6044
        %6046 = vrot.lane.b32.xlu0 %v6013, 64
        %v6047 = vpop.permute.xlu0 %6046
        %6048 = vrot.lane.b32.xlu0 %v6016, 64
        %v6049 = vpop.permute.xlu0 %6048
        %6050 = vrot.lane.b32.xlu0 %v6018, 64
        %v6051 = vpop.permute.xlu0 %6050
        %6052 = vrot.lane.b32.xlu0 %v6021, 64
        %v6053 = vpop.permute.xlu0 %6052
        %6054 = vrot.lane.b32.xlu0 %v6023, 64
        %v6055 = vpop.permute.xlu0 %6054
        %v6072 = vmul.f32 %v5655, %v6025
        %v6073 = vmul.f32 %v5656, %v6027
        %v6074 = vmul.f32 %v5657, %v6029
        %v6075 = vmul.f32 %v5658, %v6031
        %v6076 = vmul.f32 %v5659, %v6033
        %v6077 = vmul.f32 %v5660, %v6035
        %v6078 = vmul.f32 %v5661, %v6037
        %v6079 = vmul.f32 %v5662, %v6039
        %v6080 = vmul.f32 %v5663, %v6041
        %v6081 = vmul.f32 %v5664, %v6043
        %v6082 = vmul.f32 %v5665, %v6045
        %v6083 = vmul.f32 %v5666, %v6047
        %v6084 = vmul.f32 %v5667, %v6049
        %v6085 = vmul.f32 %v5668, %v6051
        %v6086 = vmul.f32 %v5669, %v6053
        %v6087 = vmul.f32 %v5670, %v6055
        %6104 = vrot.lane.b32.xlu0 %v6072, 64
        %v6105 = vpop.permute.xlu0 %6104
        %6106 = vrot.lane.b32.xlu0 %v6073, 64
        %v6107 = vpop.permute.xlu0 %6106
        %6108 = vrot.lane.b32.xlu0 %v6074, 64
        %v6109 = vpop.permute.xlu0 %6108
        %6110 = vrot.lane.b32.xlu0 %v6075, 64
        %v6111 = vpop.permute.xlu0 %6110
        %6112 = vrot.lane.b32.xlu0 %v6076, 64
        %v6113 = vpop.permute.xlu0 %6112
        %6114 = vrot.lane.b32.xlu0 %v6077, 64
        %v6115 = vpop.permute.xlu0 %6114
        %6116 = vrot.lane.b32.xlu0 %v6078, 64
        %v6117 = vpop.permute.xlu0 %6116
        %6118 = vrot.lane.b32.xlu0 %v6079, 64
        %v6119 = vpop.permute.xlu0 %6118
        %6120 = vrot.lane.b32.xlu0 %v6080, 64
        %v6121 = vpop.permute.xlu0 %6120
        %6122 = vrot.lane.b32.xlu0 %v6081, 64
        %v6123 = vpop.permute.xlu0 %6122
        %6124 = vrot.lane.b32.xlu0 %v6082, 64
        %v6125 = vpop.permute.xlu0 %6124
        %6126 = vrot.lane.b32.xlu0 %v6083, 64
        %v6127 = vpop.permute.xlu0 %6126
        %6128 = vrot.lane.b32.xlu0 %v6084, 64
        %v6129 = vpop.permute.xlu0 %6128
        %6130 = vrot.lane.b32.xlu0 %v6085, 64
        %v6131 = vpop.permute.xlu0 %6130
        %6132 = vrot.lane.b32.xlu0 %v6086, 64
        %v6133 = vpop.permute.xlu0 %6132
        %6134 = vrot.lane.b32.xlu0 %v6087, 64
        %v6135 = vpop.permute.xlu0 %6134
        %v6152 = vadd.f32 %v5944, %v6105
        %v6153 = vadd.f32 %v5945, %v6107
        %v6154 = vadd.f32 %v5946, %v6109
        %v6155 = vadd.f32 %v5947, %v6111
        %v6156 = vadd.f32 %v5948, %v6113
        %v6157 = vadd.f32 %v5949, %v6115
        %v6158 = vadd.f32 %v5950, %v6117
        %v6159 = vadd.f32 %v5951, %v6119
        %v6160 = vadd.f32 %v5952, %v6121
        %v6161 = vadd.f32 %v5953, %v6123
        %v6162 = vadd.f32 %v5954, %v6125
        %v6163 = vadd.f32 %v5955, %v6127
        %v6164 = vadd.f32 %v5956, %v6129
        %v6165 = vadd.f32 %v5957, %v6131
        %v6166 = vadd.f32 %v5958, %v6133
        %v6167 = vadd.f32 %v5959, %v6135
        %v6168 = vld [vmem:[%s5671 + $0x8] sm:$0x3]
        %v6169 = vld [vmem:[%s5671 + $0x14] sm:$0x3]
        %v6170 = vld [vmem:[%s5671 + $0x20] sm:$0x3]
        %v6171 = vld [vmem:[%s5671 + $0x2c] sm:$0x3]
        %v6172 = vld [vmem:[%s5671 + $0x38] sm:$0x3]
        %v6173 = vld [vmem:[%s5671 + $0x44] sm:$0x3]
        %v6174 = vld [vmem:[%s5671 + $0x50] sm:$0x3]
        %v6175 = vld [vmem:[%s5671 + $0x5c] sm:$0x3]
        %v6176 = vunpack.c.l.bf16 %v6168
        %v6177 = vunpack.c.l.bf16 %v6169
        %v6178 = vunpack.c.l.bf16 %v6170
        %v6179 = vunpack.c.l.bf16 %v6171
        %v6180 = vunpack.c.l.bf16 %v6172
        %v6181 = vunpack.c.l.bf16 %v6173
        %v6182 = vunpack.c.l.bf16 %v6174
        %v6183 = vunpack.c.l.bf16 %v6175
        %v6192 = vrot.slane %v5968, 3
        %v6193 = vrot.slane %v5689, 3
        %v6194 = vsel %vm2555, %v6192, %v6193
        %v6195 = vrot.slane %v6176, 3
        %v6196 = vsel %vm2555, %v6193, %v6195
        %v6197 = vrot.slane %v5969, 3
        %v6198 = vrot.slane %v5691, 3
        %v6199 = vsel %vm2555, %v6197, %v6198
        %v6200 = vrot.slane %v6177, 3
        %v6201 = vsel %vm2555, %v6198, %v6200
        %v6202 = vrot.slane %v5970, 3
        %v6203 = vrot.slane %v5693, 3
        %v6204 = vsel %vm2555, %v6202, %v6203
        %v6205 = vrot.slane %v6178, 3
        %v6206 = vsel %vm2555, %v6203, %v6205
        %v6207 = vrot.slane %v5971, 3
        %v6208 = vrot.slane %v5695, 3
        %v6209 = vsel %vm2555, %v6207, %v6208
        %v6210 = vrot.slane %v6179, 3
        %v6211 = vsel %vm2555, %v6208, %v6210
        %v6212 = vrot.slane %v5972, 3
        %v6213 = vrot.slane %v5697, 3
        %v6214 = vsel %vm2555, %v6212, %v6213
        %v6215 = vrot.slane %v6180, 3
        %v6216 = vsel %vm2555, %v6213, %v6215
        %v6217 = vrot.slane %v5973, 3
        %v6218 = vrot.slane %v5699, 3
        %v6219 = vsel %vm2555, %v6217, %v6218
        %v6220 = vrot.slane %v6181, 3
        %v6221 = vsel %vm2555, %v6218, %v6220
        %v6222 = vrot.slane %v5974, 3
        %v6223 = vrot.slane %v5701, 3
        %v6224 = vsel %vm2555, %v6222, %v6223
        %v6225 = vrot.slane %v6182, 3
        %v6226 = vsel %vm2555, %v6223, %v6225
        %v6227 = vrot.slane %v5975, 3
        %v6228 = vrot.slane %v5703, 3
        %v6229 = vsel %vm2555, %v6227, %v6228
        %v6230 = vrot.slane %v6183, 3
        %v6231 = vsel %vm2555, %v6228, %v6230
        %6232 = vrot.lane.b32.xlu0 %v6194, 96
        %v6233 = vpop.permute.xlu0 %6232
        %6234 = vrot.lane.b32.xlu0 %v6196, 96
        %v6235 = vpop.permute.xlu0 %6234
        %6236 = vrot.lane.b32.xlu0 %v6199, 96
        %v6237 = vpop.permute.xlu0 %6236
        %6238 = vrot.lane.b32.xlu0 %v6201, 96
        %v6239 = vpop.permute.xlu0 %6238
        %6240 = vrot.lane.b32.xlu0 %v6204, 96
        %v6241 = vpop.permute.xlu0 %6240
        %6242 = vrot.lane.b32.xlu0 %v6206, 96
        %v6243 = vpop.permute.xlu0 %6242
        %6244 = vrot.lane.b32.xlu0 %v6209, 96
        %v6245 = vpop.permute.xlu0 %6244
        %6246 = vrot.lane.b32.xlu0 %v6211, 96
        %v6247 = vpop.permute.xlu0 %6246
        %6248 = vrot.lane.b32.xlu0 %v6214, 96
        %v6249 = vpop.permute.xlu0 %6248
        %6250 = vrot.lane.b32.xlu0 %v6216, 96
        %v6251 = vpop.permute.xlu0 %6250
        %6252 = vrot.lane.b32.xlu0 %v6219, 96
        %v6253 = vpop.permute.xlu0 %6252
        %6254 = vrot.lane.b32.xlu0 %v6221, 96
        %v6255 = vpop.permute.xlu0 %6254
        %6256 = vrot.lane.b32.xlu0 %v6224, 96
        %v6257 = vpop.permute.xlu0 %6256
        %6258 = vrot.lane.b32.xlu0 %v6226, 96
        %v6259 = vpop.permute.xlu0 %6258
        %6260 = vrot.lane.b32.xlu0 %v6229, 96
        %v6261 = vpop.permute.xlu0 %6260
        %6262 = vrot.lane.b32.xlu0 %v6231, 96
        %v6263 = vpop.permute.xlu0 %6262
        %v6280 = vmul.f32 %v5655, %v6233
        %v6281 = vmul.f32 %v5656, %v6235
        %v6282 = vmul.f32 %v5657, %v6237
        %v6283 = vmul.f32 %v5658, %v6239
        %v6284 = vmul.f32 %v5659, %v6241
        %v6285 = vmul.f32 %v5660, %v6243
        %v6286 = vmul.f32 %v5661, %v6245
        %v6287 = vmul.f32 %v5662, %v6247
        %v6288 = vmul.f32 %v5663, %v6249
        %v6289 = vmul.f32 %v5664, %v6251
        %v6290 = vmul.f32 %v5665, %v6253
        %v6291 = vmul.f32 %v5666, %v6255
        %v6292 = vmul.f32 %v5667, %v6257
        %v6293 = vmul.f32 %v5668, %v6259
        %v6294 = vmul.f32 %v5669, %v6261
        %v6295 = vmul.f32 %v5670, %v6263
        %6312 = vrot.lane.b32.xlu0 %v6280, 32
        %v6313 = vpop.permute.xlu0 %6312
        %6314 = vrot.lane.b32.xlu0 %v6281, 32
        %v6315 = vpop.permute.xlu0 %6314
        %6316 = vrot.lane.b32.xlu0 %v6282, 32
        %v6317 = vpop.permute.xlu0 %6316
        %6318 = vrot.lane.b32.xlu0 %v6283, 32
        %v6319 = vpop.permute.xlu0 %6318
        %6320 = vrot.lane.b32.xlu0 %v6284, 32
        %v6321 = vpop.permute.xlu0 %6320
        %6322 = vrot.lane.b32.xlu0 %v6285, 32
        %v6323 = vpop.permute.xlu0 %6322
        %6324 = vrot.lane.b32.xlu0 %v6286, 32
        %v6325 = vpop.permute.xlu0 %6324
        %6326 = vrot.lane.b32.xlu0 %v6287, 32
        %v6327 = vpop.permute.xlu0 %6326
        %6328 = vrot.lane.b32.xlu0 %v6288, 32
        %v6329 = vpop.permute.xlu0 %6328
        %6330 = vrot.lane.b32.xlu0 %v6289, 32
        %v6331 = vpop.permute.xlu0 %6330
        %6332 = vrot.lane.b32.xlu0 %v6290, 32
        %v6333 = vpop.permute.xlu0 %6332
        %6334 = vrot.lane.b32.xlu0 %v6291, 32
        %v6335 = vpop.permute.xlu0 %6334
        %6336 = vrot.lane.b32.xlu0 %v6292, 32
        %v6337 = vpop.permute.xlu0 %6336
        %6338 = vrot.lane.b32.xlu0 %v6293, 32
        %v6339 = vpop.permute.xlu0 %6338
        %6340 = vrot.lane.b32.xlu0 %v6294, 32
        %v6341 = vpop.permute.xlu0 %6340
        %6342 = vrot.lane.b32.xlu0 %v6295, 32
        %v6343 = vpop.permute.xlu0 %6342
        %v6360 = vadd.f32 %v6152, %v6313
        %v6361 = vadd.f32 %v6153, %v6315
        %v6362 = vadd.f32 %v6154, %v6317
        %v6363 = vadd.f32 %v6155, %v6319
        %v6364 = vadd.f32 %v6156, %v6321
        %v6365 = vadd.f32 %v6157, %v6323
        %v6366 = vadd.f32 %v6158, %v6325
        %v6367 = vadd.f32 %v6159, %v6327
        %v6368 = vadd.f32 %v6160, %v6329
        %v6369 = vadd.f32 %v6161, %v6331
        %v6370 = vadd.f32 %v6162, %v6333
        %v6371 = vadd.f32 %v6163, %v6335
        %v6372 = vadd.f32 %v6164, %v6337
        %v6373 = vadd.f32 %v6165, %v6339
        %v6374 = vadd.f32 %v6166, %v6341
        %v6375 = vadd.f32 %v6167, %v6343
        %v6376 = vld [vmem:[#allocation2 + $0x30] sm:$0xff]
        %v6377 = vld [vmem:[#allocation2 + $0x70] sm:$0xff]
        %v6378 = vld [vmem:[#allocation2 + $0xb0] sm:$0xff]
        %v6379 = vld [vmem:[#allocation2 + $0xf0] sm:$0xff]
        %v6380 = vld [vmem:[#allocation2 + $0x130] sm:$0xff]
        %v6381 = vld [vmem:[#allocation2 + $0x170] sm:$0xff]
        %v6382 = vld [vmem:[#allocation2 + $0x1b0] sm:$0xff]
        %v6383 = vld [vmem:[#allocation2 + $0x1f0] sm:$0xff]
        %v6384 = vld [vmem:[#allocation2 + $0x230] sm:$0xff]
        %v6385 = vld [vmem:[#allocation2 + $0x270] sm:$0xff]
        %v6386 = vld [vmem:[#allocation2 + $0x2b0] sm:$0xff]
        %v6387 = vld [vmem:[#allocation2 + $0x2f0] sm:$0xff]
        %v6388 = vld [vmem:[#allocation2 + $0x330] sm:$0xff]
        %v6389 = vld [vmem:[#allocation2 + $0x370] sm:$0xff]
        %v6390 = vld [vmem:[#allocation2 + $0x3b0] sm:$0xff]
        %v6391 = vld [vmem:[#allocation2 + $0x3f0] sm:$0xff]
        %v6392 = vld [vmem:[%s5671] sm:$0xc]
        %v6393 = vld [vmem:[%s5671 + $0xc] sm:$0xc]
        %v6394 = vld [vmem:[%s5671 + $0x18] sm:$0xc]
        %v6395 = vld [vmem:[%s5671 + $0x24] sm:$0xc]
        %v6396 = vld [vmem:[%s5671 + $0x30] sm:$0xc]
        %v6397 = vld [vmem:[%s5671 + $0x3c] sm:$0xc]
        %v6398 = vld [vmem:[%s5671 + $0x48] sm:$0xc]
        %v6399 = vld [vmem:[%s5671 + $0x54] sm:$0xc]
        %v6400 = vunpack.c.l.bf16 %v6392
        %v6401 = vunpack.c.l.bf16 %v6393
        %v6402 = vunpack.c.l.bf16 %v6394
        %v6403 = vunpack.c.l.bf16 %v6395
        %v6404 = vunpack.c.l.bf16 %v6396
        %v6405 = vunpack.c.l.bf16 %v6397
        %v6406 = vunpack.c.l.bf16 %v6398
        %v6407 = vunpack.c.l.bf16 %v6399
        %v6416 = vrot.slane %v6400, 4
        %v6417 = vrot.slane %v5689, 4
        %v6418 = vsel %vm2764, %v6416, %v6417
        %v6419 = vrot.slane %v6176, 4
        %v6420 = vsel %vm2764, %v6417, %v6419
        %v6421 = vrot.slane %v6401, 4
        %v6422 = vrot.slane %v5691, 4
        %v6423 = vsel %vm2764, %v6421, %v6422
        %v6424 = vrot.slane %v6177, 4
        %v6425 = vsel %vm2764, %v6422, %v6424
        %v6426 = vrot.slane %v6402, 4
        %v6427 = vrot.slane %v5693, 4
        %v6428 = vsel %vm2764, %v6426, %v6427
        %v6429 = vrot.slane %v6178, 4
        %v6430 = vsel %vm2764, %v6427, %v6429
        %v6431 = vrot.slane %v6403, 4
        %v6432 = vrot.slane %v5695, 4
        %v6433 = vsel %vm2764, %v6431, %v6432
        %v6434 = vrot.slane %v6179, 4
        %v6435 = vsel %vm2764, %v6432, %v6434
        %v6436 = vrot.slane %v6404, 4
        %v6437 = vrot.slane %v5697, 4
        %v6438 = vsel %vm2764, %v6436, %v6437
        %v6439 = vrot.slane %v6180, 4
        %v6440 = vsel %vm2764, %v6437, %v6439
        %v6441 = vrot.slane %v6405, 4
        %v6442 = vrot.slane %v5699, 4
        %v6443 = vsel %vm2764, %v6441, %v6442
        %v6444 = vrot.slane %v6181, 4
        %v6445 = vsel %vm2764, %v6442, %v6444
        %v6446 = vrot.slane %v6406, 4
        %v6447 = vrot.slane %v5701, 4
        %v6448 = vsel %vm2764, %v6446, %v6447
        %v6449 = vrot.slane %v6182, 4
        %v6450 = vsel %vm2764, %v6447, %v6449
        %v6451 = vrot.slane %v6407, 4
        %v6452 = vrot.slane %v5703, 4
        %v6453 = vsel %vm2764, %v6451, %v6452
        %v6454 = vrot.slane %v6183, 4
        %v6455 = vsel %vm2764, %v6452, %v6454
        %v6472 = vmul.f32 %v6376, %v6418
        %v6473 = vmul.f32 %v6377, %v6420
        %v6474 = vmul.f32 %v6378, %v6423
        %v6475 = vmul.f32 %v6379, %v6425
        %v6476 = vmul.f32 %v6380, %v6428
        %v6477 = vmul.f32 %v6381, %v6430
        %v6478 = vmul.f32 %v6382, %v6433
        %v6479 = vmul.f32 %v6383, %v6435
        %v6480 = vmul.f32 %v6384, %v6438
        %v6481 = vmul.f32 %v6385, %v6440
        %v6482 = vmul.f32 %v6386, %v6443
        %v6483 = vmul.f32 %v6387, %v6445
        %v6484 = vmul.f32 %v6388, %v6448
        %v6485 = vmul.f32 %v6389, %v6450
        %v6486 = vmul.f32 %v6390, %v6453
        %v6487 = vmul.f32 %v6391, %v6455
        %v6488 = vadd.f32 %v6360, %v6472
        %v6489 = vadd.f32 %v6361, %v6473
        %v6490 = vadd.f32 %v6362, %v6474
        %v6491 = vadd.f32 %v6363, %v6475
        %v6492 = vadd.f32 %v6364, %v6476
        %v6493 = vadd.f32 %v6365, %v6477
        %v6494 = vadd.f32 %v6366, %v6478
        %v6495 = vadd.f32 %v6367, %v6479
        %v6496 = vadd.f32 %v6368, %v6480
        %v6497 = vadd.f32 %v6369, %v6481
        %v6498 = vadd.f32 %v6370, %v6482
        %v6499 = vadd.f32 %v6371, %v6483
        %v6500 = vadd.f32 %v6372, %v6484
        %v6501 = vadd.f32 %v6373, %v6485
        %v6502 = vadd.f32 %v6374, %v6486
        %v6503 = vadd.f32 %v6375, %v6487
        %v6504 = vmul.f32 %v6488, %v2017
        %v6505 = vmul.f32 %v6489, %v2018
        %v6506 = vmul.f32 %v6490, %v2019
        %v6507 = vmul.f32 %v6491, %v2020
        %v6508 = vmul.f32 %v6492, %v2021
        %v6509 = vmul.f32 %v6493, %v2022
        %v6510 = vmul.f32 %v6494, %v2023
        %v6511 = vmul.f32 %v6495, %v2024
        %v6512 = vmul.f32 %v6496, %v2025
        %v6513 = vmul.f32 %v6497, %v2026
        %v6514 = vmul.f32 %v6498, %v2027
        %v6515 = vmul.f32 %v6499, %v2028
        %v6516 = vmul.f32 %v6500, %v2029
        %v6517 = vmul.f32 %v6501, %v2030
        %v6518 = vmul.f32 %v6502, %v2031
        %v6519 = vmul.f32 %v6503, %v2032
        %6520 = vst.msk [vmem:[%s160] sm:$0xff] %vm399, %v6504
        %6521 = vst.msk [vmem:[%s160 + $0x8] sm:$0xff] %vm399, %v6505
        %6522 = vst.msk [vmem:[%s160 + $0x10] sm:$0xff] %vm399, %v6506
        %6523 = vst.msk [vmem:[%s160 + $0x18] sm:$0xff] %vm399, %v6507
        %6524 = vst.msk [vmem:[%s160 + $0x20] sm:$0xff] %vm399, %v6508
        %6525 = vst.msk [vmem:[%s160 + $0x28] sm:$0xff] %vm399, %v6509
        %6526 = vst.msk [vmem:[%s160 + $0x30] sm:$0xff] %vm399, %v6510
        %6527 = vst.msk [vmem:[%s160 + $0x38] sm:$0xff] %vm399, %v6511
        %6528 = vst.msk [vmem:[%s160 + $0x40] sm:$0xff] %vm399, %v6512
        %6529 = vst.msk [vmem:[%s160 + $0x48] sm:$0xff] %vm399, %v6513
        %6530 = vst.msk [vmem:[%s160 + $0x50] sm:$0xff] %vm399, %v6514
        %6531 = vst.msk [vmem:[%s160 + $0x58] sm:$0xff] %vm399, %v6515
        %6532 = vst.msk [vmem:[%s160 + $0x60] sm:$0xff] %vm399, %v6516
        %6533 = vst.msk [vmem:[%s160 + $0x68] sm:$0xff] %vm399, %v6517
        %6534 = vst.msk [vmem:[%s160 + $0x70] sm:$0xff] %vm399, %v6518
        %6535 = vst.msk [vmem:[%s160 + $0x78] sm:$0xff] %vm399, %v6519
        %s6536 = sand.u32 %s87, 1
        %s6537 = scalar_lea.sflag [#allocation4], %s6536
        %s6538 = sand.u32 %s87, 1
        %s6539 = smul.addr %s6538, 128
        %s6540 = scalar_lea.vmem [#allocation3], %s6539
        // Predicated region
        $region29: #{tpu_custom_call.1} parent=27 // pred_check
          %p6541 = pneg %p97
        $region30: #{tpu_custom_call.1} parent=27 // pred_check_branch
          %6543 = sbr.rel (%p6541) target = $region32
        $region31: #{tpu_custom_call.1} parent=27 // pred_region
          %6545 = vsyncadd %s6537, 0
          %s6546 = smul.addr %s21, 16
          %s6547 = smul.addr %s20, 32
          %s6548 = sadd.s32 %s6546, %s6547
          %s6549 = smul.addr %s6548, 8
          %s6550 = scalar_lea.hbm %s2, %s6549
          %s6551 = sshll.u32 %s6540, 4
          %s6552 = int_to_ptr.vmem [resolvable:$true] %s6551
          %s6553 = sshll.u32 %s6550, 4
          %s6554 = int_to_ptr.hbm [resolvable:$true] %s6553
          %6559 = dma.vmem_to_hbm [thread:$0]  %s6552, 2048, %s6554, %s6537, 128, 128, 8
        $region32: #{tpu_custom_call.1} parent=27 // pred_fallthru
          _
      $region28: #{tpu_custom_call.1} parent=5 // pred_fallthru
        _
      %p6560 = scmp.le.s32.totalorder 2, %s11
      // Predicated region
      $region33: #{tpu_custom_call.1} parent=5 // pred_check
        %p6561 = pneg %p6560
      $region34: #{tpu_custom_call.1} parent=5 // pred_check_branch
        %6563 = sbr.rel (%p6561) target = $region36
      $region35: #{tpu_custom_call.1} parent=5 // pred_region
        %s6564 = ssub.s32 %s11, 2
        // Predicated region
        $region37: #{tpu_custom_call.1} parent=35 // pred_check
          %p6565 = pneg %p103
        $region38: #{tpu_custom_call.1} parent=35 // pred_check_branch
          %6567 = sbr.rel (%p6565) target = $region40
        $region39: #{tpu_custom_call.1} parent=35 // pred_region
          %s6568 = sand.u32 %s88, 1
          %s6569 = scalar_lea.sflag [#allocation4], %s6568
          %s6570 = sand.u32 %s88, 1
          %s6571 = smul.addr %s6570, 128
          %s6572 = scalar_lea.vmem [#allocation3], %s6571
          %6574 = dma.done %s6569, 2048
        $region40: #{tpu_custom_call.1} parent=35 // pred_fallthru
          _
      $region36: #{tpu_custom_call.1} parent=5 // pred_fallthru
        _
    $region6: #{tpu_custom_call.1} parent=1 // loop_footer
      %s15 = sadd.s32 1, %s11
    $region7: #{tpu_custom_call.1} parent=1 // loop_footer_branch
      %10 = sbr.rel target = $region3
    $region8: #{tpu_custom_call.1} parent=1 // loop_exit
      _
    %6575 = vsyncpa [#allocation4], 1
    %s6576 = scalar_lea.sflag [#allocation4], 1
    %6577 = vsyncpa %s6576, 1

</llo_original>
